<compile_context>
chip_gen: v5e
topology: v5e:2x2
jax: 0.10.0
libtpu: 0.0.40
codegen_flags: <defaults>
</compile_context>

<pallas_src>
import functools

import jax
import jax.numpy as jnp
from jax import lax
from jax.experimental import pallas as pl
from jax.experimental.pallas import tpu as pltpu


# ----------------------------------------------------------------------------
# Shared helpers: one 3x3 conv (stride 1, pad 1, no bias) as a single im2col
# matmul.  `xp` is the zero-padded (H+2, W+2, Cin) f32 tile held in VMEM,
# `w_bf16` is (9*Cin, Cout) in bf16.
# ----------------------------------------------------------------------------
def _conv3x3_im2col(xp, w_bf16, H, W, Cin):
    cols = []
    for dy in range(3):
        for dx in range(3):
            win = lax.slice(xp, (dy, dx, 0), (dy + H, dx + W, Cin))  # (H, W, Cin)
            cols.append(win.reshape(H * W, Cin))
    patch = jnp.concatenate(cols, axis=-1).astype(jnp.bfloat16)      # (H*W, 9*Cin)
    return jnp.dot(patch, w_bf16, preferred_element_type=jnp.float32)


def _write_interior(pad_ref, val, H, W):
    # Write the (H, W, C) image into the center of the (H+2, W+2, C) scratch;
    # the border stays zero.
    pad_ref[pl.ds(1, H), pl.ds(1, W), :] = val


# ----------------------------------------------------------------------------
# Fused conv3x3 -> ReLU -> conv3x3 (both pad=1, no bias).  Grid over batch.
# ----------------------------------------------------------------------------
def _conv_pair_kernel(x_ref, w1_ref, w2_ref, o_ref, pad_ref, *, H, W, C):
    pad_ref[...] = jnp.zeros_like(pad_ref)
    _write_interior(pad_ref, x_ref[0], H, W)
    t = _conv3x3_im2col(pad_ref[...], w1_ref[...], H, W, C)
    t = jnp.maximum(t, 0.0)
    # Intermediate never leaves VMEM; the zeroed border is reused.
    _write_interior(pad_ref, t.reshape(H, W, C), H, W)
    out = _conv3x3_im2col(pad_ref[...], w2_ref[...], H, W, C)
    o_ref[0] = out.reshape(H, W, C)


def conv_pair(x_nhwc, w1_bf, w2_bf):
    B, H, W, C = x_nhwc.shape
    kernel = functools.partial(_conv_pair_kernel, H=H, W=W, C=C)
    return pl.pallas_call(
        kernel,
        out_shape=jax.ShapeDtypeStruct((B, H, W, C), jnp.float32),
        grid=(B,),
        in_specs=[
            pl.BlockSpec((1, H, W, C), lambda b: (b, 0, 0, 0)),
            pl.BlockSpec((9 * C, C), lambda b: (0, 0)),
            pl.BlockSpec((9 * C, C), lambda b: (0, 0)),
        ],
        out_specs=pl.BlockSpec((1, H, W, C), lambda b: (b, 0, 0, 0)),
        scratch_shapes=[pltpu.VMEM((H + 2, W + 2, C), jnp.float32)],
        compiler_params=pltpu.CompilerParams(dimension_semantics=("parallel",)),
    )(x_nhwc, w1_bf, w2_bf)


# ----------------------------------------------------------------------------
# Fusion stage: conv3x3 over concat([pa2, ca2], channels) realized as two
# matmuls against the split weight, + ReLU, + residual with x.  No HBM concat.
# ----------------------------------------------------------------------------
def _fusion_kernel(pa_ref, ca_ref, x_ref, wp_ref, wc_ref, o_ref, pad_ref, *, H, W, C):
    pad_ref[...] = jnp.zeros_like(pad_ref)
    _write_interior(pad_ref, pa_ref[0], H, W)
    acc = _conv3x3_im2col(pad_ref[...], wp_ref[...], H, W, C)
    _write_interior(pad_ref, ca_ref[0], H, W)
    acc = acc + _conv3x3_im2col(pad_ref[...], wc_ref[...], H, W, C)
    acc = jnp.maximum(acc, 0.0)
    o_ref[0] = acc.reshape(H, W, C) + x_ref[0]


def fusion_conv(pa2, ca2, x_nhwc, wp_bf, wc_bf):
    B, H, W, C = x_nhwc.shape
    kernel = functools.partial(_fusion_kernel, H=H, W=W, C=C)
    return pl.pallas_call(
        kernel,
        out_shape=jax.ShapeDtypeStruct((B, H, W, C), jnp.float32),
        grid=(B,),
        in_specs=[
            pl.BlockSpec((1, H, W, C), lambda b: (b, 0, 0, 0)),
            pl.BlockSpec((1, H, W, C), lambda b: (b, 0, 0, 0)),
            pl.BlockSpec((1, H, W, C), lambda b: (b, 0, 0, 0)),
            pl.BlockSpec((9 * C, C), lambda b: (0, 0)),
            pl.BlockSpec((9 * C, C), lambda b: (0, 0)),
        ],
        out_specs=pl.BlockSpec((1, H, W, C), lambda b: (b, 0, 0, 0)),
        scratch_shapes=[pltpu.VMEM((H + 2, W + 2, C), jnp.float32)],
        compiler_params=pltpu.CompilerParams(dimension_semantics=("parallel",)),
    )(pa2, ca2, x_nhwc, wp_bf, wc_bf)


# ----------------------------------------------------------------------------
# PAM_Module: position attention with fused QKV projection and KV-blocked
# online softmax (never materializes the full (N, N) energy matrix).
# Grid: (batch, kv_blocks).
# ----------------------------------------------------------------------------
def _pam_kernel(x_ref, wqkv_ref, bqkv_ref, g_ref, o_ref,
                q_scr, k_scr, v_scr, m_scr, l_scr, acc_scr, *, C, Cq, TK):
    kv = pl.program_id(1)

    @pl.when(kv == 0)
    def _():
        x = x_ref[0]                                              # (N, C) f32
        qkv = jnp.dot(x.astype(jnp.bfloat16), wqkv_ref[...],
                      preferred_element_type=jnp.float32) + bqkv_ref[...]
        q_scr[...] = qkv[:, :Cq]
        k_scr[...] = qkv[:, Cq:2 * Cq]
        v_scr[...] = qkv[:, 2 * Cq:]
        m_scr[...] = jnp.full_like(m_scr, -jnp.inf)
        l_scr[...] = jnp.zeros_like(l_scr)
        acc_scr[...] = jnp.zeros_like(acc_scr)

    q = q_scr[...].astype(jnp.bfloat16)                           # (N, Cq)
    k = k_scr[pl.ds(kv * TK, TK), :].astype(jnp.bfloat16)         # (TK, Cq)
    v = v_scr[pl.ds(kv * TK, TK), :].astype(jnp.bfloat16)         # (TK, C)

    # energy block: s[i, j] = q_i . k_j
    s = lax.dot_general(q, k, (((1,), (1,)), ((), ())),
                        preferred_element_type=jnp.float32)       # (N, TK)
    m_prev = m_scr[...]
    m_new = jnp.maximum(m_prev, jnp.max(s, axis=-1, keepdims=True))
    alpha = jnp.exp(m_prev - m_new)
    p = jnp.exp(s - m_new)
    l_scr[...] = alpha * l_scr[...] + jnp.sum(p, axis=-1, keepdims=True)
    acc_scr[...] = alpha * acc_scr[...] + jnp.dot(
        p.astype(jnp.bfloat16), v, preferred_element_type=jnp.float32)
    m_scr[...] = m_new

    @pl.when(kv == pl.num_programs(1) - 1)
    def _():
        out = acc_scr[...] * pl.reciprocal(l_scr[...], approx=True)
        o_ref[0] = g_ref[0, 0] * out + x_ref[0]


def pam(x_flat, wqkv_bf, bqkv, gamma):
    B, N, C = x_flat.shape
    Dqkv = wqkv_bf.shape[-1]
    Cq = (Dqkv - C) // 2
    TK = N if N <= 512 else 512
    assert N % TK == 0, "H*W must be divisible by the PAM KV tile"
    kernel = functools.partial(_pam_kernel, C=C, Cq=Cq, TK=TK)
    return pl.pallas_call(
        kernel,
        out_shape=jax.ShapeDtypeStruct((B, N, C), jnp.float32),
        grid=(B, N // TK),
        in_specs=[
            pl.BlockSpec((1, N, C), lambda b, k: (b, 0, 0)),
            pl.BlockSpec((C, Dqkv), lambda b, k: (0, 0)),
            pl.BlockSpec((1, Dqkv), lambda b, k: (0, 0)),
            pl.BlockSpec(memory_space=pltpu.MemorySpace.SMEM),     # gamma scalar
        ],
        out_specs=pl.BlockSpec((1, N, C), lambda b, k: (b, 0, 0)),
        scratch_shapes=[
            pltpu.VMEM((N, Cq), jnp.float32),   # q
            pltpu.VMEM((N, Cq), jnp.float32),   # k
            pltpu.VMEM((N, C), jnp.float32),    # v
            pltpu.VMEM((N, 1), jnp.float32),    # running max
            pltpu.VMEM((N, 1), jnp.float32),    # running sum
            pltpu.VMEM((N, C), jnp.float32),    # output accumulator
        ],
        compiler_params=pltpu.CompilerParams(
            dimension_semantics=("parallel", "arbitrary")),
    )(x_flat, wqkv_bf, bqkv, gamma)


# ----------------------------------------------------------------------------
# CAM_Module: channel attention.  (C, C) energy is tiny; kept un-tiled.
# ----------------------------------------------------------------------------
def _cam_kernel(x_ref, g_ref, o_ref):
    x = x_ref[0]                                   # (N, C) f32
    xb = x.astype(jnp.bfloat16)
    # energy[i, j] = sum_n x[n, i] * x[n, j]   -> (C, C)
    energy = lax.dot_general(xb, xb, (((0,), (0,)), ((), ())),
                             preferred_element_type=jnp.float32)
    energy_new = jnp.max(energy, axis=-1, keepdims=True) - energy
    e = energy_new - jnp.max(energy_new, axis=-1, keepdims=True)
    p = jnp.exp(e)
    attn = p / jnp.sum(p, axis=-1, keepdims=True)  # (C, C)
    # out[n, i] = sum_j attn[i, j] * x[n, j]  ->  x @ attn.T
    out = lax.dot_general(xb, attn.astype(jnp.bfloat16), (((1,), (1,)), ((), ())),
                          preferred_element_type=jnp.float32)
    o_ref[0] = g_ref[0, 0] * out + x


def cam(x_flat, gamma):
    B, N, C = x_flat.shape
    return pl.pallas_call(
        _cam_kernel,
        out_shape=jax.ShapeDtypeStruct((B, N, C), jnp.float32),
        grid=(B,),
        in_specs=[
            pl.BlockSpec((1, N, C), lambda b: (b, 0, 0)),
            pl.BlockSpec(memory_space=pltpu.MemorySpace.SMEM),     # gamma scalar
        ],
        out_specs=pl.BlockSpec((1, N, C), lambda b: (b, 0, 0)),
        compiler_params=pltpu.CompilerParams(dimension_semantics=("parallel",)),
    )(x_flat, gamma)


# ----------------------------------------------------------------------------
# DAB forward
# ----------------------------------------------------------------------------
def dab_forward(x_nchw, params):
    x = jnp.transpose(x_nchw, (0, 2, 3, 1)).astype(jnp.float32)  # NCHW -> NHWC
    B, H, W, C = x.shape
    N = H * W

    def pack(w):  # (9, Cin, Cout) -> (9*Cin, Cout) bf16 for the MXU
        return w.reshape(-1, w.shape[-1]).astype(jnp.bfloat16)

    # position branch: convBp (conv -> ReLU -> conv, fused), then PAM
    pa1 = conv_pair(x, pack(params["bp_w1"]), pack(params["bp_w2"]))
    wqkv = jnp.concatenate(
        [params["pam_wq"], params["pam_wk"], params["pam_wv"]], axis=-1
    ).astype(jnp.bfloat16)
    bqkv = jnp.concatenate(
        [params["pam_bq"], params["pam_bk"], params["pam_bv"]], axis=-1)
    pa2 = pam(pa1.reshape(B, N, C), wqkv, bqkv,
              params["pam_gamma"]).reshape(B, H, W, C)

    # channel branch: convBc (fused), then CAM
    ca1 = conv_pair(x, pack(params["bc_w1"]), pack(params["bc_w2"]))
    ca2 = cam(ca1.reshape(B, N, C), params["cam_gamma"]).reshape(B, H, W, C)

    # fusion conv over [pa2 ; ca2] channels + ReLU + residual with x, one kernel
    fw = params["fuse_w"]                          # (9, 2C, C)
    out = fusion_conv(pa2, ca2, x, pack(fw[:, :C, :]), pack(fw[:, C:, :]))

    return jnp.transpose(out, (0, 3, 1, 2))        # NHWC -> NCHW


def init_params(key, n_feat):
    C = n_feat
    Cq = C // 16
    ks = jax.random.split(key, 11)
    s = 0.1

    def w3(k, cin, cout):
        return s * jax.random.normal(k, (9, cin, cout), jnp.float32)

    return {
        # DAB's 3x3 convs are bias=False, matching the PyTorch module.
        "bp_w1": w3(ks[0], C, C),
        "bp_w2": w3(ks[1], C, C),
        "bc_w1": w3(ks[2], C, C),
        "bc_w2": w3(ks[3], C, C),
        # PAM 1x1 convs (bias=True by default in PyTorch).
        "pam_wq": s * jax.random.normal(ks[4], (C, Cq), jnp.float32),
        "pam_bq": s * jax.random.normal(ks[5], (1, Cq), jnp.float32),
        "pam_wk": s * jax.random.normal(ks[6], (C, Cq), jnp.float32),
        "pam_bk": s * jax.random.normal(ks[7], (1, Cq), jnp.float32),
        "pam_wv": s * jax.random.normal(ks[8], (C, C), jnp.float32),
        "pam_bv": s * jax.random.normal(ks[9], (1, C), jnp.float32),
        # PyTorch initializes both learnable gammas to 0.
        "pam_gamma": jnp.zeros((1, 1), jnp.float32),
        "cam_gamma": jnp.zeros((1, 1), jnp.float32),
        "fuse_w": w3(ks[10], 2 * C, C),
    }


if __name__ == "__main__":
    n_feat = 32            # must be divisible by 16 (PAM query/key conv: C // 16)
    B, H, W = 2, 8, 8

    key = jax.random.PRNGKey(0)
    k_x, k_p = jax.random.split(key)
    x = jax.random.normal(k_x, (B, n_feat, H, W), jnp.float32)   # NCHW like PyTorch
    params = init_params(k_p, n_feat)

    out = jax.jit(dab_forward)(x, params)
    jax.block_until_ready(out)
    assert out.shape == (B, n_feat, H, W)
    assert bool(jnp.all(jnp.isfinite(out)))
    print("KERNEL_OK")
</pallas_src>

<mosaic_0001>
module attributes {stable_mosaic.version = 11 : i64} {
  func.func @_cam_kernel(%arg0: i32, %arg1: memref<1x64x32xf32, #tpu.memory_space<vmem>>, %arg2: memref<1x1xf32, #tpu.memory_space<smem>>, %arg3: memref<1x64x32xf32, #tpu.memory_space<vmem>>) attributes {dimension_semantics = [#tpu.dimension_semantics<parallel>], iteration_bounds = array<i64: 2>, scalar_prefetch = 0 : i64, scratch_operands = 0 : i64, tpu.core_type = #tpu.core_type<tc>, window_params = [{transform_indices = @transform_0, window_bounds = array<i64: 1, 64, 32>}, {transform_indices = @transform_1, window_bounds = array<i64: 1, 1>}, {transform_indices = @transform_2, window_bounds = array<i64: 1, 64, 32>}]} {
    %c0 = arith.constant 0 : index
    %c0_0 = arith.constant 0 : index
    %c0_1 = arith.constant 0 : index
    %0 = vector.load %arg1[%c0, %c0_0, %c0_1] : memref<1x64x32xf32, #tpu.memory_space<vmem>>, vector<1x64x32xf32>
    %1 = vector.shape_cast %0 : vector<1x64x32xf32> to vector<64x32xf32>
    %2 = arith.truncf %1 : vector<64x32xf32> to vector<64x32xbf16>
    %cst = arith.constant dense<0.000000e+00> : vector<32x32xf32>
    %3 = tpu.matmul %2, %2, %cst {dimension_numbers = #tpu.dot_dimension_numbers<[0], [0], [1], [1], [0, 1, 1, 1], [], []>} : vector<64x32xbf16>, vector<64x32xbf16>, vector<32x32xf32> -> vector<32x32xf32>
    %cst_2 = arith.constant dense<0xFF800000> : vector<32xf32>
    %4 = vector.multi_reduction <maximumf>, %3, %cst_2 [1] : vector<32x32xf32> to vector<32xf32>
    %5 = vector.shape_cast %4 : vector<32xf32> to vector<32x1xf32>
    %6 = vector.broadcast %5 : vector<32x1xf32> to vector<32x32xf32>
    %7 = arith.subf %6, %3 : vector<32x32xf32>
    %cst_3 = arith.constant dense<0xFF800000> : vector<32xf32>
    %8 = vector.multi_reduction <maximumf>, %7, %cst_3 [1] : vector<32x32xf32> to vector<32xf32>
    %9 = vector.shape_cast %8 : vector<32xf32> to vector<32x1xf32>
    %10 = vector.broadcast %9 : vector<32x1xf32> to vector<32x32xf32>
    %11 = arith.subf %7, %10 : vector<32x32xf32>
    %12 = math.exp %11 : vector<32x32xf32>
    %cst_4 = arith.constant dense<0.000000e+00> : vector<32xf32>
    %13 = vector.multi_reduction <add>, %12, %cst_4 [1] : vector<32x32xf32> to vector<32xf32>
    %14 = vector.shape_cast %13 : vector<32xf32> to vector<32x1xf32>
    %15 = vector.broadcast %14 : vector<32x1xf32> to vector<32x32xf32>
    %16 = arith.divf %12, %15 : vector<32x32xf32>
    %17 = arith.truncf %16 : vector<32x32xf32> to vector<32x32xbf16>
    %cst_5 = arith.constant dense<0.000000e+00> : vector<64x32xf32>
    %18 = tpu.matmul %2, %17, %cst_5 {dimension_numbers = #tpu.dot_dimension_numbers<[1], [1], [0], [0], [0, 0, 1, 0], [], []>} : vector<64x32xbf16>, vector<32x32xbf16>, vector<64x32xf32> -> vector<64x32xf32>
    %c0_6 = arith.constant 0 : index
    %c0_7 = arith.constant 0 : index
    %19 = memref.load %arg2[%c0_6, %c0_7] : memref<1x1xf32, #tpu.memory_space<smem>>
    %20 = vector.broadcast %19 : f32 to vector<64x32xf32>
    %21 = arith.mulf %20, %18 : vector<64x32xf32>
    %22 = arith.addf %21, %1 : vector<64x32xf32>
    %c0_8 = arith.constant 0 : index
    %c0_9 = arith.constant 0 : index
    %c0_10 = arith.constant 0 : index
    %23 = vector.load %arg3[%c0_8, %c0_9, %c0_10] : memref<1x64x32xf32, #tpu.memory_space<vmem>>, vector<1x64x32xf32>
    %24 = vector.shape_cast %23 : vector<1x64x32xf32> to vector<64x32xf32>
    %25 = vector.shape_cast %22 : vector<64x32xf32> to vector<1x64x32xf32>
    tpu.vector_store %arg3[%c0_8, %c0_9, %c0_10], %25 {strides = array<i32>} : memref<1x64x32xf32, #tpu.memory_space<vmem>>, vector<1x64x32xf32>,
    return
  }
  func.func @transform_0(%arg0: i32) -> (i32, i32, i32) {
    %c0_i32 = arith.constant 0 : i32
    %c0_i32_0 = arith.constant 0 : i32
    %c0_i32_1 = arith.constant 0 : i32
    return %arg0, %c0_i32, %c0_i32_0 : i32, i32, i32
  }
  func.func @transform_1(%arg0: i32) -> (i32, i32) {
    %c0_i32 = arith.constant 0 : i32
    %c0_i32_0 = arith.constant 0 : i32
    %c0_i32_1 = arith.constant 0 : i32
    return %c0_i32, %c0_i32_0 : i32, i32
  }
  func.func @transform_2(%arg0: i32) -> (i32, i32, i32) {
    %c0_i32 = arith.constant 0 : i32
    %c0_i32_0 = arith.constant 0 : i32
    %c0_i32_1 = arith.constant 0 : i32
    return %arg0, %c0_i32, %c0_i32_0 : i32, i32, i32
  }
}

module attributes {stable_mosaic.version = 11 : i64} {
  func.func @_conv_pair_kernel(%arg0: i32, %arg1: memref<1x8x8x32xf32, #tpu.memory_space<vmem>>, %arg2: memref<288x32xbf16, #tpu.memory_space<vmem>>, %arg3: memref<288x32xbf16, #tpu.memory_space<vmem>>, %arg4: memref<1x8x8x32xf32, #tpu.memory_space<vmem>>, %arg5: memref<10x10x32xf32, #tpu.memory_space<vmem>>) attributes {dimension_semantics = [#tpu.dimension_semantics<parallel>], iteration_bounds = array<i64: 2>, scalar_prefetch = 0 : i64, scratch_operands = 1 : i64, tpu.core_type = #tpu.core_type<tc>, window_params = [{transform_indices = @transform_0, window_bounds = array<i64: 1, 8, 8, 32>}, {pipeline_mode = #tpu.pipeline_mode<synchronous>, transform_indices = @transform_1, window_bounds = array<i64: 288, 32>}, {pipeline_mode = #tpu.pipeline_mode<synchronous>, transform_indices = @transform_2, window_bounds = array<i64: 288, 32>}, {transform_indices = @transform_3, window_bounds = array<i64: 1, 8, 8, 32>}]} {
    %cst = arith.constant 0.000000e+00 : f32
    %0 = vector.broadcast %cst : f32 to vector<10x10x32xf32>
    %c0 = arith.constant 0 : index
    %c0_0 = arith.constant 0 : index
    %c0_1 = arith.constant 0 : index
    %1 = vector.load %arg5[%c0, %c0_0, %c0_1] : memref<10x10x32xf32, #tpu.memory_space<vmem>>, vector<10x10x32xf32>
    tpu.vector_store %arg5[%c0, %c0_0, %c0_1], %0 {strides = array<i32>} : memref<10x10x32xf32, #tpu.memory_space<vmem>>, vector<10x10x32xf32>,
    %c0_2 = arith.constant 0 : index
    %c0_3 = arith.constant 0 : index
    %c0_4 = arith.constant 0 : index
    %c0_5 = arith.constant 0 : index
    %2 = vector.load %arg1[%c0_2, %c0_3, %c0_4, %c0_5] : memref<1x8x8x32xf32, #tpu.memory_space<vmem>>, vector<1x8x8x32xf32>
    %3 = vector.shape_cast %2 : vector<1x8x8x32xf32> to vector<8x8x32xf32>
    %c1 = arith.constant 1 : index
    %c1_6 = arith.constant 1 : index
    %c0_7 = arith.constant 0 : index
    %4 = vector.load %arg5[%c1, %c1_6, %c0_7] : memref<10x10x32xf32, #tpu.memory_space<vmem>>, vector<8x8x32xf32>
    tpu.vector_store %arg5[%c1, %c1_6, %c0_7], %3 {strides = array<i32>} : memref<10x10x32xf32, #tpu.memory_space<vmem>>, vector<8x8x32xf32>,
    %c0_8 = arith.constant 0 : index
    %c0_9 = arith.constant 0 : index
    %c0_10 = arith.constant 0 : index
    %5 = vector.load %arg5[%c0_8, %c0_9, %c0_10] : memref<10x10x32xf32, #tpu.memory_space<vmem>>, vector<10x10x32xf32>
    %c0_11 = arith.constant 0 : index
    %c0_12 = arith.constant 0 : index
    %6 = vector.load %arg2[%c0_11, %c0_12] : memref<288x32xbf16, #tpu.memory_space<vmem>>, vector<288x32xbf16>
    %7 = vector.extract_strided_slice %5 {offsets = [0, 0, 0], sizes = [8, 8, 32], strides = [1, 1, 1]} : vector<10x10x32xf32> to vector<8x8x32xf32>
    %8 = vector.shape_cast %7 : vector<8x8x32xf32> to vector<64x32xf32>
    %9 = vector.extract_strided_slice %5 {offsets = [0, 1, 0], sizes = [8, 8, 32], strides = [1, 1, 1]} : vector<10x10x32xf32> to vector<8x8x32xf32>
    %10 = vector.shape_cast %9 : vector<8x8x32xf32> to vector<64x32xf32>
    %11 = vector.extract_strided_slice %5 {offsets = [0, 2, 0], sizes = [8, 8, 32], strides = [1, 1, 1]} : vector<10x10x32xf32> to vector<8x8x32xf32>
    %12 = vector.shape_cast %11 : vector<8x8x32xf32> to vector<64x32xf32>
    %13 = vector.extract_strided_slice %5 {offsets = [1, 0, 0], sizes = [8, 8, 32], strides = [1, 1, 1]} : vector<10x10x32xf32> to vector<8x8x32xf32>
    %14 = vector.shape_cast %13 : vector<8x8x32xf32> to vector<64x32xf32>
    %15 = vector.extract_strided_slice %5 {offsets = [1, 1, 0], sizes = [8, 8, 32], strides = [1, 1, 1]} : vector<10x10x32xf32> to vector<8x8x32xf32>
    %16 = vector.shape_cast %15 : vector<8x8x32xf32> to vector<64x32xf32>
    %17 = vector.extract_strided_slice %5 {offsets = [1, 2, 0], sizes = [8, 8, 32], strides = [1, 1, 1]} : vector<10x10x32xf32> to vector<8x8x32xf32>
    %18 = vector.shape_cast %17 : vector<8x8x32xf32> to vector<64x32xf32>
    %19 = vector.extract_strided_slice %5 {offsets = [2, 0, 0], sizes = [8, 8, 32], strides = [1, 1, 1]} : vector<10x10x32xf32> to vector<8x8x32xf32>
    %20 = vector.shape_cast %19 : vector<8x8x32xf32> to vector<64x32xf32>
    %21 = vector.extract_strided_slice %5 {offsets = [2, 1, 0], sizes = [8, 8, 32], strides = [1, 1, 1]} : vector<10x10x32xf32> to vector<8x8x32xf32>
    %22 = vector.shape_cast %21 : vector<8x8x32xf32> to vector<64x32xf32>
    %23 = vector.extract_strided_slice %5 {offsets = [2, 2, 0], sizes = [8, 8, 32], strides = [1, 1, 1]} : vector<10x10x32xf32> to vector<8x8x32xf32>
    %24 = vector.shape_cast %23 : vector<8x8x32xf32> to vector<64x32xf32>
    %25 = tpu.concatenate %8, %10, %12, %14, %16, %18, %20, %22, %24 in 1 : vector<64x32xf32>, vector<64x32xf32>, vector<64x32xf32>, vector<64x32xf32>, vector<64x32xf32>, vector<64x32xf32>, vector<64x32xf32>, vector<64x32xf32>, vector<64x32xf32> -> vector<64x288xf32>
    %26 = arith.truncf %25 : vector<64x288xf32> to vector<64x288xbf16>
    %cst_13 = arith.constant dense<0.000000e+00> : vector<64x32xf32>
    %27 = tpu.matmul %26, %6, %cst_13 {dimension_numbers = #tpu.dot_dimension_numbers<[1], [0], [0], [1], [0, 0, 1, 1], [], []>} : vector<64x288xbf16>, vector<288x32xbf16>, vector<64x32xf32> -> vector<64x32xf32>
    %cst_14 = arith.constant 0.000000e+00 : f32
    %28 = vector.broadcast %cst_14 : f32 to vector<64x32xf32>
    %29 = arith.maximumf %27, %28 : vector<64x32xf32>
    %30 = vector.shape_cast %29 : vector<64x32xf32> to vector<8x8x32xf32>
    %c1_15 = arith.constant 1 : index
    %c1_16 = arith.constant 1 : index
    %c0_17 = arith.constant 0 : index
    %31 = vector.load %arg5[%c1_15, %c1_16, %c0_17] : memref<10x10x32xf32, #tpu.memory_space<vmem>>, vector<8x8x32xf32>
    tpu.vector_store %arg5[%c1_15, %c1_16, %c0_17], %30 {strides = array<i32>} : memref<10x10x32xf32, #tpu.memory_space<vmem>>, vector<8x8x32xf32>,
    %c0_18 = arith.constant 0 : index
    %c0_19 = arith.constant 0 : index
    %c0_20 = arith.constant 0 : index
    %32 = vector.load %arg5[%c0_18, %c0_19, %c0_20] : memref<10x10x32xf32, #tpu.memory_space<vmem>>, vector<10x10x32xf32>
    %c0_21 = arith.constant 0 : index
    %c0_22 = arith.constant 0 : index
    %33 = vector.load %arg3[%c0_21, %c0_22] : memref<288x32xbf16, #tpu.memory_space<vmem>>, vector<288x32xbf16>
    %34 = vector.extract_strided_slice %32 {offsets = [0, 0, 0], sizes = [8, 8, 32], strides = [1, 1, 1]} : vector<10x10x32xf32> to vector<8x8x32xf32>
    %35 = vector.shape_cast %34 : vector<8x8x32xf32> to vector<64x32xf32>
    %36 = vector.extract_strided_slice %32 {offsets = [0, 1, 0], sizes = [8, 8, 32], strides = [1, 1, 1]} : vector<10x10x32xf32> to vector<8x8x32xf32>
    %37 = vector.shape_cast %36 : vector<8x8x32xf32> to vector<64x32xf32>
    %38 = vector.extract_strided_slice %32 {offsets = [0, 2, 0], sizes = [8, 8, 32], strides = [1, 1, 1]} : vector<10x10x32xf32> to vector<8x8x32xf32>
    %39 = vector.shape_cast %38 : vector<8x8x32xf32> to vector<64x32xf32>
    %40 = vector.extract_strided_slice %32 {offsets = [1, 0, 0], sizes = [8, 8, 32], strides = [1, 1, 1]} : vector<10x10x32xf32> to vector<8x8x32xf32>
    %41 = vector.shape_cast %40 : vector<8x8x32xf32> to vector<64x32xf32>
    %42 = vector.extract_strided_slice %32 {offsets = [1, 1, 0], sizes = [8, 8, 32], strides = [1, 1, 1]} : vector<10x10x32xf32> to vector<8x8x32xf32>
    %43 = vector.shape_cast %42 : vector<8x8x32xf32> to vector<64x32xf32>
    %44 = vector.extract_strided_slice %32 {offsets = [1, 2, 0], sizes = [8, 8, 32], strides = [1, 1, 1]} : vector<10x10x32xf32> to vector<8x8x32xf32>
    %45 = vector.shape_cast %44 : vector<8x8x32xf32> to vector<64x32xf32>
    %46 = vector.extract_strided_slice %32 {offsets = [2, 0, 0], sizes = [8, 8, 32], strides = [1, 1, 1]} : vector<10x10x32xf32> to vector<8x8x32xf32>
    %47 = vector.shape_cast %46 : vector<8x8x32xf32> to vector<64x32xf32>
    %48 = vector.extract_strided_slice %32 {offsets = [2, 1, 0], sizes = [8, 8, 32], strides = [1, 1, 1]} : vector<10x10x32xf32> to vector<8x8x32xf32>
    %49 = vector.shape_cast %48 : vector<8x8x32xf32> to vector<64x32xf32>
    %50 = vector.extract_strided_slice %32 {offsets = [2, 2, 0], sizes = [8, 8, 32], strides = [1, 1, 1]} : vector<10x10x32xf32> to vector<8x8x32xf32>
    %51 = vector.shape_cast %50 : vector<8x8x32xf32> to vector<64x32xf32>
    %52 = tpu.concatenate %35, %37, %39, %41, %43, %45, %47, %49, %51 in 1 : vector<64x32xf32>, vector<64x32xf32>, vector<64x32xf32>, vector<64x32xf32>, vector<64x32xf32>, vector<64x32xf32>, vector<64x32xf32>, vector<64x32xf32>, vector<64x32xf32> -> vector<64x288xf32>
    %53 = arith.truncf %52 : vector<64x288xf32> to vector<64x288xbf16>
    %cst_23 = arith.constant dense<0.000000e+00> : vector<64x32xf32>
    %54 = tpu.matmul %53, %33, %cst_23 {dimension_numbers = #tpu.dot_dimension_numbers<[1], [0], [0], [1], [0, 0, 1, 1], [], []>} : vector<64x288xbf16>, vector<288x32xbf16>, vector<64x32xf32> -> vector<64x32xf32>
    %55 = vector.shape_cast %54 : vector<64x32xf32> to vector<8x8x32xf32>
    %c0_24 = arith.constant 0 : index
    %c0_25 = arith.constant 0 : index
    %c0_26 = arith.constant 0 : index
    %c0_27 = arith.constant 0 : index
    %56 = vector.load %arg4[%c0_24, %c0_25, %c0_26, %c0_27] : memref<1x8x8x32xf32, #tpu.memory_space<vmem>>, vector<1x8x8x32xf32>
    %57 = vector.shape_cast %56 : vector<1x8x8x32xf32> to vector<8x8x32xf32>
    %58 = vector.shape_cast %55 : vector<8x8x32xf32> to vector<1x8x8x32xf32>
    tpu.vector_store %arg4[%c0_24, %c0_25, %c0_26, %c0_27], %58 {strides = array<i32>} : memref<1x8x8x32xf32, #tpu.memory_space<vmem>>, vector<1x8x8x32xf32>,
    return
  }
  func.func @transform_0(%arg0: i32) -> (i32, i32, i32, i32) {
    %c0_i32 = arith.constant 0 : i32
    %c0_i32_0 = arith.constant 0 : i32
    %c0_i32_1 = arith.constant 0 : i32
    %c0_i32_2 = arith.constant 0 : i32
    return %arg0, %c0_i32, %c0_i32_0, %c0_i32_1 : i32, i32, i32, i32
  }
  func.func @transform_1(%arg0: i32) -> (i32, i32) {
    %c0_i32 = arith.constant 0 : i32
    %c0_i32_0 = arith.constant 0 : i32
    %c0_i32_1 = arith.constant 0 : i32
    return %c0_i32, %c0_i32_0 : i32, i32
  }
  func.func @transform_2(%arg0: i32) -> (i32, i32) {
    %c0_i32 = arith.constant 0 : i32
    %c0_i32_0 = arith.constant 0 : i32
    %c0_i32_1 = arith.constant 0 : i32
    return %c0_i32, %c0_i32_0 : i32, i32
  }
  func.func @transform_3(%arg0: i32) -> (i32, i32, i32, i32) {
    %c0_i32 = arith.constant 0 : i32
    %c0_i32_0 = arith.constant 0 : i32
    %c0_i32_1 = arith.constant 0 : i32
    %c0_i32_2 = arith.constant 0 : i32
    return %arg0, %c0_i32, %c0_i32_0, %c0_i32_1 : i32, i32, i32, i32
  }
}

module attributes {stable_mosaic.version = 11 : i64} {
  func.func @_pam_kernel(%arg0: i32, %arg1: i32, %arg2: memref<1x64x32xf32, #tpu.memory_space<vmem>>, %arg3: memref<32x36xbf16, #tpu.memory_space<vmem>>, %arg4: memref<1x36xf32, #tpu.memory_space<vmem>>, %arg5: memref<1x1xf32, #tpu.memory_space<smem>>, %arg6: memref<1x64x32xf32, #tpu.memory_space<vmem>>, %arg7: memref<64x2xf32, #tpu.memory_space<vmem>>, %arg8: memref<64x2xf32, #tpu.memory_space<vmem>>, %arg9: memref<64x32xf32, #tpu.memory_space<vmem>>, %arg10: memref<64x1xf32, #tpu.memory_space<vmem>>, %arg11: memref<64x1xf32, #tpu.memory_space<vmem>>, %arg12: memref<64x32xf32, #tpu.memory_space<vmem>>) attributes {dimension_semantics = [#tpu.dimension_semantics<parallel>, #tpu.dimension_semantics<arbitrary>], iteration_bounds = array<i64: 2, 1>, scalar_prefetch = 0 : i64, scratch_operands = 6 : i64, tpu.core_type = #tpu.core_type<tc>, window_params = [{transform_indices = @transform_0, window_bounds = array<i64: 1, 64, 32>}, {pipeline_mode = #tpu.pipeline_mode<synchronous>, transform_indices = @transform_1, window_bounds = array<i64: 32, 36>}, {pipeline_mode = #tpu.pipeline_mode<synchronous>, transform_indices = @transform_2, window_bounds = array<i64: 1, 36>}, {transform_indices = @transform_3, window_bounds = array<i64: 1, 1>}, {transform_indices = @transform_4, window_bounds = array<i64: 1, 64, 32>}]} {
    %c0_i32 = arith.constant 0 : i32
    %0 = arith.cmpi eq, %arg1, %c0_i32 : i32
    %1 = arith.extui %0 : i1 to i32
    %c0_i32_0 = arith.constant 0 : i32
    %2 = arith.cmpi ne, %1, %c0_i32_0 : i32
    scf.if %2 {
      %c0_22 = arith.constant 0 : index
      %c0_23 = arith.constant 0 : index
      %c0_24 = arith.constant 0 : index
      %40 = vector.load %arg2[%c0_22, %c0_23, %c0_24] : memref<1x64x32xf32, #tpu.memory_space<vmem>>, vector<1x64x32xf32>
      %41 = vector.shape_cast %40 : vector<1x64x32xf32> to vector<64x32xf32>
      %42 = arith.truncf %41 : vector<64x32xf32> to vector<64x32xbf16>
      %c0_25 = arith.constant 0 : index
      %c0_26 = arith.constant 0 : index
      %43 = vector.load %arg3[%c0_25, %c0_26] : memref<32x36xbf16, #tpu.memory_space<vmem>>, vector<32x36xbf16>
      %cst_27 = arith.constant dense<0.000000e+00> : vector<64x36xf32>
      %44 = tpu.matmul %42, %43, %cst_27 {dimension_numbers = #tpu.dot_dimension_numbers<[1], [0], [0], [1], [0, 0, 1, 1], [], []>} : vector<64x32xbf16>, vector<32x36xbf16>, vector<64x36xf32> -> vector<64x36xf32>
      %c0_28 = arith.constant 0 : index
      %c0_29 = arith.constant 0 : index
      %45 = vector.load %arg4[%c0_28, %c0_29] : memref<1x36xf32, #tpu.memory_space<vmem>>, vector<1x36xf32>
      %46 = vector.broadcast %45 : vector<1x36xf32> to vector<64x36xf32>
      %47 = arith.addf %44, %46 : vector<64x36xf32>
      %48 = vector.extract_strided_slice %47 {offsets = [0, 0], sizes = [64, 2], strides = [1, 1]} : vector<64x36xf32> to vector<64x2xf32>
      %c0_30 = arith.constant 0 : index
      %c0_31 = arith.constant 0 : index
      %49 = vector.load %arg7[%c0_30, %c0_31] : memref<64x2xf32, #tpu.memory_space<vmem>>, vector<64x2xf32>
      tpu.vector_store %arg7[%c0_30, %c0_31], %48 {strides = array<i32>} : memref<64x2xf32, #tpu.memory_space<vmem>>, vector<64x2xf32>,
      %50 = vector.extract_strided_slice %47 {offsets = [0, 2], sizes = [64, 2], strides = [1, 1]} : vector<64x36xf32> to vector<64x2xf32>
      %c0_32 = arith.constant 0 : index
      %c0_33 = arith.constant 0 : index
      %51 = vector.load %arg8[%c0_32, %c0_33] : memref<64x2xf32, #tpu.memory_space<vmem>>, vector<64x2xf32>
      tpu.vector_store %arg8[%c0_32, %c0_33], %50 {strides = array<i32>} : memref<64x2xf32, #tpu.memory_space<vmem>>, vector<64x2xf32>,
      %52 = vector.extract_strided_slice %47 {offsets = [0, 4], sizes = [64, 32], strides = [1, 1]} : vector<64x36xf32> to vector<64x32xf32>
      %c0_34 = arith.constant 0 : index
      %c0_35 = arith.constant 0 : index
      %53 = vector.load %arg9[%c0_34, %c0_35] : memref<64x32xf32, #tpu.memory_space<vmem>>, vector<64x32xf32>
      tpu.vector_store %arg9[%c0_34, %c0_35], %52 {strides = array<i32>} : memref<64x32xf32, #tpu.memory_space<vmem>>, vector<64x32xf32>,
      %cst_36 = arith.constant 0xFF800000 : f32
      %54 = vector.broadcast %cst_36 : f32 to vector<64x1xf32>
      %c0_37 = arith.constant 0 : index
      %c0_38 = arith.constant 0 : index
      %55 = vector.load %arg10[%c0_37, %c0_38] : memref<64x1xf32, #tpu.memory_space<vmem>>, vector<64x1xf32>
      tpu.vector_store %arg10[%c0_37, %c0_38], %54 {strides = array<i32>} : memref<64x1xf32, #tpu.memory_space<vmem>>, vector<64x1xf32>,
      %cst_39 = arith.constant 0.000000e+00 : f32
      %56 = vector.broadcast %cst_39 : f32 to vector<64x1xf32>
      %c0_40 = arith.constant 0 : index
      %c0_41 = arith.constant 0 : index
      %57 = vector.load %arg11[%c0_40, %c0_41] : memref<64x1xf32, #tpu.memory_space<vmem>>, vector<64x1xf32>
      tpu.vector_store %arg11[%c0_40, %c0_41], %56 {strides = array<i32>} : memref<64x1xf32, #tpu.memory_space<vmem>>, vector<64x1xf32>,
      %cst_42 = arith.constant 0.000000e+00 : f32
      %58 = vector.broadcast %cst_42 : f32 to vector<64x32xf32>
      %c0_43 = arith.constant 0 : index
      %c0_44 = arith.constant 0 : index
      %59 = vector.load %arg12[%c0_43, %c0_44] : memref<64x32xf32, #tpu.memory_space<vmem>>, vector<64x32xf32>
      tpu.vector_store %arg12[%c0_43, %c0_44], %58 {strides = array<i32>} : memref<64x32xf32, #tpu.memory_space<vmem>>, vector<64x32xf32>,
    } else {
    }
    %c0 = arith.constant 0 : index
    %c0_1 = arith.constant 0 : index
    %3 = vector.load %arg7[%c0, %c0_1] : memref<64x2xf32, #tpu.memory_space<vmem>>, vector<64x2xf32>
    %4 = arith.truncf %3 : vector<64x2xf32> to vector<64x2xbf16>
    %c64_i32 = arith.constant 64 : i32
    %5 = arith.muli %arg1, %c64_i32 : i32
    %6 = arith.index_cast %5 : i32 to index
    %c0_2 = arith.constant 0 : index
    %7 = vector.load %arg8[%6, %c0_2] : memref<64x2xf32, #tpu.memory_space<vmem>>, vector<64x2xf32>
    %8 = arith.truncf %7 : vector<64x2xf32> to vector<64x2xbf16>
    %c64_i32_3 = arith.constant 64 : i32
    %9 = arith.muli %arg1, %c64_i32_3 : i32
    %10 = arith.index_cast %9 : i32 to index
    %c0_4 = arith.constant 0 : index
    %11 = vector.load %arg9[%10, %c0_4] : memref<64x32xf32, #tpu.memory_space<vmem>>, vector<64x32xf32>
    %12 = arith.truncf %11 : vector<64x32xf32> to vector<64x32xbf16>
    %cst = arith.constant dense<0.000000e+00> : vector<64x64xf32>
    %13 = tpu.matmul %4, %8, %cst {dimension_numbers = #tpu.dot_dimension_numbers<[1], [1], [0], [0], [0, 0, 1, 0], [], []>} : vector<64x2xbf16>, vector<64x2xbf16>, vector<64x64xf32> -> vector<64x64xf32>
    %c0_5 = arith.constant 0 : index
    %c0_6 = arith.constant 0 : index
    %14 = vector.load %arg10[%c0_5, %c0_6] : memref<64x1xf32, #tpu.memory_space<vmem>>, vector<64x1xf32>
    %cst_7 = arith.constant dense<0xFF800000> : vector<64xf32>
    %15 = vector.multi_reduction <maximumf>, %13, %cst_7 [1] : vector<64x64xf32> to vector<64xf32>
    %16 = vector.shape_cast %15 : vector<64xf32> to vector<64x1xf32>
    %17 = arith.maximumf %14, %16 : vector<64x1xf32>
    %18 = arith.subf %14, %17 : vector<64x1xf32>
    %19 = math.exp %18 : vector<64x1xf32>
    %20 = vector.broadcast %17 : vector<64x1xf32> to vector<64x64xf32>
    %21 = arith.subf %13, %20 : vector<64x64xf32>
    %22 = math.exp %21 : vector<64x64xf32>
    %c0_8 = arith.constant 0 : index
    %c0_9 = arith.constant 0 : index
    %23 = vector.load %arg11[%c0_8, %c0_9] : memref<64x1xf32, #tpu.memory_space<vmem>>, vector<64x1xf32>
    %24 = arith.mulf %19, %23 : vector<64x1xf32>
    %cst_10 = arith.constant dense<0.000000e+00> : vector<64xf32>
    %25 = vector.multi_reduction <add>, %22, %cst_10 [1] : vector<64x64xf32> to vector<64xf32>
    %26 = vector.shape_cast %25 : vector<64xf32> to vector<64x1xf32>
    %27 = arith.addf %24, %26 : vector<64x1xf32>
    %c0_11 = arith.constant 0 : index
    %c0_12 = arith.constant 0 : index
    %28 = vector.load %arg11[%c0_11, %c0_12] : memref<64x1xf32, #tpu.memory_space<vmem>>, vector<64x1xf32>
    tpu.vector_store %arg11[%c0_11, %c0_12], %27 {strides = array<i32>} : memref<64x1xf32, #tpu.memory_space<vmem>>, vector<64x1xf32>,
    %c0_13 = arith.constant 0 : index
    %c0_14 = arith.constant 0 : index
    %29 = vector.load %arg12[%c0_13, %c0_14] : memref<64x32xf32, #tpu.memory_space<vmem>>, vector<64x32xf32>
    %30 = vector.broadcast %19 : vector<64x1xf32> to vector<64x32xf32>
    %31 = arith.mulf %30, %29 : vector<64x32xf32>
    %32 = arith.truncf %22 : vector<64x64xf32> to vector<64x64xbf16>
    %cst_15 = arith.constant dense<0.000000e+00> : vector<64x32xf32>
    %33 = tpu.matmul %32, %12, %cst_15 {dimension_numbers = #tpu.dot_dimension_numbers<[1], [0], [0], [1], [0, 0, 1, 1], [], []>} : vector<64x64xbf16>, vector<64x32xbf16>, vector<64x32xf32> -> vector<64x32xf32>
    %34 = arith.addf %31, %33 : vector<64x32xf32>
    %c0_16 = arith.constant 0 : index
    %c0_17 = arith.constant 0 : index
    %35 = vector.load %arg12[%c0_16, %c0_17] : memref<64x32xf32, #tpu.memory_space<vmem>>, vector<64x32xf32>
    tpu.vector_store %arg12[%c0_16, %c0_17], %34 {strides = array<i32>} : memref<64x32xf32, #tpu.memory_space<vmem>>, vector<64x32xf32>,
    %c0_18 = arith.constant 0 : index
    %c0_19 = arith.constant 0 : index
    %36 = vector.load %arg10[%c0_18, %c0_19] : memref<64x1xf32, #tpu.memory_space<vmem>>, vector<64x1xf32>
    tpu.vector_store %arg10[%c0_18, %c0_19], %17 {strides = array<i32>} : memref<64x1xf32, #tpu.memory_space<vmem>>, vector<64x1xf32>,
    %c0_i32_20 = arith.constant 0 : i32
    %37 = arith.cmpi eq, %arg1, %c0_i32_20 : i32
    %38 = arith.extui %37 : i1 to i32
    %c0_i32_21 = arith.constant 0 : i32
    %39 = arith.cmpi ne, %38, %c0_i32_21 : i32
    scf.if %39 {
      %c0_22 = arith.constant 0 : index
      %c0_23 = arith.constant 0 : index
      %40 = vector.load %arg12[%c0_22, %c0_23] : memref<64x32xf32, #tpu.memory_space<vmem>>, vector<64x32xf32>
      %c0_24 = arith.constant 0 : index
      %c0_25 = arith.constant 0 : index
      %41 = vector.load %arg11[%c0_24, %c0_25] : memref<64x1xf32, #tpu.memory_space<vmem>>, vector<64x1xf32>
      %42 = tpu.reciprocal %41 {approx = true} : vector<64x1xf32> -> vector<64x1xf32>
      %43 = vector.broadcast %42 : vector<64x1xf32> to vector<64x32xf32>
      %44 = arith.mulf %40, %43 : vector<64x32xf32>
      %c0_26 = arith.constant 0 : index
      %c0_27 = arith.constant 0 : index
      %45 = memref.load %arg5[%c0_26, %c0_27] : memref<1x1xf32, #tpu.memory_space<smem>>
      %46 = vector.broadcast %45 : f32 to vector<64x32xf32>
      %47 = arith.mulf %46, %44 : vector<64x32xf32>
      %c0_28 = arith.constant 0 : index
      %c0_29 = arith.constant 0 : index
      %c0_30 = arith.constant 0 : index
      %48 = vector.load %arg2[%c0_28, %c0_29, %c0_30] : memref<1x64x32xf32, #tpu.memory_space<vmem>>, vector<1x64x32xf32>
      %49 = vector.shape_cast %48 : vector<1x64x32xf32> to vector<64x32xf32>
      %50 = arith.addf %47, %49 : vector<64x32xf32>
      %c0_31 = arith.constant 0 : index
      %c0_32 = arith.constant 0 : index
      %c0_33 = arith.constant 0 : index
      %51 = vector.load %arg6[%c0_31, %c0_32, %c0_33] : memref<1x64x32xf32, #tpu.memory_space<vmem>>, vector<1x64x32xf32>
      %52 = vector.shape_cast %51 : vector<1x64x32xf32> to vector<64x32xf32>
      %53 = vector.shape_cast %50 : vector<64x32xf32> to vector<1x64x32xf32>
      tpu.vector_store %arg6[%c0_31, %c0_32, %c0_33], %53 {strides = array<i32>} : memref<1x64x32xf32, #tpu.memory_space<vmem>>, vector<1x64x32xf32>,
    } else {
    }
    return
  }
  func.func @transform_0(%arg0: i32, %arg1: i32) -> (i32, i32, i32) {
    %c0_i32 = arith.constant 0 : i32
    %c0_i32_0 = arith.constant 0 : i32
    %c0_i32_1 = arith.constant 0 : i32
    return %arg0, %c0_i32, %c0_i32_0 : i32, i32, i32
  }
  func.func @transform_1(%arg0: i32, %arg1: i32) -> (i32, i32) {
    %c0_i32 = arith.constant 0 : i32
    %c0_i32_0 = arith.constant 0 : i32
    %c0_i32_1 = arith.constant 0 : i32
    return %c0_i32, %c0_i32_0 : i32, i32
  }
  func.func @transform_2(%arg0: i32, %arg1: i32) -> (i32, i32) {
    %c0_i32 = arith.constant 0 : i32
    %c0_i32_0 = arith.constant 0 : i32
    %c0_i32_1 = arith.constant 0 : i32
    return %c0_i32, %c0_i32_0 : i32, i32
  }
  func.func @transform_3(%arg0: i32, %arg1: i32) -> (i32, i32) {
    %c0_i32 = arith.constant 0 : i32
    %c0_i32_0 = arith.constant 0 : i32
    %c0_i32_1 = arith.constant 0 : i32
    return %c0_i32, %c0_i32_0 : i32, i32
  }
  func.func @transform_4(%arg0: i32, %arg1: i32) -> (i32, i32, i32) {
    %c0_i32 = arith.constant 0 : i32
    %c0_i32_0 = arith.constant 0 : i32
    %c0_i32_1 = arith.constant 0 : i32
    return %arg0, %c0_i32, %c0_i32_0 : i32, i32, i32
  }
}

module attributes {stable_mosaic.version = 11 : i64} {
  func.func @_fusion_kernel(%arg0: i32, %arg1: memref<1x8x8x32xf32, #tpu.memory_space<vmem>>, %arg2: memref<1x8x8x32xf32, #tpu.memory_space<vmem>>, %arg3: memref<1x8x8x32xf32, #tpu.memory_space<vmem>>, %arg4: memref<288x32xbf16, #tpu.memory_space<vmem>>, %arg5: memref<288x32xbf16, #tpu.memory_space<vmem>>, %arg6: memref<1x8x8x32xf32, #tpu.memory_space<vmem>>, %arg7: memref<10x10x32xf32, #tpu.memory_space<vmem>>) attributes {dimension_semantics = [#tpu.dimension_semantics<parallel>], iteration_bounds = array<i64: 2>, scalar_prefetch = 0 : i64, scratch_operands = 1 : i64, tpu.core_type = #tpu.core_type<tc>, window_params = [{transform_indices = @transform_0, window_bounds = array<i64: 1, 8, 8, 32>}, {transform_indices = @transform_1, window_bounds = array<i64: 1, 8, 8, 32>}, {transform_indices = @transform_2, window_bounds = array<i64: 1, 8, 8, 32>}, {pipeline_mode = #tpu.pipeline_mode<synchronous>, transform_indices = @transform_3, window_bounds = array<i64: 288, 32>}, {pipeline_mode = #tpu.pipeline_mode<synchronous>, transform_indices = @transform_4, window_bounds = array<i64: 288, 32>}, {transform_indices = @transform_5, window_bounds = array<i64: 1, 8, 8, 32>}]} {
    %cst = arith.constant 0.000000e+00 : f32
    %0 = vector.broadcast %cst : f32 to vector<10x10x32xf32>
    %c0 = arith.constant 0 : index
    %c0_0 = arith.constant 0 : index
    %c0_1 = arith.constant 0 : index
    %1 = vector.load %arg7[%c0, %c0_0, %c0_1] : memref<10x10x32xf32, #tpu.memory_space<vmem>>, vector<10x10x32xf32>
    tpu.vector_store %arg7[%c0, %c0_0, %c0_1], %0 {strides = array<i32>} : memref<10x10x32xf32, #tpu.memory_space<vmem>>, vector<10x10x32xf32>,
    %c0_2 = arith.constant 0 : index
    %c0_3 = arith.constant 0 : index
    %c0_4 = arith.constant 0 : index
    %c0_5 = arith.constant 0 : index
    %2 = vector.load %arg1[%c0_2, %c0_3, %c0_4, %c0_5] : memref<1x8x8x32xf32, #tpu.memory_space<vmem>>, vector<1x8x8x32xf32>
    %3 = vector.shape_cast %2 : vector<1x8x8x32xf32> to vector<8x8x32xf32>
    %c1 = arith.constant 1 : index
    %c1_6 = arith.constant 1 : index
    %c0_7 = arith.constant 0 : index
    %4 = vector.load %arg7[%c1, %c1_6, %c0_7] : memref<10x10x32xf32, #tpu.memory_space<vmem>>, vector<8x8x32xf32>
    tpu.vector_store %arg7[%c1, %c1_6, %c0_7], %3 {strides = array<i32>} : memref<10x10x32xf32, #tpu.memory_space<vmem>>, vector<8x8x32xf32>,
    %c0_8 = arith.constant 0 : index
    %c0_9 = arith.constant 0 : index
    %c0_10 = arith.constant 0 : index
    %5 = vector.load %arg7[%c0_8, %c0_9, %c0_10] : memref<10x10x32xf32, #tpu.memory_space<vmem>>, vector<10x10x32xf32>
    %c0_11 = arith.constant 0 : index
    %c0_12 = arith.constant 0 : index
    %6 = vector.load %arg4[%c0_11, %c0_12] : memref<288x32xbf16, #tpu.memory_space<vmem>>, vector<288x32xbf16>
    %7 = vector.extract_strided_slice %5 {offsets = [0, 0, 0], sizes = [8, 8, 32], strides = [1, 1, 1]} : vector<10x10x32xf32> to vector<8x8x32xf32>
    %8 = vector.shape_cast %7 : vector<8x8x32xf32> to vector<64x32xf32>
    %9 = vector.extract_strided_slice %5 {offsets = [0, 1, 0], sizes = [8, 8, 32], strides = [1, 1, 1]} : vector<10x10x32xf32> to vector<8x8x32xf32>
    %10 = vector.shape_cast %9 : vector<8x8x32xf32> to vector<64x32xf32>
    %11 = vector.extract_strided_slice %5 {offsets = [0, 2, 0], sizes = [8, 8, 32], strides = [1, 1, 1]} : vector<10x10x32xf32> to vector<8x8x32xf32>
    %12 = vector.shape_cast %11 : vector<8x8x32xf32> to vector<64x32xf32>
    %13 = vector.extract_strided_slice %5 {offsets = [1, 0, 0], sizes = [8, 8, 32], strides = [1, 1, 1]} : vector<10x10x32xf32> to vector<8x8x32xf32>
    %14 = vector.shape_cast %13 : vector<8x8x32xf32> to vector<64x32xf32>
    %15 = vector.extract_strided_slice %5 {offsets = [1, 1, 0], sizes = [8, 8, 32], strides = [1, 1, 1]} : vector<10x10x32xf32> to vector<8x8x32xf32>
    %16 = vector.shape_cast %15 : vector<8x8x32xf32> to vector<64x32xf32>
    %17 = vector.extract_strided_slice %5 {offsets = [1, 2, 0], sizes = [8, 8, 32], strides = [1, 1, 1]} : vector<10x10x32xf32> to vector<8x8x32xf32>
    %18 = vector.shape_cast %17 : vector<8x8x32xf32> to vector<64x32xf32>
    %19 = vector.extract_strided_slice %5 {offsets = [2, 0, 0], sizes = [8, 8, 32], strides = [1, 1, 1]} : vector<10x10x32xf32> to vector<8x8x32xf32>
    %20 = vector.shape_cast %19 : vector<8x8x32xf32> to vector<64x32xf32>
    %21 = vector.extract_strided_slice %5 {offsets = [2, 1, 0], sizes = [8, 8, 32], strides = [1, 1, 1]} : vector<10x10x32xf32> to vector<8x8x32xf32>
    %22 = vector.shape_cast %21 : vector<8x8x32xf32> to vector<64x32xf32>
    %23 = vector.extract_strided_slice %5 {offsets = [2, 2, 0], sizes = [8, 8, 32], strides = [1, 1, 1]} : vector<10x10x32xf32> to vector<8x8x32xf32>
    %24 = vector.shape_cast %23 : vector<8x8x32xf32> to vector<64x32xf32>
    %25 = tpu.concatenate %8, %10, %12, %14, %16, %18, %20, %22, %24 in 1 : vector<64x32xf32>, vector<64x32xf32>, vector<64x32xf32>, vector<64x32xf32>, vector<64x32xf32>, vector<64x32xf32>, vector<64x32xf32>, vector<64x32xf32>, vector<64x32xf32> -> vector<64x288xf32>
    %26 = arith.truncf %25 : vector<64x288xf32> to vector<64x288xbf16>
    %cst_13 = arith.constant dense<0.000000e+00> : vector<64x32xf32>
    %27 = tpu.matmul %26, %6, %cst_13 {dimension_numbers = #tpu.dot_dimension_numbers<[1], [0], [0], [1], [0, 0, 1, 1], [], []>} : vector<64x288xbf16>, vector<288x32xbf16>, vector<64x32xf32> -> vector<64x32xf32>
    %c0_14 = arith.constant 0 : index
    %c0_15 = arith.constant 0 : index
    %c0_16 = arith.constant 0 : index
    %c0_17 = arith.constant 0 : index
    %28 = vector.load %arg2[%c0_14, %c0_15, %c0_16, %c0_17] : memref<1x8x8x32xf32, #tpu.memory_space<vmem>>, vector<1x8x8x32xf32>
    %29 = vector.shape_cast %28 : vector<1x8x8x32xf32> to vector<8x8x32xf32>
    %c1_18 = arith.constant 1 : index
    %c1_19 = arith.constant 1 : index
    %c0_20 = arith.constant 0 : index
    %30 = vector.load %arg7[%c1_18, %c1_19, %c0_20] : memref<10x10x32xf32, #tpu.memory_space<vmem>>, vector<8x8x32xf32>
    tpu.vector_store %arg7[%c1_18, %c1_19, %c0_20], %29 {strides = array<i32>} : memref<10x10x32xf32, #tpu.memory_space<vmem>>, vector<8x8x32xf32>,
    %c0_21 = arith.constant 0 : index
    %c0_22 = arith.constant 0 : index
    %c0_23 = arith.constant 0 : index
    %31 = vector.load %arg7[%c0_21, %c0_22, %c0_23] : memref<10x10x32xf32, #tpu.memory_space<vmem>>, vector<10x10x32xf32>
    %c0_24 = arith.constant 0 : index
    %c0_25 = arith.constant 0 : index
    %32 = vector.load %arg5[%c0_24, %c0_25] : memref<288x32xbf16, #tpu.memory_space<vmem>>, vector<288x32xbf16>
    %33 = vector.extract_strided_slice %31 {offsets = [0, 0, 0], sizes = [8, 8, 32], strides = [1, 1, 1]} : vector<10x10x32xf32> to vector<8x8x32xf32>
    %34 = vector.shape_cast %33 : vector<8x8x32xf32> to vector<64x32xf32>
    %35 = vector.extract_strided_slice %31 {offsets = [0, 1, 0], sizes = [8, 8, 32], strides = [1, 1, 1]} : vector<10x10x32xf32> to vector<8x8x32xf32>
    %36 = vector.shape_cast %35 : vector<8x8x32xf32> to vector<64x32xf32>
    %37 = vector.extract_strided_slice %31 {offsets = [0, 2, 0], sizes = [8, 8, 32], strides = [1, 1, 1]} : vector<10x10x32xf32> to vector<8x8x32xf32>
    %38 = vector.shape_cast %37 : vector<8x8x32xf32> to vector<64x32xf32>
    %39 = vector.extract_strided_slice %31 {offsets = [1, 0, 0], sizes = [8, 8, 32], strides = [1, 1, 1]} : vector<10x10x32xf32> to vector<8x8x32xf32>
    %40 = vector.shape_cast %39 : vector<8x8x32xf32> to vector<64x32xf32>
    %41 = vector.extract_strided_slice %31 {offsets = [1, 1, 0], sizes = [8, 8, 32], strides = [1, 1, 1]} : vector<10x10x32xf32> to vector<8x8x32xf32>
    %42 = vector.shape_cast %41 : vector<8x8x32xf32> to vector<64x32xf32>
    %43 = vector.extract_strided_slice %31 {offsets = [1, 2, 0], sizes = [8, 8, 32], strides = [1, 1, 1]} : vector<10x10x32xf32> to vector<8x8x32xf32>
    %44 = vector.shape_cast %43 : vector<8x8x32xf32> to vector<64x32xf32>
    %45 = vector.extract_strided_slice %31 {offsets = [2, 0, 0], sizes = [8, 8, 32], strides = [1, 1, 1]} : vector<10x10x32xf32> to vector<8x8x32xf32>
    %46 = vector.shape_cast %45 : vector<8x8x32xf32> to vector<64x32xf32>
    %47 = vector.extract_strided_slice %31 {offsets = [2, 1, 0], sizes = [8, 8, 32], strides = [1, 1, 1]} : vector<10x10x32xf32> to vector<8x8x32xf32>
    %48 = vector.shape_cast %47 : vector<8x8x32xf32> to vector<64x32xf32>
    %49 = vector.extract_strided_slice %31 {offsets = [2, 2, 0], sizes = [8, 8, 32], strides = [1, 1, 1]} : vector<10x10x32xf32> to vector<8x8x32xf32>
    %50 = vector.shape_cast %49 : vector<8x8x32xf32> to vector<64x32xf32>
    %51 = tpu.concatenate %34, %36, %38, %40, %42, %44, %46, %48, %50 in 1 : vector<64x32xf32>, vector<64x32xf32>, vector<64x32xf32>, vector<64x32xf32>, vector<64x32xf32>, vector<64x32xf32>, vector<64x32xf32>, vector<64x32xf32>, vector<64x32xf32> -> vector<64x288xf32>
    %52 = arith.truncf %51 : vector<64x288xf32> to vector<64x288xbf16>
    %cst_26 = arith.constant dense<0.000000e+00> : vector<64x32xf32>
    %53 = tpu.matmul %52, %32, %cst_26 {dimension_numbers = #tpu.dot_dimension_numbers<[1], [0], [0], [1], [0, 0, 1, 1], [], []>} : vector<64x288xbf16>, vector<288x32xbf16>, vector<64x32xf32> -> vector<64x32xf32>
    %54 = arith.addf %27, %53 : vector<64x32xf32>
    %cst_27 = arith.constant 0.000000e+00 : f32
    %55 = vector.broadcast %cst_27 : f32 to vector<64x32xf32>
    %56 = arith.maximumf %54, %55 : vector<64x32xf32>
    %57 = vector.shape_cast %56 : vector<64x32xf32> to vector<8x8x32xf32>
    %c0_28 = arith.constant 0 : index
    %c0_29 = arith.constant 0 : index
    %c0_30 = arith.constant 0 : index
    %c0_31 = arith.constant 0 : index
    %58 = vector.load %arg3[%c0_28, %c0_29, %c0_30, %c0_31] : memref<1x8x8x32xf32, #tpu.memory_space<vmem>>, vector<1x8x8x32xf32>
    %59 = vector.shape_cast %58 : vector<1x8x8x32xf32> to vector<8x8x32xf32>
    %60 = arith.addf %57, %59 : vector<8x8x32xf32>
    %c0_32 = arith.constant 0 : index
    %c0_33 = arith.constant 0 : index
    %c0_34 = arith.constant 0 : index
    %c0_35 = arith.constant 0 : index
    %61 = vector.load %arg6[%c0_32, %c0_33, %c0_34, %c0_35] : memref<1x8x8x32xf32, #tpu.memory_space<vmem>>, vector<1x8x8x32xf32>
    %62 = vector.shape_cast %61 : vector<1x8x8x32xf32> to vector<8x8x32xf32>
    %63 = vector.shape_cast %60 : vector<8x8x32xf32> to vector<1x8x8x32xf32>
    tpu.vector_store %arg6[%c0_32, %c0_33, %c0_34, %c0_35], %63 {strides = array<i32>} : memref<1x8x8x32xf32, #tpu.memory_space<vmem>>, vector<1x8x8x32xf32>,
    return
  }
  func.func @transform_0(%arg0: i32) -> (i32, i32, i32, i32) {
    %c0_i32 = arith.constant 0 : i32
    %c0_i32_0 = arith.constant 0 : i32
    %c0_i32_1 = arith.constant 0 : i32
    %c0_i32_2 = arith.constant 0 : i32
    return %arg0, %c0_i32, %c0_i32_0, %c0_i32_1 : i32, i32, i32, i32
  }
  func.func @transform_1(%arg0: i32) -> (i32, i32, i32, i32) {
    %c0_i32 = arith.constant 0 : i32
    %c0_i32_0 = arith.constant 0 : i32
    %c0_i32_1 = arith.constant 0 : i32
    %c0_i32_2 = arith.constant 0 : i32
    return %arg0, %c0_i32, %c0_i32_0, %c0_i32_1 : i32, i32, i32, i32
  }
  func.func @transform_2(%arg0: i32) -> (i32, i32, i32, i32) {
    %c0_i32 = arith.constant 0 : i32
    %c0_i32_0 = arith.constant 0 : i32
    %c0_i32_1 = arith.constant 0 : i32
    %c0_i32_2 = arith.constant 0 : i32
    return %arg0, %c0_i32, %c0_i32_0, %c0_i32_1 : i32, i32, i32, i32
  }
  func.func @transform_3(%arg0: i32) -> (i32, i32) {
    %c0_i32 = arith.constant 0 : i32
    %c0_i32_0 = arith.constant 0 : i32
    %c0_i32_1 = arith.constant 0 : i32
    return %c0_i32, %c0_i32_0 : i32, i32
  }
  func.func @transform_4(%arg0: i32) -> (i32, i32) {
    %c0_i32 = arith.constant 0 : i32
    %c0_i32_0 = arith.constant 0 : i32
    %c0_i32_1 = arith.constant 0 : i32
    return %c0_i32, %c0_i32_0 : i32, i32
  }
  func.func @transform_5(%arg0: i32) -> (i32, i32, i32, i32) {
    %c0_i32 = arith.constant 0 : i32
    %c0_i32_0 = arith.constant 0 : i32
    %c0_i32_1 = arith.constant 0 : i32
    %c0_i32_2 = arith.constant 0 : i32
    return %arg0, %c0_i32, %c0_i32_0, %c0_i32_1 : i32, i32, i32, i32
  }
}

</mosaic_0001>

<llo_original>
// kernel: dab_forward.8
$region0: #{dab_forward.8}
  #allocation0 [shape = 'u32[]', space=smem, size = 0x4, offset = 0x4, fixed_abs, tag = 'smem constant byte address 0x4 - core index']
  #allocation1 [shape = 'u32[72,128]{1,0:T(1,128)}', space=vmem, size = 0x9000, scoped, tag = 'internal scratch']
  #allocation2 [shape = 'f32[1,1]{1,0:T(1,128)S(6)}', space=smem, size = 0x200, scoped, tag = 'scoped memory for dab_forward.8']
  %s0 = inlined_call_operand.vmem [shape: f32[2,64,32], index: 0, kind: input, shape index: {}]
  %s1 = inlined_call_operand.<no memory space> [shape: f32[1,1], index: 1, kind: input, shape index: {}]
  %s2 = inlined_call_operand.vmem [shape: f32[2,64,32], index: 2, kind: output, shape index: {}]
  %s3 = sld [smem:[#allocation0]]
  $region41: #{dab_forward.8} parent=0
    _
  %s5 = ssub.s32 1, %s3
  %s6 = scalar_select 0, %s5, %s3
  %7 = sst [smem:[#allocation2]] %s1
  loop: start=0, step=1, limit=4
  $region2: #{dab_forward.8} parent=0 // loop_pre_header
    _
  $region3: #{dab_forward.8} parent=0 // loop_header
    %s9 = sphi 0, %s13
    %p10 = scmp.ge.s32.totalorder %s9, 4
    %s19 = sphi 0, %s21
    %s22 = sphi 0, %s19
    %s23 = sphi 0, %s22
    %s39 = sphi 0, %s23
    %s43 = sphi 0, %s43
    %s45 = sphi 0, %s43
    %s46 = sphi 0, %s45
    %s60 = sphi 0, %s46
    %s66 = sphi 0, %s68
    %s69 = sphi 0, %s66
    %s70 = sphi 0, %s69
    %s86 = sphi 0, %s70
  $region4: #{dab_forward.8} parent=0 // loop_header_branch
    %12 = sbr.rel (%p10) target = $region8
  $region5: #{dab_forward.8} parent=0 // loop_body
    %s14 = ssub.s32 %s9, 1
    %s15 = ssub.s32 %s9, 2
    %s16 = sadd.s32 %s9, 1
    %s17 = ssub.s32 %s9, %s16
    %p18 = scmp.eq.s32.totalorder %s17, 0
    %s20 = sadd.s32 %s19, 1
    %s21 = scalar_select %p18, %s19, %s20
    %p24 = pneg %p18
    %p25 = scmp.eq.s32.totalorder %s9, 1
    %p26 = por %p24, %p25
    %p27 = scmp.ne.s32.totalorder %s19, %s22
    %p28 = scmp.eq.s32.totalorder %s9, 0
    %p29 = por %p27, %p28
    %p30 = scmp.ne.s32.totalorder %s19, %s22
    %p31 = scmp.eq.s32.totalorder %s14, 1
    %p32 = por %p30, %p31
    %p33 = scmp.ne.s32.totalorder %s22, %s23
    %p34 = scmp.eq.s32.totalorder %s14, 0
    %p35 = por %p33, %p34
    %p36 = scmp.ne.s32.totalorder %s22, %s23
    %p37 = scmp.eq.s32.totalorder %s15, 1
    %p38 = por %p36, %p37
    %p40 = scmp.ne.s32.totalorder %s23, %s39
    %p41 = scmp.eq.s32.totalorder %s15, 0
    %p42 = por %p40, %p41
    %s44 = sadd.s32 %s43, 1
    %p47 = scmp.eq.s32.totalorder %s9, 1
    %p48 = scmp.ne.s32.totalorder %s43, %s45
    %p49 = scmp.eq.s32.totalorder %s9, 0
    %p50 = por %p48, %p49
    %p51 = scmp.ne.s32.totalorder %s43, %s45
    %p52 = scmp.eq.s32.totalorder %s14, 1
    %p53 = por %p51, %p52
    %p54 = scmp.ne.s32.totalorder %s45, %s46
    %p55 = scmp.eq.s32.totalorder %s14, 0
    %p56 = por %p54, %p55
    %p57 = scmp.ne.s32.totalorder %s45, %s46
    %p58 = scmp.eq.s32.totalorder %s15, 1
    %p59 = por %p57, %p58
    %p61 = scmp.ne.s32.totalorder %s46, %s60
    %p62 = scmp.eq.s32.totalorder %s15, 0
    %p63 = por %p61, %p62
    %s64 = ssub.s32 %s9, %s16
    %p65 = scmp.eq.s32.totalorder %s64, 0
    %s67 = sadd.s32 %s66, 1
    %s68 = scalar_select %p65, %s66, %s67
    %p71 = pneg %p65
    %p72 = scmp.eq.s32.totalorder %s9, 1
    %p73 = por %p71, %p72
    %p74 = scmp.ne.s32.totalorder %s66, %s69
    %p75 = scmp.eq.s32.totalorder %s9, 0
    %p76 = por %p74, %p75
    %p77 = scmp.ne.s32.totalorder %s66, %s69
    %p78 = scmp.eq.s32.totalorder %s14, 1
    %p79 = por %p77, %p78
    %p80 = scmp.ne.s32.totalorder %s69, %s70
    %p81 = scmp.eq.s32.totalorder %s14, 0
    %p82 = por %p80, %p81
    %p83 = scmp.ne.s32.totalorder %s69, %s70
    %p84 = scmp.eq.s32.totalorder %s15, 1
    %p85 = por %p83, %p84
    %p87 = scmp.ne.s32.totalorder %s70, %s86
    %p88 = scmp.eq.s32.totalorder %s15, 0
    %p89 = por %p87, %p88
    %p90 = scmp.le.s32.totalorder 1, %s9
    %p91 = scmp.lt.s32.totalorder %s9, 3
    %p92 = pnand %p90, %p91
    %p93 = pneg %p92
    // Predicated region
    $region9: #{dab_forward.8} parent=5 // pred_check
      _
    $region10: #{dab_forward.8} parent=5 // pred_check_branch
      %95 = sbr.rel (%p92) target = $region12
    $region11: #{dab_forward.8} parent=5 // pred_region
      %s96 = ssub.s32 %s9, 1
      // Predicated region
      $region13: #{dab_forward.8} parent=11 // pred_check
        %p97 = pneg %p56
      $region14: #{dab_forward.8} parent=11 // pred_check_branch
        %99 = sbr.rel (%p97) target = $region16
      $region15: #{dab_forward.8} parent=11 // pred_region
        _
      $region16: #{dab_forward.8} parent=11 // pred_fallthru
        _
    $region12: #{dab_forward.8} parent=5 // pred_fallthru
      _
    %p100 = scmp.lt.s32.totalorder %s9, 2
    // Predicated region
    $region17: #{dab_forward.8} parent=5 // pred_check
      %p101 = pneg %p100
    $region18: #{dab_forward.8} parent=5 // pred_check_branch
      %103 = sbr.rel (%p101) target = $region20
    $region19: #{dab_forward.8} parent=5 // pred_region
      // Predicated region
      $region21: #{dab_forward.8} parent=19 // pred_check
        %p104 = pneg %p29
      $region22: #{dab_forward.8} parent=19 // pred_check_branch
        %106 = sbr.rel (%p104) target = $region24
      $region23: #{dab_forward.8} parent=19 // pred_region
        %p107 = scmp.lt.s32.totalorder %s9, 1
        %s108 = scalar_select %p107, %s9, 1
        %s109 = smul.addr %s108, 8
        %s110 = smul.addr %s109, 8
        %s111 = scalar_lea.vmem %s0, %s110
      $region24: #{dab_forward.8} parent=19 // pred_fallthru
        _
    $region20: #{dab_forward.8} parent=5 // pred_fallthru
      _
    %p112 = scmp.le.s32.totalorder 1, %s9
    %p113 = scmp.lt.s32.totalorder %s9, 3
    %p114 = pnand %p112, %p113
    %p115 = pneg %p114
    // Predicated region
    $region25: #{dab_forward.8} parent=5 // pred_check
      _
    $region26: #{dab_forward.8} parent=5 // pred_check_branch
      %117 = sbr.rel (%p114) target = $region28
    $region27: #{dab_forward.8} parent=5 // pred_region
      %s118 = ssub.s32 %s9, 1
      %p119 = scmp.lt.s32.totalorder %s14, 1
      %s120 = scalar_select %p119, %s14, 1
      %s121 = smul.addr %s120, 8
      %s122 = smul.addr %s121, 8
      %s123 = scalar_lea.vmem %s0, %s122
      %p124 = pneg %p35
      %p125 = pneg %p32
      %p126 = pneg %p56
      %p127 = pneg %p53
      %p128 = pneg %p82
      %p129 = pneg %p79
      %p130 = scmp.lt.s32.totalorder %s14, 1
      %s131 = scalar_select %p130, %s14, 1
      %s132 = smul.addr %s131, 8
      %s133 = smul.addr %s132, 8
      %s134 = scalar_lea.vmem %s2, %s133
      %p135 = scmp.lt.s32.totalorder %s14, 1
      %s136 = scalar_select %p135, %s14, 1
      %s137 = smul.addr %s136, 8
      %s138 = smul.addr %s137, 8
      %s139 = scalar_lea.vmem %s0, %s138
      %p140 = scmp.lt.s32.totalorder %s14, 1
      %s141 = scalar_select %p140, %s14, 1
      %s142 = smul.addr %s141, 8
      %s143 = smul.addr %s142, 8
      %s144 = scalar_lea.vmem %s2, %s143
      %v146 = vld [vmem:[%s139] sm:$0xff]
      %v147 = vld [vmem:[%s139 + $0x8] sm:$0xff]
      %v148 = vld [vmem:[%s139 + $0x10] sm:$0xff]
      %v149 = vld [vmem:[%s139 + $0x18] sm:$0xff]
      %v150 = vld [vmem:[%s139 + $0x20] sm:$0xff]
      %v151 = vld [vmem:[%s139 + $0x28] sm:$0xff]
      %v152 = vld [vmem:[%s139 + $0x30] sm:$0xff]
      %v153 = vld [vmem:[%s139 + $0x38] sm:$0xff]
      %v154 = vpack.c.bf16 %v147, %v146
      %v155 = vpack.c.bf16 %v149, %v148
      %v156 = vpack.c.bf16 %v151, %v150
      %v157 = vpack.c.bf16 %v153, %v152
      %158 = vxpose.xlu0.c.b16.start [1/8] %v154, 128
      %159 = vxpose.xlu0.c.b16.cont [2/8] %v155, 128
      %160 = vxpose.xlu0.c.b16.cont [3/8] %v156, 128
      %161 = vxpose.xlu0.c.b16.cont [4/8] %v157, 128
      %162 = vxpose.xlu0.c.b16.cont [5/8] 0, 128
      %163 = vxpose.xlu0.c.b16.cont [6/8] 0, 128
      %164 = vxpose.xlu0.c.b16.cont [7/8] 0, 128
      %165 = vxpose.xlu0.c.b16.end [8/8] 0, 128
      %v166 = vpop.trf.xlu0
      %v167 = vpop.trf.xlu0
      %v168 = vpop.trf.xlu0
      %v169 = vpop.trf.xlu0
      %v170 = vpop.trf.xlu0
      %v171 = vpop.trf.xlu0
      %v172 = vpop.trf.xlu0
      %v173 = vpop.trf.xlu0
      %vm174 = vcmask 523264
      %v176 = vsel %vm174, %v166, 0
      %v179 = vsel %vm174, %v167, 0
      %181 = vmatpush.bf16.msra.mxu0 0
      %182 = vmatpush.bf16.msra.mxu0 0
      %183 = vmatpush.bf16.msra.mxu0 0
      %184 = vmatpush.bf16.msra.mxu0 0
      %185 = vmatpush.bf16.msra.mxu0 %v157
      %186 = vmatpush.bf16.msra.mxu0 %v156
      %187 = vmatpush.bf16.msra.mxu0 %v155
      %188 = vmatpush.bf16.msra.mxu0 %v154
      %189 = vmatmul.bf16.gmra.mxu0 %v176
      %v190 = vpop.f32.mrf.mxu0
      %v191 = vadd.f32 0.0, %v190
      %v192 = vpop.f32.mrf.mxu0
      %v193 = vadd.f32 0.0, %v192
      %194 = vmatmul.bf16.gmra.mxu0 %v179
      %v195 = vpop.f32.mrf.mxu0
      %v196 = vadd.f32 0.0, %v195
      %v197 = vpop.f32.mrf.mxu0
      %v198 = vadd.f32 0.0, %v197
      %199 = vdwg.mxu0
      %vm200 = vcmask 261120
      %v201 = vsel %vm200, %v191, -inf
      %202 = vmax.xlane.f32.xlu0 %v201
      %v203 = vpop.xlane.xlu0 %202
      %v204 = vsel %vm200, %v193, -inf
      %205 = vmax.xlane.f32.xlu0 %v204
      %v206 = vpop.xlane.xlu0 %205
      %v207 = vsel %vm200, %v196, -inf
      %208 = vmax.xlane.f32.xlu0 %v207
      %v209 = vpop.xlane.xlu0 %208
      %v210 = vsel %vm200, %v198, -inf
      %211 = vmax.xlane.f32.xlu0 %v210
      %v212 = vpop.xlane.xlu0 %211
      %v213 = vsub.f32 %v203, %v191
      %v214 = vsub.f32 %v206, %v193
      %v215 = vsub.f32 %v209, %v196
      %v216 = vsub.f32 %v212, %v198
      %v217 = vsel %vm200, %v213, -inf
      %218 = vmax.xlane.f32.xlu0 %v217
      %v219 = vpop.xlane.xlu0 %218
      %v220 = vsel %vm200, %v214, -inf
      %221 = vmax.xlane.f32.xlu0 %v220
      %v222 = vpop.xlane.xlu0 %221
      %v223 = vsel %vm200, %v215, -inf
      %224 = vmax.xlane.f32.xlu0 %v223
      %v225 = vpop.xlane.xlu0 %224
      %v226 = vsel %vm200, %v216, -inf
      %227 = vmax.xlane.f32.xlu0 %v226
      %v228 = vpop.xlane.xlu0 %227
      %v229 = vsub.f32 %v213, %v219
      %v230 = vsub.f32 %v214, %v222
      %v231 = vsub.f32 %v215, %v225
      %v232 = vsub.f32 %v216, %v228
      %v233 = vmul.f32 %v229, 1.442695
      %v234 = vpow.pop %v233
      %v235 = vmul.f32 %v230, 1.442695
      %v236 = vpow.pop %v235
      %v237 = vmul.f32 %v231, 1.442695
      %v238 = vpow.pop %v237
      %v239 = vmul.f32 %v232, 1.442695
      %v240 = vpow.pop %v239
      %v241 = vsel %vm200, %v234, 0.0
      %242 = vadd.xlane.f32.xlu0 %v241
      %v243 = vpop.xlane.xlu0 %242
      %v244 = vsel %vm200, %v236, 0.0
      %245 = vadd.xlane.f32.xlu0 %v244
      %v246 = vpop.xlane.xlu0 %245
      %v247 = vsel %vm200, %v238, 0.0
      %248 = vadd.xlane.f32.xlu0 %v247
      %v249 = vpop.xlane.xlu0 %248
      %v250 = vsel %vm200, %v240, 0.0
      %251 = vadd.xlane.f32.xlu0 %v250
      %v252 = vpop.xlane.xlu0 %251
      %v253 = vrcp.pop %v243
      %v254 = vmul.f32 %v243, %v253
      %v255 = vsub.f32 1.0, %v254
      %v256 = vmul.f32 %v253, %v255
      %v257 = vadd.f32 %v253, %v256
      %vm258 = vweird.f32 %v243
      %vm259 = vweird.f32 %v253
      %vm260 = vmor %vm258, %vm259
      %v261 = vsel %vm260, %v253, %v257
      %v262 = vand.u32 2147483647, %v243
      %vm263 = vcmp.eq.f32.partialorder %v262, 8.507059e+37
      %v264 = vand.u32 %v243, 2147483648
      %v265 = vor.u32 1.1754944e-38, %v264
      %v266 = vsel %vm263, %v265, %v261
      %v267 = vmul.f32 %v234, %v266
      %v268 = vrcp.pop %v246
      %v269 = vmul.f32 %v246, %v268
      %v270 = vsub.f32 1.0, %v269
      %v271 = vmul.f32 %v268, %v270
      %v272 = vadd.f32 %v268, %v271
      %vm273 = vweird.f32 %v246
      %vm274 = vweird.f32 %v268
      %vm275 = vmor %vm273, %vm274
      %v276 = vsel %vm275, %v268, %v272
      %v277 = vand.u32 2147483647, %v246
      %vm278 = vcmp.eq.f32.partialorder %v277, 8.507059e+37
      %v279 = vand.u32 %v246, 2147483648
      %v280 = vor.u32 1.1754944e-38, %v279
      %v281 = vsel %vm278, %v280, %v276
      %v282 = vmul.f32 %v236, %v281
      %v283 = vrcp.pop %v249
      %v284 = vmul.f32 %v249, %v283
      %v285 = vsub.f32 1.0, %v284
      %v286 = vmul.f32 %v283, %v285
      %v287 = vadd.f32 %v283, %v286
      %vm288 = vweird.f32 %v249
      %vm289 = vweird.f32 %v283
      %vm290 = vmor %vm288, %vm289
      %v291 = vsel %vm290, %v283, %v287
      %v292 = vand.u32 2147483647, %v249
      %vm293 = vcmp.eq.f32.partialorder %v292, 8.507059e+37
      %v294 = vand.u32 %v249, 2147483648
      %v295 = vor.u32 1.1754944e-38, %v294
      %v296 = vsel %vm293, %v295, %v291
      %v297 = vmul.f32 %v238, %v296
      %v298 = vrcp.pop %v252
      %v299 = vmul.f32 %v252, %v298
      %v300 = vsub.f32 1.0, %v299
      %v301 = vmul.f32 %v298, %v300
      %v302 = vadd.f32 %v298, %v301
      %vm303 = vweird.f32 %v252
      %vm304 = vweird.f32 %v298
      %vm305 = vmor %vm303, %vm304
      %v306 = vsel %vm305, %v298, %v302
      %v307 = vand.u32 2147483647, %v252
      %vm308 = vcmp.eq.f32.partialorder %v307, 8.507059e+37
      %v309 = vand.u32 %v252, 2147483648
      %v310 = vor.u32 1.1754944e-38, %v309
      %v311 = vsel %vm308, %v310, %v306
      %v312 = vmul.f32 %v240, %v311
      %v313 = vpack.c.bf16 %v282, %v267
      %v314 = vpack.c.bf16 %v312, %v297
      %v316 = vsel %vm200, %v154, 0
      %v319 = vsel %vm200, %v155, 0
      %v322 = vsel %vm200, %v156, 0
      %v325 = vsel %vm200, %v157, 0
      %v328 = vsel %vm200, %v313, 0
      %v331 = vsel %vm200, %v314, 0
      %333 = vmatpush.bf16.xpose.msra.mxu0 0
      %334 = vmatpush.bf16.xpose.msra.mxu0 0
      %335 = vmatpush.bf16.xpose.msra.mxu0 0
      %336 = vmatpush.bf16.xpose.msra.mxu0 0
      %337 = vmatpush.bf16.xpose.msra.mxu0 0
      %338 = vmatpush.bf16.xpose.msra.mxu0 0
      %339 = vmatpush.bf16.xpose.msra.mxu0 %v331
      %340 = vmatpush.bf16.xpose.msra.mxu0 %v328
      %341 = vmatmul.bf16.gmra.mxu0 %v316
      %v342 = vpop.f32.mrf.mxu0
      %v343 = vadd.f32 0.0, %v342
      %v344 = vpop.f32.mrf.mxu0
      %v345 = vadd.f32 0.0, %v344
      %346 = vmatmul.bf16.gmra.mxu0 %v319
      %v347 = vpop.f32.mrf.mxu0
      %v348 = vadd.f32 0.0, %v347
      %v349 = vpop.f32.mrf.mxu0
      %v350 = vadd.f32 0.0, %v349
      %351 = vmatmul.bf16.gmra.mxu0 %v322
      %v352 = vpop.f32.mrf.mxu0
      %v353 = vadd.f32 0.0, %v352
      %v354 = vpop.f32.mrf.mxu0
      %v355 = vadd.f32 0.0, %v354
      %356 = vmatmul.bf16.gmra.mxu0 %v325
      %v357 = vpop.f32.mrf.mxu0
      %v358 = vadd.f32 0.0, %v357
      %v359 = vpop.f32.mrf.mxu0
      %v360 = vadd.f32 0.0, %v359
      %361 = vdwg.mxu0
      %s362 = sld [smem:[#allocation2]]
      %v363 = vstv %s362
      %v364 = vmul.f32 %v363, %v343
      %v365 = vmul.f32 %v363, %v345
      %v366 = vmul.f32 %v363, %v348
      %v367 = vmul.f32 %v363, %v350
      %v368 = vmul.f32 %v363, %v353
      %v369 = vmul.f32 %v363, %v355
      %v370 = vmul.f32 %v363, %v358
      %v371 = vmul.f32 %v363, %v360
      %v372 = vadd.f32 %v364, %v146
      %v373 = vadd.f32 %v365, %v147
      %v374 = vadd.f32 %v366, %v148
      %v375 = vadd.f32 %v367, %v149
      %v376 = vadd.f32 %v368, %v150
      %v377 = vadd.f32 %v369, %v151
      %v378 = vadd.f32 %v370, %v152
      %v379 = vadd.f32 %v371, %v153
      %380 = vst.msk [vmem:[%s144] sm:$0xff] %vm200, %v372
      %381 = vst.msk [vmem:[%s144 + $0x8] sm:$0xff] %vm200, %v373
      %382 = vst.msk [vmem:[%s144 + $0x10] sm:$0xff] %vm200, %v374
      %383 = vst.msk [vmem:[%s144 + $0x18] sm:$0xff] %vm200, %v375
      %384 = vst.msk [vmem:[%s144 + $0x20] sm:$0xff] %vm200, %v376
      %385 = vst.msk [vmem:[%s144 + $0x28] sm:$0xff] %vm200, %v377
      %386 = vst.msk [vmem:[%s144 + $0x30] sm:$0xff] %vm200, %v378
      %387 = vst.msk [vmem:[%s144 + $0x38] sm:$0xff] %vm200, %v379
      %p388 = scmp.lt.s32.totalorder %s14, 1
      %s389 = scalar_select %p388, %s14, 1
      %s390 = smul.addr %s389, 8
      %s391 = smul.addr %s390, 8
      %s392 = scalar_lea.vmem %s2, %s391
      // Predicated region
      $region29: #{dab_forward.8} parent=27 // pred_check
        %p393 = pneg %p79
      $region30: #{dab_forward.8} parent=27 // pred_check_branch
        %395 = sbr.rel (%p393) target = $region32
      $region31: #{dab_forward.8} parent=27 // pred_region
        _
      $region32: #{dab_forward.8} parent=27 // pred_fallthru
        _
    $region28: #{dab_forward.8} parent=5 // pred_fallthru
      _
    %p396 = scmp.le.s32.totalorder 2, %s9
    // Predicated region
    $region33: #{dab_forward.8} parent=5 // pred_check
      %p397 = pneg %p396
    $region34: #{dab_forward.8} parent=5 // pred_check_branch
      %399 = sbr.rel (%p397) target = $region36
    $region35: #{dab_forward.8} parent=5 // pred_region
      %s400 = ssub.s32 %s9, 2
      // Predicated region
      $region37: #{dab_forward.8} parent=35 // pred_check
        %p401 = pneg %p85
      $region38: #{dab_forward.8} parent=35 // pred_check_branch
        %403 = sbr.rel (%p401) target = $region40
      $region39: #{dab_forward.8} parent=35 // pred_region
        %p404 = scmp.lt.s32.totalorder %s15, 1
        %s405 = scalar_select %p404, %s15, 1
        %s406 = smul.addr %s405, 8
        %s407 = smul.addr %s406, 8
        %s408 = scalar_lea.vmem %s2, %s407
      $region40: #{dab_forward.8} parent=35 // pred_fallthru
        _
    $region36: #{dab_forward.8} parent=5 // pred_fallthru
      _
  $region6: #{dab_forward.8} parent=0 // loop_footer
    %s13 = sadd.s32 1, %s9
  $region7: #{dab_forward.8} parent=0 // loop_footer_branch
    %8 = sbr.rel target = $region3
  $region8: #{dab_forward.8} parent=0 // loop_exit
    _

// kernel: dab_forward.6
$region0: #{dab_forward.6}
  #allocation0 [shape = 'u32[]', space=smem, size = 0x4, offset = 0x4, fixed_abs, tag = 'smem constant byte address 0x4 - core index']
  #allocation1 [shape = 'u32[72,128]{1,0:T(1,128)}', space=vmem, size = 0x9000, scoped, tag = 'internal scratch']
  #allocation2 [shape = 'f32[64,2]{1,0:T(8,128)}', space=vmem, size = 0x8000, scoped, tag = 'scratch operand']
  #allocation3 [shape = 'f32[64,2]{1,0:T(8,128)}', space=vmem, size = 0x8000, scoped, tag = 'scratch operand']
  #allocation4 [shape = 'f32[64,32]{1,0:T(8,128)}', space=vmem, size = 0x8000, scoped, tag = 'scratch operand']
  #allocation5 [shape = 'f32[64,1]{1,0:T(8,128)}', space=vmem, size = 0x8000, scoped, tag = 'scratch operand']
  #allocation6 [shape = 'f32[64,1]{1,0:T(8,128)}', space=vmem, size = 0x8000, scoped, tag = 'scratch operand']
  #allocation7 [shape = 'f32[64,32]{1,0:T(8,128)}', space=vmem, size = 0x8000, scoped, tag = 'scratch operand']
  #allocation8 [shape = 'f32[1,1]{1,0:T(1,128)S(6)}', space=smem, size = 0x200, scoped, tag = 'scoped memory for dab_forward.6']
  %s0 = inlined_call_operand.vmem [shape: f32[2,64,32], index: 0, kind: input, shape index: {}]
  %s1 = inlined_call_operand.vmem [shape: bf16[32,36], index: 1, kind: input, shape index: {}]
  %s2 = inlined_call_operand.vmem [shape: f32[1,36], index: 2, kind: input, shape index: {}]
  %s3 = inlined_call_operand.<no memory space> [shape: f32[1,1], index: 3, kind: input, shape index: {}]
  %s4 = inlined_call_operand.vmem [shape: f32[2,64,32], index: 4, kind: output, shape index: {}]
  %s5 = sld [smem:[#allocation0]]
  $region57: #{dab_forward.6} parent=0
    _
  %s7 = ssub.s32 1, %s5
  %s8 = scalar_select 0, %s7, %s5
  %9 = sst [smem:[#allocation8]] %s3
  loop: start=0, step=1, limit=4
  $region2: #{dab_forward.6} parent=0 // loop_pre_header
    _
  $region3: #{dab_forward.6} parent=0 // loop_header
    %s11 = sphi 0, %s15
    %p12 = scmp.ge.s32.totalorder %s11, 4
    %s18 = sphi 0, %s30
    %s19 = sphi 0, %s26
    %s20 = sphi 0, %s18
    %s21 = sphi 0, %s19
    %s22 = sphi 0, %s20
    %s23 = sphi 0, %s21
    %s33 = sphi 0, %s35
    %s36 = sphi 0, %s33
    %s37 = sphi 0, %s36
    %s53 = sphi 0, %s37
    %s57 = sphi 0, %s57
    %s59 = sphi 0, %s57
    %s60 = sphi 0, %s59
    %s74 = sphi 0, %s60
    %s78 = sphi 0, %s78
    %s80 = sphi 0, %s78
    %s81 = sphi 0, %s80
    %s95 = sphi 0, %s81
    %s99 = sphi 0, %s99
    %s101 = sphi 0, %s99
    %s102 = sphi 0, %s101
    %s116 = sphi 0, %s102
    %s122 = sphi 0, %s124
    %s125 = sphi 0, %s122
    %s126 = sphi 0, %s125
    %s142 = sphi 0, %s126
  $region4: #{dab_forward.6} parent=0 // loop_header_branch
    %14 = sbr.rel (%p12) target = $region8
  $region5: #{dab_forward.6} parent=0 // loop_body
    %s16 = ssub.s32 %s11, 1
    %s17 = ssub.s32 %s11, 2
    %s24 = sadd.s32 1, %s19
    %p25 = scmp.ge.s32.totalorder %s24, 1
    %s26 = scalar_select %p25, 0, %s24
    %s27 = sadd.s32 1, %s18
    %s28 = scalar_select %p25, %s27, %s18
    %p29 = scmp.ge.s32.totalorder %s28, 2
    %s30 = scalar_select %p29, 0, %s28
    %s31 = ssub.s32 %s18, %s30
    %p32 = scmp.eq.s32.totalorder %s31, 0
    %s34 = sadd.s32 %s33, 1
    %s35 = scalar_select %p32, %s33, %s34
    %p38 = pneg %p32
    %p39 = scmp.eq.s32.totalorder %s11, 1
    %p40 = por %p38, %p39
    %p41 = scmp.ne.s32.totalorder %s33, %s36
    %p42 = scmp.eq.s32.totalorder %s11, 0
    %p43 = por %p41, %p42
    %p44 = scmp.ne.s32.totalorder %s33, %s36
    %p45 = scmp.eq.s32.totalorder %s16, 1
    %p46 = por %p44, %p45
    %p47 = scmp.ne.s32.totalorder %s36, %s37
    %p48 = scmp.eq.s32.totalorder %s16, 0
    %p49 = por %p47, %p48
    %p50 = scmp.ne.s32.totalorder %s36, %s37
    %p51 = scmp.eq.s32.totalorder %s17, 1
    %p52 = por %p50, %p51
    %p54 = scmp.ne.s32.totalorder %s37, %s53
    %p55 = scmp.eq.s32.totalorder %s17, 0
    %p56 = por %p54, %p55
    %s58 = sadd.s32 %s57, 1
    %p61 = scmp.eq.s32.totalorder %s11, 1
    %p62 = scmp.ne.s32.totalorder %s57, %s59
    %p63 = scmp.eq.s32.totalorder %s11, 0
    %p64 = por %p62, %p63
    %p65 = scmp.ne.s32.totalorder %s57, %s59
    %p66 = scmp.eq.s32.totalorder %s16, 1
    %p67 = por %p65, %p66
    %p68 = scmp.ne.s32.totalorder %s59, %s60
    %p69 = scmp.eq.s32.totalorder %s16, 0
    %p70 = por %p68, %p69
    %p71 = scmp.ne.s32.totalorder %s59, %s60
    %p72 = scmp.eq.s32.totalorder %s17, 1
    %p73 = por %p71, %p72
    %p75 = scmp.ne.s32.totalorder %s60, %s74
    %p76 = scmp.eq.s32.totalorder %s17, 0
    %p77 = por %p75, %p76
    %s79 = sadd.s32 %s78, 1
    %p82 = scmp.eq.s32.totalorder %s11, 1
    %p83 = scmp.ne.s32.totalorder %s78, %s80
    %p84 = scmp.eq.s32.totalorder %s11, 0
    %p85 = por %p83, %p84
    %p86 = scmp.ne.s32.totalorder %s78, %s80
    %p87 = scmp.eq.s32.totalorder %s16, 1
    %p88 = por %p86, %p87
    %p89 = scmp.ne.s32.totalorder %s80, %s81
    %p90 = scmp.eq.s32.totalorder %s16, 0
    %p91 = por %p89, %p90
    %p92 = scmp.ne.s32.totalorder %s80, %s81
    %p93 = scmp.eq.s32.totalorder %s17, 1
    %p94 = por %p92, %p93
    %p96 = scmp.ne.s32.totalorder %s81, %s95
    %p97 = scmp.eq.s32.totalorder %s17, 0
    %p98 = por %p96, %p97
    %s100 = sadd.s32 %s99, 1
    %p103 = scmp.eq.s32.totalorder %s11, 1
    %p104 = scmp.ne.s32.totalorder %s99, %s101
    %p105 = scmp.eq.s32.totalorder %s11, 0
    %p106 = por %p104, %p105
    %p107 = scmp.ne.s32.totalorder %s99, %s101
    %p108 = scmp.eq.s32.totalorder %s16, 1
    %p109 = por %p107, %p108
    %p110 = scmp.ne.s32.totalorder %s101, %s102
    %p111 = scmp.eq.s32.totalorder %s16, 0
    %p112 = por %p110, %p111
    %p113 = scmp.ne.s32.totalorder %s101, %s102
    %p114 = scmp.eq.s32.totalorder %s17, 1
    %p115 = por %p113, %p114
    %p117 = scmp.ne.s32.totalorder %s102, %s116
    %p118 = scmp.eq.s32.totalorder %s17, 0
    %p119 = por %p117, %p118
    %s120 = ssub.s32 %s18, %s30
    %p121 = scmp.eq.s32.totalorder %s120, 0
    %s123 = sadd.s32 %s122, 1
    %s124 = scalar_select %p121, %s122, %s123
    %p127 = pneg %p121
    %p128 = scmp.eq.s32.totalorder %s11, 1
    %p129 = por %p127, %p128
    %p130 = scmp.ne.s32.totalorder %s122, %s125
    %p131 = scmp.eq.s32.totalorder %s11, 0
    %p132 = por %p130, %p131
    %p133 = scmp.ne.s32.totalorder %s122, %s125
    %p134 = scmp.eq.s32.totalorder %s16, 1
    %p135 = por %p133, %p134
    %p136 = scmp.ne.s32.totalorder %s125, %s126
    %p137 = scmp.eq.s32.totalorder %s16, 0
    %p138 = por %p136, %p137
    %p139 = scmp.ne.s32.totalorder %s125, %s126
    %p140 = scmp.eq.s32.totalorder %s17, 1
    %p141 = por %p139, %p140
    %p143 = scmp.ne.s32.totalorder %s126, %s142
    %p144 = scmp.eq.s32.totalorder %s17, 0
    %p145 = por %p143, %p144
    %p146 = scmp.le.s32.totalorder 1, %s11
    %p147 = scmp.lt.s32.totalorder %s11, 3
    %p148 = pnand %p146, %p147
    %p149 = pneg %p148
    // Predicated region
    $region9: #{dab_forward.6} parent=5 // pred_check
      _
    $region10: #{dab_forward.6} parent=5 // pred_check_branch
      %151 = sbr.rel (%p148) target = $region12
    $region11: #{dab_forward.6} parent=5 // pred_region
      %s152 = ssub.s32 %s11, 1
      // Predicated region
      $region13: #{dab_forward.6} parent=11 // pred_check
        %p153 = pneg %p70
      $region14: #{dab_forward.6} parent=11 // pred_check_branch
        %155 = sbr.rel (%p153) target = $region16
      $region15: #{dab_forward.6} parent=11 // pred_region
        _
      $region16: #{dab_forward.6} parent=11 // pred_fallthru
        _
      // Predicated region
      $region17: #{dab_forward.6} parent=11 // pred_check
        %p156 = pneg %p91
      $region18: #{dab_forward.6} parent=11 // pred_check_branch
        %158 = sbr.rel (%p156) target = $region20
      $region19: #{dab_forward.6} parent=11 // pred_region
        _
      $region20: #{dab_forward.6} parent=11 // pred_fallthru
        _
      // Predicated region
      $region21: #{dab_forward.6} parent=11 // pred_check
        %p159 = pneg %p112
      $region22: #{dab_forward.6} parent=11 // pred_check_branch
        %161 = sbr.rel (%p159) target = $region24
      $region23: #{dab_forward.6} parent=11 // pred_region
        _
      $region24: #{dab_forward.6} parent=11 // pred_fallthru
        _
    $region12: #{dab_forward.6} parent=5 // pred_fallthru
      _
    %p162 = scmp.lt.s32.totalorder %s11, 2
    // Predicated region
    $region25: #{dab_forward.6} parent=5 // pred_check
      %p163 = pneg %p162
    $region26: #{dab_forward.6} parent=5 // pred_check_branch
      %165 = sbr.rel (%p163) target = $region28
    $region27: #{dab_forward.6} parent=5 // pred_region
      // Predicated region
      $region29: #{dab_forward.6} parent=27 // pred_check
        %p166 = pneg %p43
      $region30: #{dab_forward.6} parent=27 // pred_check_branch
        %168 = sbr.rel (%p166) target = $region32
      $region31: #{dab_forward.6} parent=27 // pred_region
        %p169 = scmp.lt.s32.totalorder %s18, 1
        %s170 = scalar_select %p169, %s18, 1
        %s171 = smul.addr %s170, 8
        %s172 = smul.addr %s171, 8
        %s173 = scalar_lea.vmem %s0, %s172
      $region32: #{dab_forward.6} parent=27 // pred_fallthru
        _
    $region28: #{dab_forward.6} parent=5 // pred_fallthru
      _
    %p174 = scmp.le.s32.totalorder 1, %s11
    %p175 = scmp.lt.s32.totalorder %s11, 3
    %p176 = pnand %p174, %p175
    %p177 = pneg %p176
    // Predicated region
    $region33: #{dab_forward.6} parent=5 // pred_check
      _
    $region34: #{dab_forward.6} parent=5 // pred_check_branch
      %179 = sbr.rel (%p176) target = $region36
    $region35: #{dab_forward.6} parent=5 // pred_region
      %s180 = ssub.s32 %s11, 1
      %p181 = scmp.lt.s32.totalorder %s20, 1
      %s182 = scalar_select %p181, %s20, 1
      %s183 = smul.addr %s182, 8
      %s184 = smul.addr %s183, 8
      %s185 = scalar_lea.vmem %s0, %s184
      %p186 = pneg %p49
      %p187 = pneg %p46
      %p188 = pneg %p70
      %p189 = pneg %p67
      %p190 = pneg %p91
      %p191 = pneg %p88
      %p192 = pneg %p112
      %p193 = pneg %p109
      %p194 = pneg %p138
      %p195 = pneg %p135
      %p196 = scmp.lt.s32.totalorder %s20, 1
      %s197 = scalar_select %p196, %s20, 1
      %s198 = smul.addr %s197, 8
      %s199 = smul.addr %s198, 8
      %s200 = scalar_lea.vmem %s4, %s199
      %p201 = scmp.lt.s32.totalorder %s20, 1
      %s202 = scalar_select %p201, %s20, 1
      %s203 = smul.addr %s202, 8
      %s204 = smul.addr %s203, 8
      %s205 = scalar_lea.vmem %s0, %s204
      %p206 = scmp.lt.s32.totalorder %s20, 1
      %s207 = scalar_select %p206, %s20, 1
      %s208 = smul.addr %s207, 8
      %s209 = smul.addr %s208, 8
      %s210 = scalar_lea.vmem %s4, %s209
      %p212 = scmp.eq.s32.totalorder %s21, 0
      // Predicated region
      $region37: #{dab_forward.6} parent=35 // pred_check
        %p213 = pneg %p212
      $region38: #{dab_forward.6} parent=35 // pred_check_branch
        %215 = sbr.rel (%p213) target = $region40
      $region39: #{dab_forward.6} parent=35 // pred_region
        %v216 = vld [vmem:[%s205] sm:$0xff]
        %v217 = vld [vmem:[%s205 + $0x8] sm:$0xff]
        %v218 = vld [vmem:[%s205 + $0x10] sm:$0xff]
        %v219 = vld [vmem:[%s205 + $0x18] sm:$0xff]
        %v220 = vld [vmem:[%s205 + $0x20] sm:$0xff]
        %v221 = vld [vmem:[%s205 + $0x28] sm:$0xff]
        %v222 = vld [vmem:[%s205 + $0x30] sm:$0xff]
        %v223 = vld [vmem:[%s205 + $0x38] sm:$0xff]
        %v224 = vpack.c.bf16 %v217, %v216
        %v225 = vpack.c.bf16 %v219, %v218
        %v226 = vpack.c.bf16 %v221, %v220
        %v227 = vpack.c.bf16 %v223, %v222
        %v228 = vld [vmem:[%s1] sm:$0xf]
        %v229 = vld [vmem:[%s1 + $0x4] sm:$0xf]
        %v230 = vld [vmem:[%s1 + $0x8] sm:$0xf]
        %v231 = vld [vmem:[%s1 + $0xc] sm:$0xf]
        %v232 = vld [vmem:[%s2] sm:$0x1]
        %v234 = vperm.slane %v232, 0
        %v240 = vunpack.c.l.b16 %v228
        %v241 = vunpack.c.l.b16 %v229
        %v242 = vunpack.c.l.b16 %v230
        %v243 = vunpack.c.l.b16 %v231
        %v244 = vpack.c.b16 %v241, %v240
        %v245 = vpack.c.b16 %v243, %v242
        %vm248 = vcmask 261120
        %v250 = vsel %vm248, %v224, 0
        %v253 = vsel %vm248, %v225, 0
        %v256 = vsel %vm248, %v226, 0
        %v259 = vsel %vm248, %v227, 0
        %261 = vmatpush.bf16.msra.mxu0 0
        %262 = vmatpush.bf16.msra.mxu0 0
        %263 = vmatpush.bf16.msra.mxu0 0
        %264 = vmatpush.bf16.msra.mxu0 0
        %265 = vmatpush.bf16.msra.mxu0 0
        %266 = vmatpush.bf16.msra.mxu0 0
        %267 = vmatpush.bf16.msra.mxu0 %v245
        %268 = vmatpush.bf16.msra.mxu0 %v244
        %269 = vmatmul.bf16.gmra.mxu0 %v250
        %v270 = vpop.f32.mrf.mxu0
        %v271 = vadd.f32 %v234, %v270
        %v272 = vpop.f32.mrf.mxu0
        %v273 = vadd.f32 %v234, %v272
        %274 = vmatmul.bf16.gmra.mxu0 %v253
        %v275 = vpop.f32.mrf.mxu0
        %v276 = vadd.f32 %v234, %v275
        %v277 = vpop.f32.mrf.mxu0
        %v278 = vadd.f32 %v234, %v277
        %279 = vmatmul.bf16.gmra.mxu0 %v256
        %v280 = vpop.f32.mrf.mxu0
        %v281 = vadd.f32 %v234, %v280
        %v282 = vpop.f32.mrf.mxu0
        %v283 = vadd.f32 %v234, %v282
        %284 = vmatmul.bf16.gmra.mxu0 %v259
        %v285 = vpop.f32.mrf.mxu0
        %v286 = vadd.f32 %v234, %v285
        %v287 = vpop.f32.mrf.mxu0
        %v288 = vadd.f32 %v234, %v287
        %289 = vdwg.mxu0
        %vm290 = vcmask 15360
        %291 = vst.msk [vmem:[#allocation2] sm:$0xff] %vm290, %v271
        %292 = vst.msk [vmem:[#allocation2 + $0x8] sm:$0xff] %vm290, %v273
        %293 = vst.msk [vmem:[#allocation2 + $0x10] sm:$0xff] %vm290, %v276
        %294 = vst.msk [vmem:[#allocation2 + $0x18] sm:$0xff] %vm290, %v278
        %295 = vst.msk [vmem:[#allocation2 + $0x20] sm:$0xff] %vm290, %v281
        %296 = vst.msk [vmem:[#allocation2 + $0x28] sm:$0xff] %vm290, %v283
        %297 = vst.msk [vmem:[#allocation2 + $0x30] sm:$0xff] %vm290, %v286
        %298 = vst.msk [vmem:[#allocation2 + $0x38] sm:$0xff] %vm290, %v288
        %307 = vrot.lane.b32.xlu0 %v271, 126
        %v308 = vpop.permute.xlu0 %307
        %309 = vrot.lane.b32.xlu0 %v273, 126
        %v310 = vpop.permute.xlu0 %309
        %311 = vrot.lane.b32.xlu0 %v276, 126
        %v312 = vpop.permute.xlu0 %311
        %313 = vrot.lane.b32.xlu0 %v278, 126
        %v314 = vpop.permute.xlu0 %313
        %315 = vrot.lane.b32.xlu0 %v281, 126
        %v316 = vpop.permute.xlu0 %315
        %317 = vrot.lane.b32.xlu0 %v283, 126
        %v318 = vpop.permute.xlu0 %317
        %319 = vrot.lane.b32.xlu0 %v286, 126
        %v320 = vpop.permute.xlu0 %319
        %321 = vrot.lane.b32.xlu0 %v288, 126
        %v322 = vpop.permute.xlu0 %321
        %331 = vst.msk [vmem:[#allocation3] sm:$0xff] %vm290, %v308
        %332 = vst.msk [vmem:[#allocation3 + $0x8] sm:$0xff] %vm290, %v310
        %333 = vst.msk [vmem:[#allocation3 + $0x10] sm:$0xff] %vm290, %v312
        %334 = vst.msk [vmem:[#allocation3 + $0x18] sm:$0xff] %vm290, %v314
        %335 = vst.msk [vmem:[#allocation3 + $0x20] sm:$0xff] %vm290, %v316
        %336 = vst.msk [vmem:[#allocation3 + $0x28] sm:$0xff] %vm290, %v318
        %337 = vst.msk [vmem:[#allocation3 + $0x30] sm:$0xff] %vm290, %v320
        %338 = vst.msk [vmem:[#allocation3 + $0x38] sm:$0xff] %vm290, %v322
        %339 = vrot.lane.b32.xlu0 %v271, 124
        %v340 = vpop.permute.xlu0 %339
        %341 = vrot.lane.b32.xlu0 %v273, 124
        %v342 = vpop.permute.xlu0 %341
        %343 = vrot.lane.b32.xlu0 %v276, 124
        %v344 = vpop.permute.xlu0 %343
        %345 = vrot.lane.b32.xlu0 %v278, 124
        %v346 = vpop.permute.xlu0 %345
        %347 = vrot.lane.b32.xlu0 %v281, 124
        %v348 = vpop.permute.xlu0 %347
        %349 = vrot.lane.b32.xlu0 %v283, 124
        %v350 = vpop.permute.xlu0 %349
        %351 = vrot.lane.b32.xlu0 %v286, 124
        %v352 = vpop.permute.xlu0 %351
        %353 = vrot.lane.b32.xlu0 %v288, 124
        %v354 = vpop.permute.xlu0 %353
        %363 = vst.msk [vmem:[#allocation4] sm:$0xff] %vm248, %v340
        %364 = vst.msk [vmem:[#allocation4 + $0x8] sm:$0xff] %vm248, %v342
        %365 = vst.msk [vmem:[#allocation4 + $0x10] sm:$0xff] %vm248, %v344
        %366 = vst.msk [vmem:[#allocation4 + $0x18] sm:$0xff] %vm248, %v346
        %367 = vst.msk [vmem:[#allocation4 + $0x20] sm:$0xff] %vm248, %v348
        %368 = vst.msk [vmem:[#allocation4 + $0x28] sm:$0xff] %vm248, %v350
        %369 = vst.msk [vmem:[#allocation4 + $0x30] sm:$0xff] %vm248, %v352
        %370 = vst.msk [vmem:[#allocation4 + $0x38] sm:$0xff] %vm248, %v354
        %vm371 = vcmask 7168
        %372 = vst.msk [vmem:[#allocation5] sm:$0xff] %vm371, -inf
        %373 = vst.msk [vmem:[#allocation5 + $0x8] sm:$0xff] %vm371, -inf
        %374 = vst.msk [vmem:[#allocation5 + $0x10] sm:$0xff] %vm371, -inf
        %375 = vst.msk [vmem:[#allocation5 + $0x18] sm:$0xff] %vm371, -inf
        %376 = vst.msk [vmem:[#allocation5 + $0x20] sm:$0xff] %vm371, -inf
        %377 = vst.msk [vmem:[#allocation5 + $0x28] sm:$0xff] %vm371, -inf
        %378 = vst.msk [vmem:[#allocation5 + $0x30] sm:$0xff] %vm371, -inf
        %379 = vst.msk [vmem:[#allocation5 + $0x38] sm:$0xff] %vm371, -inf
        %380 = vst.msk [vmem:[#allocation6] sm:$0xff] %vm371, 0.0
        %381 = vst.msk [vmem:[#allocation6 + $0x8] sm:$0xff] %vm371, 0.0
        %382 = vst.msk [vmem:[#allocation6 + $0x10] sm:$0xff] %vm371, 0.0
        %383 = vst.msk [vmem:[#allocation6 + $0x18] sm:$0xff] %vm371, 0.0
        %384 = vst.msk [vmem:[#allocation6 + $0x20] sm:$0xff] %vm371, 0.0
        %385 = vst.msk [vmem:[#allocation6 + $0x28] sm:$0xff] %vm371, 0.0
        %386 = vst.msk [vmem:[#allocation6 + $0x30] sm:$0xff] %vm371, 0.0
        %387 = vst.msk [vmem:[#allocation6 + $0x38] sm:$0xff] %vm371, 0.0
        %388 = vst.msk [vmem:[#allocation7] sm:$0xff] %vm248, 0.0
        %389 = vst.msk [vmem:[#allocation7 + $0x8] sm:$0xff] %vm248, 0.0
        %390 = vst.msk [vmem:[#allocation7 + $0x10] sm:$0xff] %vm248, 0.0
        %391 = vst.msk [vmem:[#allocation7 + $0x18] sm:$0xff] %vm248, 0.0
        %392 = vst.msk [vmem:[#allocation7 + $0x20] sm:$0xff] %vm248, 0.0
        %393 = vst.msk [vmem:[#allocation7 + $0x28] sm:$0xff] %vm248, 0.0
        %394 = vst.msk [vmem:[#allocation7 + $0x30] sm:$0xff] %vm248, 0.0
        %395 = vst.msk [vmem:[#allocation7 + $0x38] sm:$0xff] %vm248, 0.0
      $region40: #{dab_forward.6} parent=35 // pred_fallthru
        _
      %v396 = vld [vmem:[#allocation2] sm:$0xff]
      %v397 = vld [vmem:[#allocation2 + $0x8] sm:$0xff]
      %v398 = vld [vmem:[#allocation2 + $0x10] sm:$0xff]
      %v399 = vld [vmem:[#allocation2 + $0x18] sm:$0xff]
      %v400 = vld [vmem:[#allocation2 + $0x20] sm:$0xff]
      %v401 = vld [vmem:[#allocation2 + $0x28] sm:$0xff]
      %v402 = vld [vmem:[#allocation2 + $0x30] sm:$0xff]
      %v403 = vld [vmem:[#allocation2 + $0x38] sm:$0xff]
      %v404 = vpack.c.bf16 %v397, %v396
      %v405 = vpack.c.bf16 %v399, %v398
      %v406 = vpack.c.bf16 %v401, %v400
      %v407 = vpack.c.bf16 %v403, %v402
      %s408 = smul.u32 %s21, 64
      %s409 = scalar_lea.vmem [#allocation3], %s408
      %v410 = vld [vmem:[%s409] sm:$0xff]
      %v411 = vld [vmem:[%s409 + $0x8] sm:$0xff]
      %v412 = vld [vmem:[%s409 + $0x10] sm:$0xff]
      %v413 = vld [vmem:[%s409 + $0x18] sm:$0xff]
      %v414 = vld [vmem:[%s409 + $0x20] sm:$0xff]
      %v415 = vld [vmem:[%s409 + $0x28] sm:$0xff]
      %v416 = vld [vmem:[%s409 + $0x30] sm:$0xff]
      %v417 = vld [vmem:[%s409 + $0x38] sm:$0xff]
      %v418 = vpack.c.bf16 %v411, %v410
      %v419 = vpack.c.bf16 %v413, %v412
      %v420 = vpack.c.bf16 %v415, %v414
      %v421 = vpack.c.bf16 %v417, %v416
      %s422 = scalar_lea.vmem [#allocation4], %s408
      %v423 = vld [vmem:[%s422] sm:$0xff]
      %v424 = vld [vmem:[%s422 + $0x8] sm:$0xff]
      %v425 = vld [vmem:[%s422 + $0x10] sm:$0xff]
      %v426 = vld [vmem:[%s422 + $0x18] sm:$0xff]
      %v427 = vld [vmem:[%s422 + $0x20] sm:$0xff]
      %v428 = vld [vmem:[%s422 + $0x28] sm:$0xff]
      %v429 = vld [vmem:[%s422 + $0x30] sm:$0xff]
      %v430 = vld [vmem:[%s422 + $0x38] sm:$0xff]
      %v431 = vpack.c.bf16 %v424, %v423
      %v432 = vpack.c.bf16 %v426, %v425
      %v433 = vpack.c.bf16 %v428, %v427
      %v434 = vpack.c.bf16 %v430, %v429
      %vm435 = vcmask 15360
      %v437 = vsel %vm435, %v404, 0
      %v440 = vsel %vm435, %v405, 0
      %v443 = vsel %vm435, %v406, 0
      %v446 = vsel %vm435, %v407, 0
      %v449 = vsel %vm435, %v418, 0
      %v452 = vsel %vm435, %v419, 0
      %v455 = vsel %vm435, %v420, 0
      %v458 = vsel %vm435, %v421, 0
      %460 = vmatpush.bf16.xpose.msra.mxu0 0
      %461 = vmatpush.bf16.xpose.msra.mxu0 0
      %462 = vmatpush.bf16.xpose.msra.mxu0 0
      %463 = vmatpush.bf16.xpose.msra.mxu0 0
      %464 = vmatpush.bf16.xpose.msra.mxu0 %v458
      %465 = vmatpush.bf16.xpose.msra.mxu0 %v455
      %466 = vmatpush.bf16.xpose.msra.mxu0 %v452
      %467 = vmatpush.bf16.xpose.msra.mxu0 %v449
      %468 = vmatmul.bf16.gmra.mxu0 %v437
      %v469 = vpop.f32.mrf.mxu0
      %v470 = vadd.f32 0.0, %v469
      %v471 = vpop.f32.mrf.mxu0
      %v472 = vadd.f32 0.0, %v471
      %473 = vmatmul.bf16.gmra.mxu0 %v440
      %v474 = vpop.f32.mrf.mxu0
      %v475 = vadd.f32 0.0, %v474
      %v476 = vpop.f32.mrf.mxu0
      %v477 = vadd.f32 0.0, %v476
      %478 = vmatmul.bf16.gmra.mxu0 %v443
      %v479 = vpop.f32.mrf.mxu0
      %v480 = vadd.f32 0.0, %v479
      %v481 = vpop.f32.mrf.mxu0
      %v482 = vadd.f32 0.0, %v481
      %483 = vmatmul.bf16.gmra.mxu0 %v446
      %v484 = vpop.f32.mrf.mxu0
      %v485 = vadd.f32 0.0, %v484
      %v486 = vpop.f32.mrf.mxu0
      %v487 = vadd.f32 0.0, %v486
      %488 = vdwg.mxu0
      %v489 = vld [vmem:[#allocation5] sm:$0xff]
      %v490 = vld [vmem:[#allocation5 + $0x8] sm:$0xff]
      %v491 = vld [vmem:[#allocation5 + $0x10] sm:$0xff]
      %v492 = vld [vmem:[#allocation5 + $0x18] sm:$0xff]
      %v493 = vld [vmem:[#allocation5 + $0x20] sm:$0xff]
      %v494 = vld [vmem:[#allocation5 + $0x28] sm:$0xff]
      %v495 = vld [vmem:[#allocation5 + $0x30] sm:$0xff]
      %v496 = vld [vmem:[#allocation5 + $0x38] sm:$0xff]
      %vm497 = vcmask 523264
      %v498 = vsel %vm497, %v470, -inf
      %499 = vmax.xlane.f32.xlu0 %v498
      %v500 = vpop.xlane.xlu0 %499
      %v501 = vsel %vm497, %v472, -inf
      %502 = vmax.xlane.f32.xlu0 %v501
      %v503 = vpop.xlane.xlu0 %502
      %v504 = vsel %vm497, %v475, -inf
      %505 = vmax.xlane.f32.xlu0 %v504
      %v506 = vpop.xlane.xlu0 %505
      %v507 = vsel %vm497, %v477, -inf
      %508 = vmax.xlane.f32.xlu0 %v507
      %v509 = vpop.xlane.xlu0 %508
      %v510 = vsel %vm497, %v480, -inf
      %511 = vmax.xlane.f32.xlu0 %v510
      %v512 = vpop.xlane.xlu0 %511
      %v513 = vsel %vm497, %v482, -inf
      %514 = vmax.xlane.f32.xlu0 %v513
      %v515 = vpop.xlane.xlu0 %514
      %v516 = vsel %vm497, %v485, -inf
      %517 = vmax.xlane.f32.xlu0 %v516
      %v518 = vpop.xlane.xlu0 %517
      %v519 = vsel %vm497, %v487, -inf
      %520 = vmax.xlane.f32.xlu0 %v519
      %v521 = vpop.xlane.xlu0 %520
      %v522 = vmax.f32 %v489, %v500
      %v523 = vmax.f32 %v490, %v503
      %v524 = vmax.f32 %v491, %v506
      %v525 = vmax.f32 %v492, %v509
      %v526 = vmax.f32 %v493, %v512
      %v527 = vmax.f32 %v494, %v515
      %v528 = vmax.f32 %v495, %v518
      %v529 = vmax.f32 %v496, %v521
      %v530 = vsub.f32 %v489, %v522
      %v531 = vsub.f32 %v490, %v523
      %v532 = vsub.f32 %v491, %v524
      %v533 = vsub.f32 %v492, %v525
      %v534 = vsub.f32 %v493, %v526
      %v535 = vsub.f32 %v494, %v527
      %v536 = vsub.f32 %v495, %v528
      %v537 = vsub.f32 %v496, %v529
      %v538 = vmul.f32 %v530, 1.442695
      %v539 = vpow.pop %v538
      %v540 = vmul.f32 %v531, 1.442695
      %v541 = vpow.pop %v540
      %v542 = vmul.f32 %v532, 1.442695
      %v543 = vpow.pop %v542
      %v544 = vmul.f32 %v533, 1.442695
      %v545 = vpow.pop %v544
      %v546 = vmul.f32 %v534, 1.442695
      %v547 = vpow.pop %v546
      %v548 = vmul.f32 %v535, 1.442695
      %v549 = vpow.pop %v548
      %v550 = vmul.f32 %v536, 1.442695
      %v551 = vpow.pop %v550
      %v552 = vmul.f32 %v537, 1.442695
      %v553 = vpow.pop %v552
      %555 = vset.pattern.permute.xlu0 0
      %556 = vperm.xlu0 %555, %v522
      %v557 = vpop.permute.xlu0 %556
      %560 = vset.pattern.permute.xlu0 0
      %561 = vperm.xlu0 %560, %v523
      %v562 = vpop.permute.xlu0 %561
      %565 = vset.pattern.permute.xlu0 0
      %566 = vperm.xlu0 %565, %v524
      %v567 = vpop.permute.xlu0 %566
      %570 = vset.pattern.permute.xlu0 0
      %571 = vperm.xlu0 %570, %v525
      %v572 = vpop.permute.xlu0 %571
      %575 = vset.pattern.permute.xlu0 0
      %576 = vperm.xlu0 %575, %v526
      %v577 = vpop.permute.xlu0 %576
      %580 = vset.pattern.permute.xlu0 0
      %581 = vperm.xlu0 %580, %v527
      %v582 = vpop.permute.xlu0 %581
      %585 = vset.pattern.permute.xlu0 0
      %586 = vperm.xlu0 %585, %v528
      %v587 = vpop.permute.xlu0 %586
      %590 = vset.pattern.permute.xlu0 0
      %591 = vperm.xlu0 %590, %v529
      %v592 = vpop.permute.xlu0 %591
      %v594 = vsub.f32 %v470, %v557
      %v595 = vsub.f32 %v472, %v562
      %v596 = vsub.f32 %v475, %v567
      %v597 = vsub.f32 %v477, %v572
      %v598 = vsub.f32 %v480, %v577
      %v599 = vsub.f32 %v482, %v582
      %v600 = vsub.f32 %v485, %v587
      %v601 = vsub.f32 %v487, %v592
      %v602 = vmul.f32 %v594, 1.442695
      %v603 = vpow.pop %v602
      %v604 = vmul.f32 %v595, 1.442695
      %v605 = vpow.pop %v604
      %v606 = vmul.f32 %v596, 1.442695
      %v607 = vpow.pop %v606
      %v608 = vmul.f32 %v597, 1.442695
      %v609 = vpow.pop %v608
      %v610 = vmul.f32 %v598, 1.442695
      %v611 = vpow.pop %v610
      %v612 = vmul.f32 %v599, 1.442695
      %v613 = vpow.pop %v612
      %v614 = vmul.f32 %v600, 1.442695
      %v615 = vpow.pop %v614
      %v616 = vmul.f32 %v601, 1.442695
      %v617 = vpow.pop %v616
      %v618 = vld [vmem:[#allocation6] sm:$0xff]
      %v619 = vld [vmem:[#allocation6 + $0x8] sm:$0xff]
      %v620 = vld [vmem:[#allocation6 + $0x10] sm:$0xff]
      %v621 = vld [vmem:[#allocation6 + $0x18] sm:$0xff]
      %v622 = vld [vmem:[#allocation6 + $0x20] sm:$0xff]
      %v623 = vld [vmem:[#allocation6 + $0x28] sm:$0xff]
      %v624 = vld [vmem:[#allocation6 + $0x30] sm:$0xff]
      %v625 = vld [vmem:[#allocation6 + $0x38] sm:$0xff]
      %v626 = vmul.f32 %v539, %v618
      %v627 = vmul.f32 %v541, %v619
      %v628 = vmul.f32 %v543, %v620
      %v629 = vmul.f32 %v545, %v621
      %v630 = vmul.f32 %v547, %v622
      %v631 = vmul.f32 %v549, %v623
      %v632 = vmul.f32 %v551, %v624
      %v633 = vmul.f32 %v553, %v625
      %v634 = vsel %vm497, %v603, 0.0
      %635 = vadd.xlane.f32.xlu0 %v634
      %v636 = vpop.xlane.xlu0 %635
      %v637 = vsel %vm497, %v605, 0.0
      %638 = vadd.xlane.f32.xlu0 %v637
      %v639 = vpop.xlane.xlu0 %638
      %v640 = vsel %vm497, %v607, 0.0
      %641 = vadd.xlane.f32.xlu0 %v640
      %v642 = vpop.xlane.xlu0 %641
      %v643 = vsel %vm497, %v609, 0.0
      %644 = vadd.xlane.f32.xlu0 %v643
      %v645 = vpop.xlane.xlu0 %644
      %v646 = vsel %vm497, %v611, 0.0
      %647 = vadd.xlane.f32.xlu0 %v646
      %v648 = vpop.xlane.xlu0 %647
      %v649 = vsel %vm497, %v613, 0.0
      %650 = vadd.xlane.f32.xlu0 %v649
      %v651 = vpop.xlane.xlu0 %650
      %v652 = vsel %vm497, %v615, 0.0
      %653 = vadd.xlane.f32.xlu0 %v652
      %v654 = vpop.xlane.xlu0 %653
      %v655 = vsel %vm497, %v617, 0.0
      %656 = vadd.xlane.f32.xlu0 %v655
      %v657 = vpop.xlane.xlu0 %656
      %v658 = vadd.f32 %v626, %v636
      %v659 = vadd.f32 %v627, %v639
      %v660 = vadd.f32 %v628, %v642
      %v661 = vadd.f32 %v629, %v645
      %v662 = vadd.f32 %v630, %v648
      %v663 = vadd.f32 %v631, %v651
      %v664 = vadd.f32 %v632, %v654
      %v665 = vadd.f32 %v633, %v657
      %vm666 = vcmask 7168
      %667 = vst.msk [vmem:[#allocation6] sm:$0xff] %vm666, %v658
      %668 = vst.msk [vmem:[#allocation6 + $0x8] sm:$0xff] %vm666, %v659
      %669 = vst.msk [vmem:[#allocation6 + $0x10] sm:$0xff] %vm666, %v660
      %670 = vst.msk [vmem:[#allocation6 + $0x18] sm:$0xff] %vm666, %v661
      %671 = vst.msk [vmem:[#allocation6 + $0x20] sm:$0xff] %vm666, %v662
      %672 = vst.msk [vmem:[#allocation6 + $0x28] sm:$0xff] %vm666, %v663
      %673 = vst.msk [vmem:[#allocation6 + $0x30] sm:$0xff] %vm666, %v664
      %674 = vst.msk [vmem:[#allocation6 + $0x38] sm:$0xff] %vm666, %v665
      %v675 = vld [vmem:[#allocation7] sm:$0xff]
      %v676 = vld [vmem:[#allocation7 + $0x8] sm:$0xff]
      %v677 = vld [vmem:[#allocation7 + $0x10] sm:$0xff]
      %v678 = vld [vmem:[#allocation7 + $0x18] sm:$0xff]
      %v679 = vld [vmem:[#allocation7 + $0x20] sm:$0xff]
      %v680 = vld [vmem:[#allocation7 + $0x28] sm:$0xff]
      %v681 = vld [vmem:[#allocation7 + $0x30] sm:$0xff]
      %v682 = vld [vmem:[#allocation7 + $0x38] sm:$0xff]
      %684 = vset.pattern.permute.xlu0 0
      %685 = vperm.xlu0 %684, %v539
      %v686 = vpop.permute.xlu0 %685
      %689 = vset.pattern.permute.xlu0 0
      %690 = vperm.xlu0 %689, %v541
      %v691 = vpop.permute.xlu0 %690
      %694 = vset.pattern.permute.xlu0 0
      %695 = vperm.xlu0 %694, %v543
      %v696 = vpop.permute.xlu0 %695
      %699 = vset.pattern.permute.xlu0 0
      %700 = vperm.xlu0 %699, %v545
      %v701 = vpop.permute.xlu0 %700
      %704 = vset.pattern.permute.xlu0 0
      %705 = vperm.xlu0 %704, %v547
      %v706 = vpop.permute.xlu0 %705
      %709 = vset.pattern.permute.xlu0 0
      %710 = vperm.xlu0 %709, %v549
      %v711 = vpop.permute.xlu0 %710
      %714 = vset.pattern.permute.xlu0 0
      %715 = vperm.xlu0 %714, %v551
      %v716 = vpop.permute.xlu0 %715
      %719 = vset.pattern.permute.xlu0 0
      %720 = vperm.xlu0 %719, %v553
      %v721 = vpop.permute.xlu0 %720
      %v723 = vmul.f32 %v686, %v675
      %v724 = vmul.f32 %v691, %v676
      %v725 = vmul.f32 %v696, %v677
      %v726 = vmul.f32 %v701, %v678
      %v727 = vmul.f32 %v706, %v679
      %v728 = vmul.f32 %v711, %v680
      %v729 = vmul.f32 %v716, %v681
      %v730 = vmul.f32 %v721, %v682
      %v731 = vpack.c.bf16 %v605, %v603
      %v732 = vpack.c.bf16 %v609, %v607
      %v733 = vpack.c.bf16 %v613, %v611
      %v734 = vpack.c.bf16 %v617, %v615
      %v736 = vsel %vm497, %v731, 0
      %v739 = vsel %vm497, %v732, 0
      %v742 = vsel %vm497, %v733, 0
      %v745 = vsel %vm497, %v734, 0
      %747 = vmatpush.bf16.msra.mxu0 0
      %748 = vmatpush.bf16.msra.mxu0 0
      %749 = vmatpush.bf16.msra.mxu0 0
      %750 = vmatpush.bf16.msra.mxu0 0
      %751 = vmatpush.bf16.msra.mxu0 %v434
      %752 = vmatpush.bf16.msra.mxu0 %v433
      %753 = vmatpush.bf16.msra.mxu0 %v432
      %754 = vmatpush.bf16.msra.mxu0 %v431
      %755 = vmatmul.bf16.gmra.mxu0 %v736
      %v756 = vpop.f32.mrf.mxu0
      %v757 = vadd.f32 0.0, %v756
      %v758 = vpop.f32.mrf.mxu0
      %v759 = vadd.f32 0.0, %v758
      %760 = vmatmul.bf16.gmra.mxu0 %v739
      %v761 = vpop.f32.mrf.mxu0
      %v762 = vadd.f32 0.0, %v761
      %v763 = vpop.f32.mrf.mxu0
      %v764 = vadd.f32 0.0, %v763
      %765 = vmatmul.bf16.gmra.mxu0 %v742
      %v766 = vpop.f32.mrf.mxu0
      %v767 = vadd.f32 0.0, %v766
      %v768 = vpop.f32.mrf.mxu0
      %v769 = vadd.f32 0.0, %v768
      %770 = vmatmul.bf16.gmra.mxu0 %v745
      %v771 = vpop.f32.mrf.mxu0
      %v772 = vadd.f32 0.0, %v771
      %v773 = vpop.f32.mrf.mxu0
      %v774 = vadd.f32 0.0, %v773
      %775 = vdwg.mxu0
      %v776 = vadd.f32 %v723, %v757
      %v777 = vadd.f32 %v724, %v759
      %v778 = vadd.f32 %v725, %v762
      %v779 = vadd.f32 %v726, %v764
      %v780 = vadd.f32 %v727, %v767
      %v781 = vadd.f32 %v728, %v769
      %v782 = vadd.f32 %v729, %v772
      %v783 = vadd.f32 %v730, %v774
      %vm784 = vcmask 261120
      %785 = vst.msk [vmem:[#allocation7] sm:$0xff] %vm784, %v776
      %786 = vst.msk [vmem:[#allocation7 + $0x8] sm:$0xff] %vm784, %v777
      %787 = vst.msk [vmem:[#allocation7 + $0x10] sm:$0xff] %vm784, %v778
      %788 = vst.msk [vmem:[#allocation7 + $0x18] sm:$0xff] %vm784, %v779
      %789 = vst.msk [vmem:[#allocation7 + $0x20] sm:$0xff] %vm784, %v780
      %790 = vst.msk [vmem:[#allocation7 + $0x28] sm:$0xff] %vm784, %v781
      %791 = vst.msk [vmem:[#allocation7 + $0x30] sm:$0xff] %vm784, %v782
      %792 = vst.msk [vmem:[#allocation7 + $0x38] sm:$0xff] %vm784, %v783
      %793 = vst.msk [vmem:[#allocation5] sm:$0xff] %vm666, %v522
      %794 = vst.msk [vmem:[#allocation5 + $0x8] sm:$0xff] %vm666, %v523
      %795 = vst.msk [vmem:[#allocation5 + $0x10] sm:$0xff] %vm666, %v524
      %796 = vst.msk [vmem:[#allocation5 + $0x18] sm:$0xff] %vm666, %v525
      %797 = vst.msk [vmem:[#allocation5 + $0x20] sm:$0xff] %vm666, %v526
      %798 = vst.msk [vmem:[#allocation5 + $0x28] sm:$0xff] %vm666, %v527
      %799 = vst.msk [vmem:[#allocation5 + $0x30] sm:$0xff] %vm666, %v528
      %800 = vst.msk [vmem:[#allocation5 + $0x38] sm:$0xff] %vm666, %v529
      // Predicated region
      $region41: #{dab_forward.6} parent=35 // pred_check
        %p801 = pneg %p212
      $region42: #{dab_forward.6} parent=35 // pred_check_branch
        %803 = sbr.rel (%p801) target = $region44
      $region43: #{dab_forward.6} parent=35 // pred_region
        %v804 = vld [vmem:[#allocation7] sm:$0xff]
        %v805 = vld [vmem:[#allocation7 + $0x8] sm:$0xff]
        %v806 = vld [vmem:[#allocation7 + $0x10] sm:$0xff]
        %v807 = vld [vmem:[#allocation7 + $0x18] sm:$0xff]
        %v808 = vld [vmem:[#allocation7 + $0x20] sm:$0xff]
        %v809 = vld [vmem:[#allocation7 + $0x28] sm:$0xff]
        %v810 = vld [vmem:[#allocation7 + $0x30] sm:$0xff]
        %v811 = vld [vmem:[#allocation7 + $0x38] sm:$0xff]
        %v812 = vld [vmem:[#allocation6] sm:$0xff]
        %v813 = vld [vmem:[#allocation6 + $0x8] sm:$0xff]
        %v814 = vld [vmem:[#allocation6 + $0x10] sm:$0xff]
        %v815 = vld [vmem:[#allocation6 + $0x18] sm:$0xff]
        %v816 = vld [vmem:[#allocation6 + $0x20] sm:$0xff]
        %v817 = vld [vmem:[#allocation6 + $0x28] sm:$0xff]
        %v818 = vld [vmem:[#allocation6 + $0x30] sm:$0xff]
        %v819 = vld [vmem:[#allocation6 + $0x38] sm:$0xff]
        %v820 = vrcp.pop %v812
        %v821 = vrcp.pop %v813
        %v822 = vrcp.pop %v814
        %v823 = vrcp.pop %v815
        %v824 = vrcp.pop %v816
        %v825 = vrcp.pop %v817
        %v826 = vrcp.pop %v818
        %v827 = vrcp.pop %v819
        %829 = vset.pattern.permute.xlu0 0
        %830 = vperm.xlu0 %829, %v820
        %v831 = vpop.permute.xlu0 %830
        %834 = vset.pattern.permute.xlu0 0
        %835 = vperm.xlu0 %834, %v821
        %v836 = vpop.permute.xlu0 %835
        %839 = vset.pattern.permute.xlu0 0
        %840 = vperm.xlu0 %839, %v822
        %v841 = vpop.permute.xlu0 %840
        %844 = vset.pattern.permute.xlu0 0
        %845 = vperm.xlu0 %844, %v823
        %v846 = vpop.permute.xlu0 %845
        %849 = vset.pattern.permute.xlu0 0
        %850 = vperm.xlu0 %849, %v824
        %v851 = vpop.permute.xlu0 %850
        %854 = vset.pattern.permute.xlu0 0
        %855 = vperm.xlu0 %854, %v825
        %v856 = vpop.permute.xlu0 %855
        %859 = vset.pattern.permute.xlu0 0
        %860 = vperm.xlu0 %859, %v826
        %v861 = vpop.permute.xlu0 %860
        %864 = vset.pattern.permute.xlu0 0
        %865 = vperm.xlu0 %864, %v827
        %v866 = vpop.permute.xlu0 %865
        %v868 = vmul.f32 %v804, %v831
        %v869 = vmul.f32 %v805, %v836
        %v870 = vmul.f32 %v806, %v841
        %v871 = vmul.f32 %v807, %v846
        %v872 = vmul.f32 %v808, %v851
        %v873 = vmul.f32 %v809, %v856
        %v874 = vmul.f32 %v810, %v861
        %v875 = vmul.f32 %v811, %v866
        %s876 = sld [smem:[#allocation8]]
        %v877 = vstv %s876
        %v878 = vmul.f32 %v877, %v868
        %v879 = vmul.f32 %v877, %v869
        %v880 = vmul.f32 %v877, %v870
        %v881 = vmul.f32 %v877, %v871
        %v882 = vmul.f32 %v877, %v872
        %v883 = vmul.f32 %v877, %v873
        %v884 = vmul.f32 %v877, %v874
        %v885 = vmul.f32 %v877, %v875
        %v886 = vld [vmem:[%s205] sm:$0xff]
        %v887 = vld [vmem:[%s205 + $0x8] sm:$0xff]
        %v888 = vld [vmem:[%s205 + $0x10] sm:$0xff]
        %v889 = vld [vmem:[%s205 + $0x18] sm:$0xff]
        %v890 = vld [vmem:[%s205 + $0x20] sm:$0xff]
        %v891 = vld [vmem:[%s205 + $0x28] sm:$0xff]
        %v892 = vld [vmem:[%s205 + $0x30] sm:$0xff]
        %v893 = vld [vmem:[%s205 + $0x38] sm:$0xff]
        %v894 = vadd.f32 %v878, %v886
        %v895 = vadd.f32 %v879, %v887
        %v896 = vadd.f32 %v880, %v888
        %v897 = vadd.f32 %v881, %v889
        %v898 = vadd.f32 %v882, %v890
        %v899 = vadd.f32 %v883, %v891
        %v900 = vadd.f32 %v884, %v892
        %v901 = vadd.f32 %v885, %v893
        %902 = vst.msk [vmem:[%s210] sm:$0xff] %vm784, %v894
        %903 = vst.msk [vmem:[%s210 + $0x8] sm:$0xff] %vm784, %v895
        %904 = vst.msk [vmem:[%s210 + $0x10] sm:$0xff] %vm784, %v896
        %905 = vst.msk [vmem:[%s210 + $0x18] sm:$0xff] %vm784, %v897
        %906 = vst.msk [vmem:[%s210 + $0x20] sm:$0xff] %vm784, %v898
        %907 = vst.msk [vmem:[%s210 + $0x28] sm:$0xff] %vm784, %v899
        %908 = vst.msk [vmem:[%s210 + $0x30] sm:$0xff] %vm784, %v900
        %909 = vst.msk [vmem:[%s210 + $0x38] sm:$0xff] %vm784, %v901
      $region44: #{dab_forward.6} parent=35 // pred_fallthru
        _
      %p910 = scmp.lt.s32.totalorder %s20, 1
      %s911 = scalar_select %p910, %s20, 1
      %s912 = smul.addr %s911, 8
      %s913 = smul.addr %s912, 8
      %s914 = scalar_lea.vmem %s4, %s913
      // Predicated region
      $region45: #{dab_forward.6} parent=35 // pred_check
        %p915 = pneg %p135
      $region46: #{dab_forward.6} parent=35 // pred_check_branch
        %917 = sbr.rel (%p915) target = $region48
      $region47: #{dab_forward.6} parent=35 // pred_region
        _
      $region48: #{dab_forward.6} parent=35 // pred_fallthru
        _
    $region36: #{dab_forward.6} parent=5 // pred_fallthru
      _
    %p918 = scmp.le.s32.totalorder 2, %s11
    // Predicated region
    $region49: #{dab_forward.6} parent=5 // pred_check
      %p919 = pneg %p918
    $region50: #{dab_forward.6} parent=5 // pred_check_branch
      %921 = sbr.rel (%p919) target = $region52
    $region51: #{dab_forward.6} parent=5 // pred_region
      %s922 = ssub.s32 %s11, 2
      // Predicated region
      $region53: #{dab_forward.6} parent=51 // pred_check
        %p923 = pneg %p141
      $region54: #{dab_forward.6} parent=51 // pred_check_branch
        %925 = sbr.rel (%p923) target = $region56
      $region55: #{dab_forward.6} parent=51 // pred_region
        %p926 = scmp.lt.s32.totalorder %s22, 1
        %s927 = scalar_select %p926, %s22, 1
        %s928 = smul.addr %s927, 8
        %s929 = smul.addr %s928, 8
        %s930 = scalar_lea.vmem %s4, %s929
      $region56: #{dab_forward.6} parent=51 // pred_fallthru
        _
    $region52: #{dab_forward.6} parent=5 // pred_fallthru
      _
  $region6: #{dab_forward.6} parent=0 // loop_footer
    %s15 = sadd.s32 1, %s11
  $region7: #{dab_forward.6} parent=0 // loop_footer_branch
    %10 = sbr.rel target = $region3
  $region8: #{dab_forward.6} parent=0 // loop_exit
    _

// kernel: dab_forward.7
$region0: #{dab_forward.7}
  #allocation0 [shape = 'u32[]', space=smem, size = 0x4, offset = 0x4, fixed_abs, tag = 'smem constant byte address 0x4 - core index']
  #allocation1 [shape = 'u32[72,128]{1,0:T(1,128)}', space=vmem, size = 0x9000, scoped, tag = 'internal scratch']
  #allocation2 [shape = 'f32[10,10,32]{2,1,0:T(8,128)}', space=vmem, size = 0x14000, scoped, tag = 'scratch operand']
  %s0 = inlined_call_operand.vmem [shape: f32[2,8,8,32], index: 0, kind: input, shape index: {}]
  %s1 = inlined_call_operand.vmem [shape: bf16[288,32], index: 1, kind: input, shape index: {}]
  %s2 = inlined_call_operand.vmem [shape: bf16[288,32], index: 2, kind: input, shape index: {}]
  %s3 = inlined_call_operand.vmem [shape: f32[2,8,8,32], index: 3, kind: output, shape index: {}]
  %s4 = sld [smem:[#allocation0]]
  $region45: #{dab_forward.7} parent=0
    _
  %s6 = ssub.s32 1, %s4
  %s7 = scalar_select 0, %s6, %s4
  loop: start=0, step=1, limit=4
  $region2: #{dab_forward.7} parent=0 // loop_pre_header
    _
  $region3: #{dab_forward.7} parent=0 // loop_header
    %s9 = sphi 0, %s13
    %p10 = scmp.ge.s32.totalorder %s9, 4
    %s19 = sphi 0, %s21
    %s22 = sphi 0, %s19
    %s23 = sphi 0, %s22
    %s39 = sphi 0, %s23
    %s43 = sphi 0, %s43
    %s45 = sphi 0, %s43
    %s46 = sphi 0, %s45
    %s60 = sphi 0, %s46
    %s64 = sphi 0, %s64
    %s66 = sphi 0, %s64
    %s67 = sphi 0, %s66
    %s81 = sphi 0, %s67
    %s87 = sphi 0, %s89
    %s90 = sphi 0, %s87
    %s91 = sphi 0, %s90
    %s107 = sphi 0, %s91
  $region4: #{dab_forward.7} parent=0 // loop_header_branch
    %12 = sbr.rel (%p10) target = $region8
  $region5: #{dab_forward.7} parent=0 // loop_body
    %s14 = ssub.s32 %s9, 1
    %s15 = ssub.s32 %s9, 2
    %s16 = sadd.s32 %s9, 1
    %s17 = ssub.s32 %s9, %s16
    %p18 = scmp.eq.s32.totalorder %s17, 0
    %s20 = sadd.s32 %s19, 1
    %s21 = scalar_select %p18, %s19, %s20
    %p24 = pneg %p18
    %p25 = scmp.eq.s32.totalorder %s9, 1
    %p26 = por %p24, %p25
    %p27 = scmp.ne.s32.totalorder %s19, %s22
    %p28 = scmp.eq.s32.totalorder %s9, 0
    %p29 = por %p27, %p28
    %p30 = scmp.ne.s32.totalorder %s19, %s22
    %p31 = scmp.eq.s32.totalorder %s14, 1
    %p32 = por %p30, %p31
    %p33 = scmp.ne.s32.totalorder %s22, %s23
    %p34 = scmp.eq.s32.totalorder %s14, 0
    %p35 = por %p33, %p34
    %p36 = scmp.ne.s32.totalorder %s22, %s23
    %p37 = scmp.eq.s32.totalorder %s15, 1
    %p38 = por %p36, %p37
    %p40 = scmp.ne.s32.totalorder %s23, %s39
    %p41 = scmp.eq.s32.totalorder %s15, 0
    %p42 = por %p40, %p41
    %s44 = sadd.s32 %s43, 1
    %p47 = scmp.eq.s32.totalorder %s9, 1
    %p48 = scmp.ne.s32.totalorder %s43, %s45
    %p49 = scmp.eq.s32.totalorder %s9, 0
    %p50 = por %p48, %p49
    %p51 = scmp.ne.s32.totalorder %s43, %s45
    %p52 = scmp.eq.s32.totalorder %s14, 1
    %p53 = por %p51, %p52
    %p54 = scmp.ne.s32.totalorder %s45, %s46
    %p55 = scmp.eq.s32.totalorder %s14, 0
    %p56 = por %p54, %p55
    %p57 = scmp.ne.s32.totalorder %s45, %s46
    %p58 = scmp.eq.s32.totalorder %s15, 1
    %p59 = por %p57, %p58
    %p61 = scmp.ne.s32.totalorder %s46, %s60
    %p62 = scmp.eq.s32.totalorder %s15, 0
    %p63 = por %p61, %p62
    %s65 = sadd.s32 %s64, 1
    %p68 = scmp.eq.s32.totalorder %s9, 1
    %p69 = scmp.ne.s32.totalorder %s64, %s66
    %p70 = scmp.eq.s32.totalorder %s9, 0
    %p71 = por %p69, %p70
    %p72 = scmp.ne.s32.totalorder %s64, %s66
    %p73 = scmp.eq.s32.totalorder %s14, 1
    %p74 = por %p72, %p73
    %p75 = scmp.ne.s32.totalorder %s66, %s67
    %p76 = scmp.eq.s32.totalorder %s14, 0
    %p77 = por %p75, %p76
    %p78 = scmp.ne.s32.totalorder %s66, %s67
    %p79 = scmp.eq.s32.totalorder %s15, 1
    %p80 = por %p78, %p79
    %p82 = scmp.ne.s32.totalorder %s67, %s81
    %p83 = scmp.eq.s32.totalorder %s15, 0
    %p84 = por %p82, %p83
    %s85 = ssub.s32 %s9, %s16
    %p86 = scmp.eq.s32.totalorder %s85, 0
    %s88 = sadd.s32 %s87, 1
    %s89 = scalar_select %p86, %s87, %s88
    %p92 = pneg %p86
    %p93 = scmp.eq.s32.totalorder %s9, 1
    %p94 = por %p92, %p93
    %p95 = scmp.ne.s32.totalorder %s87, %s90
    %p96 = scmp.eq.s32.totalorder %s9, 0
    %p97 = por %p95, %p96
    %p98 = scmp.ne.s32.totalorder %s87, %s90
    %p99 = scmp.eq.s32.totalorder %s14, 1
    %p100 = por %p98, %p99
    %p101 = scmp.ne.s32.totalorder %s90, %s91
    %p102 = scmp.eq.s32.totalorder %s14, 0
    %p103 = por %p101, %p102
    %p104 = scmp.ne.s32.totalorder %s90, %s91
    %p105 = scmp.eq.s32.totalorder %s15, 1
    %p106 = por %p104, %p105
    %p108 = scmp.ne.s32.totalorder %s91, %s107
    %p109 = scmp.eq.s32.totalorder %s15, 0
    %p110 = por %p108, %p109
    %p111 = scmp.le.s32.totalorder 1, %s9
    %p112 = scmp.lt.s32.totalorder %s9, 3
    %p113 = pnand %p111, %p112
    %p114 = pneg %p113
    // Predicated region
    $region9: #{dab_forward.7} parent=5 // pred_check
      _
    $region10: #{dab_forward.7} parent=5 // pred_check_branch
      %116 = sbr.rel (%p113) target = $region12
    $region11: #{dab_forward.7} parent=5 // pred_region
      %s117 = ssub.s32 %s9, 1
      // Predicated region
      $region13: #{dab_forward.7} parent=11 // pred_check
        %p118 = pneg %p56
      $region14: #{dab_forward.7} parent=11 // pred_check_branch
        %120 = sbr.rel (%p118) target = $region16
      $region15: #{dab_forward.7} parent=11 // pred_region
        _
      $region16: #{dab_forward.7} parent=11 // pred_fallthru
        _
      // Predicated region
      $region17: #{dab_forward.7} parent=11 // pred_check
        %p121 = pneg %p77
      $region18: #{dab_forward.7} parent=11 // pred_check_branch
        %123 = sbr.rel (%p121) target = $region20
      $region19: #{dab_forward.7} parent=11 // pred_region
        _
      $region20: #{dab_forward.7} parent=11 // pred_fallthru
        _
    $region12: #{dab_forward.7} parent=5 // pred_fallthru
      _
    %p124 = scmp.lt.s32.totalorder %s9, 2
    // Predicated region
    $region21: #{dab_forward.7} parent=5 // pred_check
      %p125 = pneg %p124
    $region22: #{dab_forward.7} parent=5 // pred_check_branch
      %127 = sbr.rel (%p125) target = $region24
    $region23: #{dab_forward.7} parent=5 // pred_region
      // Predicated region
      $region25: #{dab_forward.7} parent=23 // pred_check
        %p128 = pneg %p29
      $region26: #{dab_forward.7} parent=23 // pred_check_branch
        %130 = sbr.rel (%p128) target = $region28
      $region27: #{dab_forward.7} parent=23 // pred_region
        %p131 = scmp.lt.s32.totalorder %s9, 1
        %s132 = scalar_select %p131, %s9, 1
        %s133 = smul.addr %s132, 8
        %s134 = smul.addr %s133, 8
        %s135 = scalar_lea.vmem %s0, %s134
      $region28: #{dab_forward.7} parent=23 // pred_fallthru
        _
    $region24: #{dab_forward.7} parent=5 // pred_fallthru
      _
    %p136 = scmp.le.s32.totalorder 1, %s9
    %p137 = scmp.lt.s32.totalorder %s9, 3
    %p138 = pnand %p136, %p137
    %p139 = pneg %p138
    // Predicated region
    $region29: #{dab_forward.7} parent=5 // pred_check
      _
    $region30: #{dab_forward.7} parent=5 // pred_check_branch
      %141 = sbr.rel (%p138) target = $region32
    $region31: #{dab_forward.7} parent=5 // pred_region
      %s142 = ssub.s32 %s9, 1
      %p143 = scmp.lt.s32.totalorder %s14, 1
      %s144 = scalar_select %p143, %s14, 1
      %s145 = smul.addr %s144, 8
      %s146 = smul.addr %s145, 8
      %s147 = scalar_lea.vmem %s0, %s146
      %p148 = pneg %p35
      %p149 = pneg %p32
      %p150 = pneg %p56
      %p151 = pneg %p53
      %p152 = pneg %p77
      %p153 = pneg %p74
      %p154 = pneg %p103
      %p155 = pneg %p100
      %p156 = scmp.lt.s32.totalorder %s14, 1
      %s157 = scalar_select %p156, %s14, 1
      %s158 = smul.addr %s157, 8
      %s159 = smul.addr %s158, 8
      %s160 = scalar_lea.vmem %s3, %s159
      %p161 = scmp.lt.s32.totalorder %s14, 1
      %s162 = scalar_select %p161, %s14, 1
      %s163 = smul.addr %s162, 8
      %s164 = smul.addr %s163, 8
      %s165 = scalar_lea.vmem %s0, %s164
      %p166 = scmp.lt.s32.totalorder %s14, 1
      %s167 = scalar_select %p166, %s14, 1
      %s168 = smul.addr %s167, 8
      %s169 = smul.addr %s168, 8
      %s170 = scalar_lea.vmem %s3, %s169
      %vm172 = vcmask 261120
      %173 = vst.msk [vmem:[#allocation2] sm:$0xff] %vm172, 0.0
      %vm174 = vcmask 254976
      %175 = vst.msk [vmem:[#allocation2 + $0x8] sm:$0x3] %vm174, 0.0
      %176 = vst.msk [vmem:[#allocation2 + $0x10] sm:$0xff] %vm172, 0.0
      %177 = vst.msk [vmem:[#allocation2 + $0x18] sm:$0x3] %vm174, 0.0
      %178 = vst.msk [vmem:[#allocation2 + $0x20] sm:$0xff] %vm172, 0.0
      %179 = vst.msk [vmem:[#allocation2 + $0x28] sm:$0x3] %vm174, 0.0
      %180 = vst.msk [vmem:[#allocation2 + $0x30] sm:$0xff] %vm172, 0.0
      %181 = vst.msk [vmem:[#allocation2 + $0x38] sm:$0x3] %vm174, 0.0
      %182 = vst.msk [vmem:[#allocation2 + $0x40] sm:$0xff] %vm172, 0.0
      %183 = vst.msk [vmem:[#allocation2 + $0x48] sm:$0x3] %vm174, 0.0
      %184 = vst.msk [vmem:[#allocation2 + $0x50] sm:$0xff] %vm172, 0.0
      %185 = vst.msk [vmem:[#allocation2 + $0x58] sm:$0x3] %vm174, 0.0
      %186 = vst.msk [vmem:[#allocation2 + $0x60] sm:$0xff] %vm172, 0.0
      %187 = vst.msk [vmem:[#allocation2 + $0x68] sm:$0x3] %vm174, 0.0
      %188 = vst.msk [vmem:[#allocation2 + $0x70] sm:$0xff] %vm172, 0.0
      %189 = vst.msk [vmem:[#allocation2 + $0x78] sm:$0x3] %vm174, 0.0
      %190 = vst.msk [vmem:[#allocation2 + $0x80] sm:$0xff] %vm172, 0.0
      %191 = vst.msk [vmem:[#allocation2 + $0x88] sm:$0x3] %vm174, 0.0
      %192 = vst.msk [vmem:[#allocation2 + $0x90] sm:$0xff] %vm172, 0.0
      %193 = vst.msk [vmem:[#allocation2 + $0x98] sm:$0x3] %vm174, 0.0
      %v194 = vld [vmem:[%s165] sm:$0xff]
      %v195 = vld [vmem:[%s165 + $0x8] sm:$0xff]
      %v196 = vld [vmem:[%s165 + $0x10] sm:$0xff]
      %v197 = vld [vmem:[%s165 + $0x18] sm:$0xff]
      %v198 = vld [vmem:[%s165 + $0x20] sm:$0xff]
      %v199 = vld [vmem:[%s165 + $0x28] sm:$0xff]
      %v200 = vld [vmem:[%s165 + $0x30] sm:$0xff]
      %v201 = vld [vmem:[%s165 + $0x38] sm:$0xff]
      %s202 = scalar_lea.vmem [#allocation2], 16
      %203 = vst.msk [vmem:[%s202 + $0x1] sm:$0xff] %vm172, %v194
      %204 = vst.msk [vmem:[%s202 + $0x11] sm:$0xff] %vm172, %v195
      %205 = vst.msk [vmem:[%s202 + $0x21] sm:$0xff] %vm172, %v196
      %206 = vst.msk [vmem:[%s202 + $0x31] sm:$0xff] %vm172, %v197
      %207 = vst.msk [vmem:[%s202 + $0x41] sm:$0xff] %vm172, %v198
      %208 = vst.msk [vmem:[%s202 + $0x51] sm:$0xff] %vm172, %v199
      %209 = vst.msk [vmem:[%s202 + $0x61] sm:$0xff] %vm172, %v200
      %210 = vst.msk [vmem:[%s202 + $0x71] sm:$0xff] %vm172, %v201
      %v211 = vld [vmem:[#allocation2] sm:$0xff]
      %v212 = vld [vmem:[#allocation2 + $0x8] sm:$0x3]
      %v213 = vld [vmem:[#allocation2 + $0x10] sm:$0xff]
      %v214 = vld [vmem:[#allocation2 + $0x18] sm:$0x3]
      %v215 = vld [vmem:[#allocation2 + $0x20] sm:$0xff]
      %v216 = vld [vmem:[#allocation2 + $0x28] sm:$0x3]
      %v217 = vld [vmem:[#allocation2 + $0x30] sm:$0xff]
      %v218 = vld [vmem:[#allocation2 + $0x38] sm:$0x3]
      %v219 = vld [vmem:[#allocation2 + $0x40] sm:$0xff]
      %v220 = vld [vmem:[#allocation2 + $0x48] sm:$0x3]
      %v221 = vld [vmem:[#allocation2 + $0x50] sm:$0xff]
      %v222 = vld [vmem:[#allocation2 + $0x58] sm:$0x3]
      %v223 = vld [vmem:[#allocation2 + $0x60] sm:$0xff]
      %v224 = vld [vmem:[#allocation2 + $0x68] sm:$0x3]
      %v225 = vld [vmem:[#allocation2 + $0x70] sm:$0xff]
      %v226 = vld [vmem:[#allocation2 + $0x78] sm:$0x3]
      %v227 = vld [vmem:[#allocation2 + $0x80] sm:$0xff]
      %v228 = vld [vmem:[#allocation2 + $0x88] sm:$0x3]
      %v229 = vld [vmem:[#allocation2 + $0x90] sm:$0xff]
      %v230 = vld [vmem:[#allocation2 + $0x98] sm:$0x3]
      %v231 = vld [vmem:[%s1] sm:$0xf]
      %v232 = vld [vmem:[%s1 + $0x4] sm:$0xf]
      %v233 = vld [vmem:[%s1 + $0x8] sm:$0xf]
      %v234 = vld [vmem:[%s1 + $0xc] sm:$0xf]
      %v235 = vld [vmem:[%s1 + $0x10] sm:$0xf]
      %v236 = vld [vmem:[%s1 + $0x14] sm:$0xf]
      %v237 = vld [vmem:[%s1 + $0x18] sm:$0xf]
      %v238 = vld [vmem:[%s1 + $0x1c] sm:$0xf]
      %v239 = vld [vmem:[%s1 + $0x20] sm:$0xf]
      %v240 = vld [vmem:[%s1 + $0x24] sm:$0xf]
      %v241 = vld [vmem:[%s1 + $0x28] sm:$0xf]
      %v242 = vld [vmem:[%s1 + $0x2c] sm:$0xf]
      %v243 = vld [vmem:[%s1 + $0x30] sm:$0xf]
      %v244 = vld [vmem:[%s1 + $0x34] sm:$0xf]
      %v245 = vld [vmem:[%s1 + $0x38] sm:$0xf]
      %v246 = vld [vmem:[%s1 + $0x3c] sm:$0xf]
      %v247 = vld [vmem:[%s1 + $0x40] sm:$0xf]
      %v248 = vld [vmem:[%s1 + $0x44] sm:$0xf]
      %v249 = vld [vmem:[%s1 + $0x48] sm:$0xf]
      %v250 = vld [vmem:[%s1 + $0x4c] sm:$0xf]
      %v251 = vld [vmem:[%s1 + $0x50] sm:$0xf]
      %v252 = vld [vmem:[%s1 + $0x54] sm:$0xf]
      %v253 = vld [vmem:[%s1 + $0x58] sm:$0xf]
      %v254 = vld [vmem:[%s1 + $0x5c] sm:$0xf]
      %v255 = vld [vmem:[%s1 + $0x60] sm:$0xf]
      %v256 = vld [vmem:[%s1 + $0x64] sm:$0xf]
      %v257 = vld [vmem:[%s1 + $0x68] sm:$0xf]
      %v258 = vld [vmem:[%s1 + $0x6c] sm:$0xf]
      %v259 = vld [vmem:[%s1 + $0x70] sm:$0xf]
      %v260 = vld [vmem:[%s1 + $0x74] sm:$0xf]
      %v261 = vld [vmem:[%s1 + $0x78] sm:$0xf]
      %v262 = vld [vmem:[%s1 + $0x7c] sm:$0xf]
      %v263 = vld [vmem:[%s1 + $0x80] sm:$0xf]
      %v264 = vld [vmem:[%s1 + $0x84] sm:$0xf]
      %v265 = vld [vmem:[%s1 + $0x88] sm:$0xf]
      %v266 = vld [vmem:[%s1 + $0x8c] sm:$0xf]
      %vm283 = vcmask 1046528
      %v284 = vrot.slane %v211, 1
      %v285 = vrot.slane %v212, 1
      %v286 = vsel %vm283, %v284, %v285
      %v287 = vrot.slane %v213, 1
      %v288 = vrot.slane %v214, 1
      %v289 = vsel %vm283, %v287, %v288
      %v290 = vrot.slane %v215, 1
      %v291 = vrot.slane %v216, 1
      %v292 = vsel %vm283, %v290, %v291
      %v293 = vrot.slane %v217, 1
      %v294 = vrot.slane %v218, 1
      %v295 = vsel %vm283, %v293, %v294
      %v296 = vrot.slane %v219, 1
      %v297 = vrot.slane %v220, 1
      %v298 = vsel %vm283, %v296, %v297
      %v299 = vrot.slane %v221, 1
      %v300 = vrot.slane %v222, 1
      %v301 = vsel %vm283, %v299, %v300
      %v302 = vrot.slane %v223, 1
      %v303 = vrot.slane %v224, 1
      %v304 = vsel %vm283, %v302, %v303
      %v305 = vrot.slane %v225, 1
      %v306 = vrot.slane %v226, 1
      %v307 = vsel %vm283, %v305, %v306
      %vm308 = vcmask 1045504
      %v309 = vrot.slane %v211, 2
      %v310 = vrot.slane %v212, 2
      %v311 = vsel %vm308, %v309, %v310
      %v312 = vrot.slane %v213, 2
      %v313 = vrot.slane %v214, 2
      %v314 = vsel %vm308, %v312, %v313
      %v315 = vrot.slane %v215, 2
      %v316 = vrot.slane %v216, 2
      %v317 = vsel %vm308, %v315, %v316
      %v318 = vrot.slane %v217, 2
      %v319 = vrot.slane %v218, 2
      %v320 = vsel %vm308, %v318, %v319
      %v321 = vrot.slane %v219, 2
      %v322 = vrot.slane %v220, 2
      %v323 = vsel %vm308, %v321, %v322
      %v324 = vrot.slane %v221, 2
      %v325 = vrot.slane %v222, 2
      %v326 = vsel %vm308, %v324, %v325
      %v327 = vrot.slane %v223, 2
      %v328 = vrot.slane %v224, 2
      %v329 = vsel %vm308, %v327, %v328
      %v330 = vrot.slane %v225, 2
      %v331 = vrot.slane %v226, 2
      %v332 = vsel %vm308, %v330, %v331
      %v335 = vrot.slane %v227, 1
      %v336 = vrot.slane %v228, 1
      %v337 = vsel %vm283, %v335, %v336
      %v346 = vrot.slane %v227, 2
      %v347 = vrot.slane %v228, 2
      %v348 = vsel %vm308, %v346, %v347
      %v351 = vrot.slane %v229, 1
      %v352 = vrot.slane %v230, 1
      %v353 = vsel %vm283, %v351, %v352
      %v354 = vrot.slane %v229, 2
      %v355 = vrot.slane %v230, 2
      %v356 = vsel %vm308, %v354, %v355
      %365 = vrot.lane.b32.xlu0 %v286, 32
      %v366 = vpop.permute.xlu0 %365
      %367 = vrot.lane.b32.xlu0 %v289, 32
      %v368 = vpop.permute.xlu0 %367
      %369 = vrot.lane.b32.xlu0 %v292, 32
      %v370 = vpop.permute.xlu0 %369
      %371 = vrot.lane.b32.xlu0 %v295, 32
      %v372 = vpop.permute.xlu0 %371
      %373 = vrot.lane.b32.xlu0 %v298, 32
      %v374 = vpop.permute.xlu0 %373
      %375 = vrot.lane.b32.xlu0 %v301, 32
      %v376 = vpop.permute.xlu0 %375
      %377 = vrot.lane.b32.xlu0 %v304, 32
      %v378 = vpop.permute.xlu0 %377
      %379 = vrot.lane.b32.xlu0 %v307, 32
      %v380 = vpop.permute.xlu0 %379
      %389 = vrot.lane.b32.xlu0 %v311, 64
      %v390 = vpop.permute.xlu0 %389
      %391 = vrot.lane.b32.xlu0 %v314, 64
      %v392 = vpop.permute.xlu0 %391
      %393 = vrot.lane.b32.xlu0 %v317, 64
      %v394 = vpop.permute.xlu0 %393
      %395 = vrot.lane.b32.xlu0 %v320, 64
      %v396 = vpop.permute.xlu0 %395
      %397 = vrot.lane.b32.xlu0 %v323, 64
      %v398 = vpop.permute.xlu0 %397
      %399 = vrot.lane.b32.xlu0 %v326, 64
      %v400 = vpop.permute.xlu0 %399
      %401 = vrot.lane.b32.xlu0 %v329, 64
      %v402 = vpop.permute.xlu0 %401
      %403 = vrot.lane.b32.xlu0 %v332, 64
      %v404 = vpop.permute.xlu0 %403
      %413 = vrot.lane.b32.xlu0 %v213, 96
      %v414 = vpop.permute.xlu0 %413
      %415 = vrot.lane.b32.xlu0 %v215, 96
      %v416 = vpop.permute.xlu0 %415
      %417 = vrot.lane.b32.xlu0 %v217, 96
      %v418 = vpop.permute.xlu0 %417
      %419 = vrot.lane.b32.xlu0 %v219, 96
      %v420 = vpop.permute.xlu0 %419
      %421 = vrot.lane.b32.xlu0 %v221, 96
      %v422 = vpop.permute.xlu0 %421
      %423 = vrot.lane.b32.xlu0 %v223, 96
      %v424 = vpop.permute.xlu0 %423
      %425 = vrot.lane.b32.xlu0 %v225, 96
      %v426 = vpop.permute.xlu0 %425
      %427 = vrot.lane.b32.xlu0 %v227, 96
      %v428 = vpop.permute.xlu0 %427
      %437 = vrot.lane.b32.xlu0 %v314, 32
      %v438 = vpop.permute.xlu0 %437
      %439 = vrot.lane.b32.xlu0 %v317, 32
      %v440 = vpop.permute.xlu0 %439
      %441 = vrot.lane.b32.xlu0 %v320, 32
      %v442 = vpop.permute.xlu0 %441
      %443 = vrot.lane.b32.xlu0 %v323, 32
      %v444 = vpop.permute.xlu0 %443
      %445 = vrot.lane.b32.xlu0 %v326, 32
      %v446 = vpop.permute.xlu0 %445
      %447 = vrot.lane.b32.xlu0 %v329, 32
      %v448 = vpop.permute.xlu0 %447
      %449 = vrot.lane.b32.xlu0 %v332, 32
      %v450 = vpop.permute.xlu0 %449
      %451 = vrot.lane.b32.xlu0 %v348, 32
      %v452 = vpop.permute.xlu0 %451
      %461 = vrot.lane.b32.xlu0 %v215, 64
      %v462 = vpop.permute.xlu0 %461
      %463 = vrot.lane.b32.xlu0 %v217, 64
      %v464 = vpop.permute.xlu0 %463
      %465 = vrot.lane.b32.xlu0 %v219, 64
      %v466 = vpop.permute.xlu0 %465
      %467 = vrot.lane.b32.xlu0 %v221, 64
      %v468 = vpop.permute.xlu0 %467
      %469 = vrot.lane.b32.xlu0 %v223, 64
      %v470 = vpop.permute.xlu0 %469
      %471 = vrot.lane.b32.xlu0 %v225, 64
      %v472 = vpop.permute.xlu0 %471
      %473 = vrot.lane.b32.xlu0 %v227, 64
      %v474 = vpop.permute.xlu0 %473
      %475 = vrot.lane.b32.xlu0 %v229, 64
      %v476 = vpop.permute.xlu0 %475
      %485 = vrot.lane.b32.xlu0 %v292, 96
      %v486 = vpop.permute.xlu0 %485
      %487 = vrot.lane.b32.xlu0 %v295, 96
      %v488 = vpop.permute.xlu0 %487
      %489 = vrot.lane.b32.xlu0 %v298, 96
      %v490 = vpop.permute.xlu0 %489
      %491 = vrot.lane.b32.xlu0 %v301, 96
      %v492 = vpop.permute.xlu0 %491
      %493 = vrot.lane.b32.xlu0 %v304, 96
      %v494 = vpop.permute.xlu0 %493
      %495 = vrot.lane.b32.xlu0 %v307, 96
      %v496 = vpop.permute.xlu0 %495
      %497 = vrot.lane.b32.xlu0 %v337, 96
      %v498 = vpop.permute.xlu0 %497
      %499 = vrot.lane.b32.xlu0 %v353, 96
      %v500 = vpop.permute.xlu0 %499
      %v509 = vsel %vm172, %v211, %v366
      %v510 = vsel %vm172, %v213, %v368
      %v511 = vsel %vm172, %v215, %v370
      %v512 = vsel %vm172, %v217, %v372
      %v513 = vsel %vm172, %v219, %v374
      %v514 = vsel %vm172, %v221, %v376
      %v515 = vsel %vm172, %v223, %v378
      %v516 = vsel %vm172, %v225, %v380
      %vm517 = vcmask 523264
      %v518 = vsel %vm517, %v509, %v390
      %v519 = vsel %vm517, %v510, %v392
      %v520 = vsel %vm517, %v511, %v394
      %v521 = vsel %vm517, %v512, %v396
      %v522 = vsel %vm517, %v513, %v398
      %v523 = vsel %vm517, %v514, %v400
      %v524 = vsel %vm517, %v515, %v402
      %v525 = vsel %vm517, %v516, %v404
      %vm526 = vcmask 785408
      %v527 = vsel %vm526, %v518, %v414
      %v528 = vsel %vm526, %v519, %v416
      %v529 = vsel %vm526, %v520, %v418
      %v530 = vsel %vm526, %v521, %v420
      %v531 = vsel %vm526, %v522, %v422
      %v532 = vsel %vm526, %v523, %v424
      %v533 = vsel %vm526, %v524, %v426
      %v534 = vsel %vm526, %v525, %v428
      %v535 = vsel %vm172, %v289, %v438
      %v536 = vsel %vm172, %v292, %v440
      %v537 = vsel %vm172, %v295, %v442
      %v538 = vsel %vm172, %v298, %v444
      %v539 = vsel %vm172, %v301, %v446
      %v540 = vsel %vm172, %v304, %v448
      %v541 = vsel %vm172, %v307, %v450
      %v542 = vsel %vm172, %v337, %v452
      %v543 = vsel %vm517, %v535, %v462
      %v544 = vsel %vm517, %v536, %v464
      %v545 = vsel %vm517, %v537, %v466
      %v546 = vsel %vm517, %v538, %v468
      %v547 = vsel %vm517, %v539, %v470
      %v548 = vsel %vm517, %v540, %v472
      %v549 = vsel %vm517, %v541, %v474
      %v550 = vsel %vm517, %v542, %v476
      %v551 = vsel %vm526, %v543, %v486
      %v552 = vsel %vm526, %v544, %v488
      %v553 = vsel %vm526, %v545, %v490
      %v554 = vsel %vm526, %v546, %v492
      %v555 = vsel %vm526, %v547, %v494
      %v556 = vsel %vm526, %v548, %v496
      %v557 = vsel %vm526, %v549, %v498
      %v558 = vsel %vm526, %v550, %v500
      %v559 = vpack.c.bf16 %v528, %v527
      %v560 = vpack.c.bf16 %v552, %v551
      %v561 = vpack.c.bf16 %v320, %v317
      %v562 = vpack.c.bf16 %v530, %v529
      %v563 = vpack.c.bf16 %v554, %v553
      %v564 = vpack.c.bf16 %v326, %v323
      %v565 = vpack.c.bf16 %v532, %v531
      %v566 = vpack.c.bf16 %v556, %v555
      %v567 = vpack.c.bf16 %v332, %v329
      %v568 = vpack.c.bf16 %v534, %v533
      %v569 = vpack.c.bf16 %v558, %v557
      %v570 = vpack.c.bf16 %v356, %v348
      %v607 = vunpack.c.l.b16 %v231
      %v608 = vunpack.c.l.b16 %v232
      %v609 = vunpack.c.l.b16 %v233
      %v610 = vunpack.c.l.b16 %v234
      %v611 = vunpack.c.l.b16 %v235
      %v612 = vunpack.c.l.b16 %v236
      %v613 = vunpack.c.l.b16 %v237
      %v614 = vunpack.c.l.b16 %v238
      %v615 = vunpack.c.l.b16 %v239
      %v616 = vunpack.c.l.b16 %v240
      %v617 = vunpack.c.l.b16 %v241
      %v618 = vunpack.c.l.b16 %v242
      %v619 = vunpack.c.l.b16 %v243
      %v620 = vunpack.c.l.b16 %v244
      %v621 = vunpack.c.l.b16 %v245
      %v622 = vunpack.c.l.b16 %v246
      %v623 = vunpack.c.l.b16 %v247
      %v624 = vunpack.c.l.b16 %v248
      %v625 = vunpack.c.l.b16 %v249
      %v626 = vunpack.c.l.b16 %v250
      %v627 = vunpack.c.l.b16 %v251
      %v628 = vunpack.c.l.b16 %v252
      %v629 = vunpack.c.l.b16 %v253
      %v630 = vunpack.c.l.b16 %v254
      %v631 = vunpack.c.l.b16 %v255
      %v632 = vunpack.c.l.b16 %v256
      %v633 = vunpack.c.l.b16 %v257
      %v634 = vunpack.c.l.b16 %v258
      %v635 = vunpack.c.l.b16 %v259
      %v636 = vunpack.c.l.b16 %v260
      %v637 = vunpack.c.l.b16 %v261
      %v638 = vunpack.c.l.b16 %v262
      %v639 = vunpack.c.l.b16 %v263
      %v640 = vunpack.c.l.b16 %v264
      %v641 = vunpack.c.l.b16 %v265
      %v642 = vunpack.c.l.b16 %v266
      %v643 = vpack.c.b16 %v608, %v607
      %v644 = vpack.c.b16 %v610, %v609
      %v645 = vpack.c.b16 %v612, %v611
      %v646 = vpack.c.b16 %v614, %v613
      %v647 = vpack.c.b16 %v616, %v615
      %v648 = vpack.c.b16 %v618, %v617
      %v649 = vpack.c.b16 %v620, %v619
      %v650 = vpack.c.b16 %v622, %v621
      %v651 = vpack.c.b16 %v624, %v623
      %v652 = vpack.c.b16 %v626, %v625
      %v653 = vpack.c.b16 %v628, %v627
      %v654 = vpack.c.b16 %v630, %v629
      %v655 = vpack.c.b16 %v632, %v631
      %v656 = vpack.c.b16 %v634, %v633
      %v657 = vpack.c.b16 %v636, %v635
      %v658 = vpack.c.b16 %v638, %v637
      %v659 = vpack.c.b16 %v640, %v639
      %v660 = vpack.c.b16 %v642, %v641
      %v680 = vsel %vm172, %v561, 0
      %v683 = vsel %vm172, %v564, 0
      %v686 = vsel %vm172, %v567, 0
      %v689 = vsel %vm172, %v570, 0
      %691 = vmatpush.bf16.msra.mxu0 %v650
      %692 = vmatpush.bf16.msra.mxu0 %v649
      %693 = vmatpush.bf16.msra.mxu0 %v648
      %694 = vmatpush.bf16.msra.mxu0 %v647
      %695 = vmatpush.bf16.msra.mxu0 %v646
      %696 = vmatpush.bf16.msra.mxu0 %v645
      %697 = vmatpush.bf16.msra.mxu0 %v644
      %698 = vmatpush.bf16.msra.mxu0 %v643
      %699 = vmatmul.bf16.gmra.mxu0 %v559
      %v700 = vpop.f32.mrf.mxu0
      %v701 = vadd.f32 0.0, %v700
      %v702 = vpop.f32.mrf.mxu0
      %v703 = vadd.f32 0.0, %v702
      %704 = vmatmul.bf16.gmra.mxu0 %v562
      %v705 = vpop.f32.mrf.mxu0
      %v706 = vadd.f32 0.0, %v705
      %v707 = vpop.f32.mrf.mxu0
      %v708 = vadd.f32 0.0, %v707
      %709 = vmatmul.bf16.gmra.mxu0 %v565
      %v710 = vpop.f32.mrf.mxu0
      %v711 = vadd.f32 0.0, %v710
      %v712 = vpop.f32.mrf.mxu0
      %v713 = vadd.f32 0.0, %v712
      %714 = vmatmul.bf16.gmra.mxu0 %v568
      %v715 = vpop.f32.mrf.mxu0
      %v716 = vadd.f32 0.0, %v715
      %v717 = vpop.f32.mrf.mxu0
      %v718 = vadd.f32 0.0, %v717
      %719 = vdwg.mxu0
      %720 = vmatpush.bf16.msra.mxu0 %v658
      %721 = vmatpush.bf16.msra.mxu0 %v657
      %722 = vmatpush.bf16.msra.mxu0 %v656
      %723 = vmatpush.bf16.msra.mxu0 %v655
      %724 = vmatpush.bf16.msra.mxu0 %v654
      %725 = vmatpush.bf16.msra.mxu0 %v653
      %726 = vmatpush.bf16.msra.mxu0 %v652
      %727 = vmatpush.bf16.msra.mxu0 %v651
      %728 = vmatmul.bf16.gmra.mxu0 %v560
      %v729 = vpop.f32.mrf.mxu0
      %v730 = vadd.f32 %v701, %v729
      %v731 = vpop.f32.mrf.mxu0
      %v732 = vadd.f32 %v703, %v731
      %733 = vmatmul.bf16.gmra.mxu0 %v563
      %v734 = vpop.f32.mrf.mxu0
      %v735 = vadd.f32 %v706, %v734
      %v736 = vpop.f32.mrf.mxu0
      %v737 = vadd.f32 %v708, %v736
      %738 = vmatmul.bf16.gmra.mxu0 %v566
      %v739 = vpop.f32.mrf.mxu0
      %v740 = vadd.f32 %v711, %v739
      %v741 = vpop.f32.mrf.mxu0
      %v742 = vadd.f32 %v713, %v741
      %743 = vmatmul.bf16.gmra.mxu0 %v569
      %v744 = vpop.f32.mrf.mxu0
      %v745 = vadd.f32 %v716, %v744
      %v746 = vpop.f32.mrf.mxu0
      %v747 = vadd.f32 %v718, %v746
      %748 = vdwg.mxu0
      %749 = vmatpush.bf16.msra.mxu0 0
      %750 = vmatpush.bf16.msra.mxu0 0
      %751 = vmatpush.bf16.msra.mxu0 0
      %752 = vmatpush.bf16.msra.mxu0 0
      %753 = vmatpush.bf16.msra.mxu0 0
      %754 = vmatpush.bf16.msra.mxu0 0
      %755 = vmatpush.bf16.msra.mxu0 %v660
      %756 = vmatpush.bf16.msra.mxu0 %v659
      %757 = vmatmul.bf16.gmra.mxu0 %v680
      %v758 = vpop.f32.mrf.mxu0
      %v759 = vadd.f32 %v730, %v758
      %v760 = vpop.f32.mrf.mxu0
      %v761 = vadd.f32 %v732, %v760
      %762 = vmatmul.bf16.gmra.mxu0 %v683
      %v763 = vpop.f32.mrf.mxu0
      %v764 = vadd.f32 %v735, %v763
      %v765 = vpop.f32.mrf.mxu0
      %v766 = vadd.f32 %v737, %v765
      %767 = vmatmul.bf16.gmra.mxu0 %v686
      %v768 = vpop.f32.mrf.mxu0
      %v769 = vadd.f32 %v740, %v768
      %v770 = vpop.f32.mrf.mxu0
      %v771 = vadd.f32 %v742, %v770
      %772 = vmatmul.bf16.gmra.mxu0 %v689
      %v773 = vpop.f32.mrf.mxu0
      %v774 = vadd.f32 %v745, %v773
      %v775 = vpop.f32.mrf.mxu0
      %v776 = vadd.f32 %v747, %v775
      %777 = vdwg.mxu0
      %v778 = vmax.f32 %v759, 0.0
      %v779 = vmax.f32 %v761, 0.0
      %v780 = vmax.f32 %v764, 0.0
      %v781 = vmax.f32 %v766, 0.0
      %v782 = vmax.f32 %v769, 0.0
      %v783 = vmax.f32 %v771, 0.0
      %v784 = vmax.f32 %v774, 0.0
      %v785 = vmax.f32 %v776, 0.0
      %786 = vst.msk [vmem:[%s202 + $0x1] sm:$0xff] %vm172, %v778
      %787 = vst.msk [vmem:[%s202 + $0x11] sm:$0xff] %vm172, %v779
      %788 = vst.msk [vmem:[%s202 + $0x21] sm:$0xff] %vm172, %v780
      %789 = vst.msk [vmem:[%s202 + $0x31] sm:$0xff] %vm172, %v781
      %790 = vst.msk [vmem:[%s202 + $0x41] sm:$0xff] %vm172, %v782
      %791 = vst.msk [vmem:[%s202 + $0x51] sm:$0xff] %vm172, %v783
      %792 = vst.msk [vmem:[%s202 + $0x61] sm:$0xff] %vm172, %v784
      %793 = vst.msk [vmem:[%s202 + $0x71] sm:$0xff] %vm172, %v785
      %v794 = vld [vmem:[#allocation2] sm:$0xff]
      %v795 = vld [vmem:[#allocation2 + $0x8] sm:$0x3]
      %v796 = vld [vmem:[#allocation2 + $0x10] sm:$0xff]
      %v797 = vld [vmem:[#allocation2 + $0x18] sm:$0x3]
      %v798 = vld [vmem:[#allocation2 + $0x20] sm:$0xff]
      %v799 = vld [vmem:[#allocation2 + $0x28] sm:$0x3]
      %v800 = vld [vmem:[#allocation2 + $0x30] sm:$0xff]
      %v801 = vld [vmem:[#allocation2 + $0x38] sm:$0x3]
      %v802 = vld [vmem:[#allocation2 + $0x40] sm:$0xff]
      %v803 = vld [vmem:[#allocation2 + $0x48] sm:$0x3]
      %v804 = vld [vmem:[#allocation2 + $0x50] sm:$0xff]
      %v805 = vld [vmem:[#allocation2 + $0x58] sm:$0x3]
      %v806 = vld [vmem:[#allocation2 + $0x60] sm:$0xff]
      %v807 = vld [vmem:[#allocation2 + $0x68] sm:$0x3]
      %v808 = vld [vmem:[#allocation2 + $0x70] sm:$0xff]
      %v809 = vld [vmem:[#allocation2 + $0x78] sm:$0x3]
      %v810 = vld [vmem:[#allocation2 + $0x80] sm:$0xff]
      %v811 = vld [vmem:[#allocation2 + $0x88] sm:$0x3]
      %v812 = vld [vmem:[#allocation2 + $0x90] sm:$0xff]
      %v813 = vld [vmem:[#allocation2 + $0x98] sm:$0x3]
      %v814 = vld [vmem:[%s2] sm:$0xf]
      %v815 = vld [vmem:[%s2 + $0x4] sm:$0xf]
      %v816 = vld [vmem:[%s2 + $0x8] sm:$0xf]
      %v817 = vld [vmem:[%s2 + $0xc] sm:$0xf]
      %v818 = vld [vmem:[%s2 + $0x10] sm:$0xf]
      %v819 = vld [vmem:[%s2 + $0x14] sm:$0xf]
      %v820 = vld [vmem:[%s2 + $0x18] sm:$0xf]
      %v821 = vld [vmem:[%s2 + $0x1c] sm:$0xf]
      %v822 = vld [vmem:[%s2 + $0x20] sm:$0xf]
      %v823 = vld [vmem:[%s2 + $0x24] sm:$0xf]
      %v824 = vld [vmem:[%s2 + $0x28] sm:$0xf]
      %v825 = vld [vmem:[%s2 + $0x2c] sm:$0xf]
      %v826 = vld [vmem:[%s2 + $0x30] sm:$0xf]
      %v827 = vld [vmem:[%s2 + $0x34] sm:$0xf]
      %v828 = vld [vmem:[%s2 + $0x38] sm:$0xf]
      %v829 = vld [vmem:[%s2 + $0x3c] sm:$0xf]
      %v830 = vld [vmem:[%s2 + $0x40] sm:$0xf]
      %v831 = vld [vmem:[%s2 + $0x44] sm:$0xf]
      %v832 = vld [vmem:[%s2 + $0x48] sm:$0xf]
      %v833 = vld [vmem:[%s2 + $0x4c] sm:$0xf]
      %v834 = vld [vmem:[%s2 + $0x50] sm:$0xf]
      %v835 = vld [vmem:[%s2 + $0x54] sm:$0xf]
      %v836 = vld [vmem:[%s2 + $0x58] sm:$0xf]
      %v837 = vld [vmem:[%s2 + $0x5c] sm:$0xf]
      %v838 = vld [vmem:[%s2 + $0x60] sm:$0xf]
      %v839 = vld [vmem:[%s2 + $0x64] sm:$0xf]
      %v840 = vld [vmem:[%s2 + $0x68] sm:$0xf]
      %v841 = vld [vmem:[%s2 + $0x6c] sm:$0xf]
      %v842 = vld [vmem:[%s2 + $0x70] sm:$0xf]
      %v843 = vld [vmem:[%s2 + $0x74] sm:$0xf]
      %v844 = vld [vmem:[%s2 + $0x78] sm:$0xf]
      %v845 = vld [vmem:[%s2 + $0x7c] sm:$0xf]
      %v846 = vld [vmem:[%s2 + $0x80] sm:$0xf]
      %v847 = vld [vmem:[%s2 + $0x84] sm:$0xf]
      %v848 = vld [vmem:[%s2 + $0x88] sm:$0xf]
      %v849 = vld [vmem:[%s2 + $0x8c] sm:$0xf]
      %v866 = vrot.slane %v794, 1
      %v867 = vrot.slane %v795, 1
      %v868 = vsel %vm283, %v866, %v867
      %v869 = vrot.slane %v796, 1
      %v870 = vrot.slane %v797, 1
      %v871 = vsel %vm283, %v869, %v870
      %v872 = vrot.slane %v798, 1
      %v873 = vrot.slane %v799, 1
      %v874 = vsel %vm283, %v872, %v873
      %v875 = vrot.slane %v800, 1
      %v876 = vrot.slane %v801, 1
      %v877 = vsel %vm283, %v875, %v876
      %v878 = vrot.slane %v802, 1
      %v879 = vrot.slane %v803, 1
      %v880 = vsel %vm283, %v878, %v879
      %v881 = vrot.slane %v804, 1
      %v882 = vrot.slane %v805, 1
      %v883 = vsel %vm283, %v881, %v882
      %v884 = vrot.slane %v806, 1
      %v885 = vrot.slane %v807, 1
      %v886 = vsel %vm283, %v884, %v885
      %v887 = vrot.slane %v808, 1
      %v888 = vrot.slane %v809, 1
      %v889 = vsel %vm283, %v887, %v888
      %v890 = vrot.slane %v794, 2
      %v891 = vrot.slane %v795, 2
      %v892 = vsel %vm308, %v890, %v891
      %v893 = vrot.slane %v796, 2
      %v894 = vrot.slane %v797, 2
      %v895 = vsel %vm308, %v893, %v894
      %v896 = vrot.slane %v798, 2
      %v897 = vrot.slane %v799, 2
      %v898 = vsel %vm308, %v896, %v897
      %v899 = vrot.slane %v800, 2
      %v900 = vrot.slane %v801, 2
      %v901 = vsel %vm308, %v899, %v900
      %v902 = vrot.slane %v802, 2
      %v903 = vrot.slane %v803, 2
      %v904 = vsel %vm308, %v902, %v903
      %v905 = vrot.slane %v804, 2
      %v906 = vrot.slane %v805, 2
      %v907 = vsel %vm308, %v905, %v906
      %v908 = vrot.slane %v806, 2
      %v909 = vrot.slane %v807, 2
      %v910 = vsel %vm308, %v908, %v909
      %v911 = vrot.slane %v808, 2
      %v912 = vrot.slane %v809, 2
      %v913 = vsel %vm308, %v911, %v912
      %v916 = vrot.slane %v810, 1
      %v917 = vrot.slane %v811, 1
      %v918 = vsel %vm283, %v916, %v917
      %v927 = vrot.slane %v810, 2
      %v928 = vrot.slane %v811, 2
      %v929 = vsel %vm308, %v927, %v928
      %v932 = vrot.slane %v812, 1
      %v933 = vrot.slane %v813, 1
      %v934 = vsel %vm283, %v932, %v933
      %v935 = vrot.slane %v812, 2
      %v936 = vrot.slane %v813, 2
      %v937 = vsel %vm308, %v935, %v936
      %946 = vrot.lane.b32.xlu0 %v868, 32
      %v947 = vpop.permute.xlu0 %946
      %948 = vrot.lane.b32.xlu0 %v871, 32
      %v949 = vpop.permute.xlu0 %948
      %950 = vrot.lane.b32.xlu0 %v874, 32
      %v951 = vpop.permute.xlu0 %950
      %952 = vrot.lane.b32.xlu0 %v877, 32
      %v953 = vpop.permute.xlu0 %952
      %954 = vrot.lane.b32.xlu0 %v880, 32
      %v955 = vpop.permute.xlu0 %954
      %956 = vrot.lane.b32.xlu0 %v883, 32
      %v957 = vpop.permute.xlu0 %956
      %958 = vrot.lane.b32.xlu0 %v886, 32
      %v959 = vpop.permute.xlu0 %958
      %960 = vrot.lane.b32.xlu0 %v889, 32
      %v961 = vpop.permute.xlu0 %960
      %970 = vrot.lane.b32.xlu0 %v892, 64
      %v971 = vpop.permute.xlu0 %970
      %972 = vrot.lane.b32.xlu0 %v895, 64
      %v973 = vpop.permute.xlu0 %972
      %974 = vrot.lane.b32.xlu0 %v898, 64
      %v975 = vpop.permute.xlu0 %974
      %976 = vrot.lane.b32.xlu0 %v901, 64
      %v977 = vpop.permute.xlu0 %976
      %978 = vrot.lane.b32.xlu0 %v904, 64
      %v979 = vpop.permute.xlu0 %978
      %980 = vrot.lane.b32.xlu0 %v907, 64
      %v981 = vpop.permute.xlu0 %980
      %982 = vrot.lane.b32.xlu0 %v910, 64
      %v983 = vpop.permute.xlu0 %982
      %984 = vrot.lane.b32.xlu0 %v913, 64
      %v985 = vpop.permute.xlu0 %984
      %994 = vrot.lane.b32.xlu0 %v796, 96
      %v995 = vpop.permute.xlu0 %994
      %996 = vrot.lane.b32.xlu0 %v798, 96
      %v997 = vpop.permute.xlu0 %996
      %998 = vrot.lane.b32.xlu0 %v800, 96
      %v999 = vpop.permute.xlu0 %998
      %1000 = vrot.lane.b32.xlu0 %v802, 96
      %v1001 = vpop.permute.xlu0 %1000
      %1002 = vrot.lane.b32.xlu0 %v804, 96
      %v1003 = vpop.permute.xlu0 %1002
      %1004 = vrot.lane.b32.xlu0 %v806, 96
      %v1005 = vpop.permute.xlu0 %1004
      %1006 = vrot.lane.b32.xlu0 %v808, 96
      %v1007 = vpop.permute.xlu0 %1006
      %1008 = vrot.lane.b32.xlu0 %v810, 96
      %v1009 = vpop.permute.xlu0 %1008
      %1018 = vrot.lane.b32.xlu0 %v895, 32
      %v1019 = vpop.permute.xlu0 %1018
      %1020 = vrot.lane.b32.xlu0 %v898, 32
      %v1021 = vpop.permute.xlu0 %1020
      %1022 = vrot.lane.b32.xlu0 %v901, 32
      %v1023 = vpop.permute.xlu0 %1022
      %1024 = vrot.lane.b32.xlu0 %v904, 32
      %v1025 = vpop.permute.xlu0 %1024
      %1026 = vrot.lane.b32.xlu0 %v907, 32
      %v1027 = vpop.permute.xlu0 %1026
      %1028 = vrot.lane.b32.xlu0 %v910, 32
      %v1029 = vpop.permute.xlu0 %1028
      %1030 = vrot.lane.b32.xlu0 %v913, 32
      %v1031 = vpop.permute.xlu0 %1030
      %1032 = vrot.lane.b32.xlu0 %v929, 32
      %v1033 = vpop.permute.xlu0 %1032
      %1042 = vrot.lane.b32.xlu0 %v798, 64
      %v1043 = vpop.permute.xlu0 %1042
      %1044 = vrot.lane.b32.xlu0 %v800, 64
      %v1045 = vpop.permute.xlu0 %1044
      %1046 = vrot.lane.b32.xlu0 %v802, 64
      %v1047 = vpop.permute.xlu0 %1046
      %1048 = vrot.lane.b32.xlu0 %v804, 64
      %v1049 = vpop.permute.xlu0 %1048
      %1050 = vrot.lane.b32.xlu0 %v806, 64
      %v1051 = vpop.permute.xlu0 %1050
      %1052 = vrot.lane.b32.xlu0 %v808, 64
      %v1053 = vpop.permute.xlu0 %1052
      %1054 = vrot.lane.b32.xlu0 %v810, 64
      %v1055 = vpop.permute.xlu0 %1054
      %1056 = vrot.lane.b32.xlu0 %v812, 64
      %v1057 = vpop.permute.xlu0 %1056
      %1066 = vrot.lane.b32.xlu0 %v874, 96
      %v1067 = vpop.permute.xlu0 %1066
      %1068 = vrot.lane.b32.xlu0 %v877, 96
      %v1069 = vpop.permute.xlu0 %1068
      %1070 = vrot.lane.b32.xlu0 %v880, 96
      %v1071 = vpop.permute.xlu0 %1070
      %1072 = vrot.lane.b32.xlu0 %v883, 96
      %v1073 = vpop.permute.xlu0 %1072
      %1074 = vrot.lane.b32.xlu0 %v886, 96
      %v1075 = vpop.permute.xlu0 %1074
      %1076 = vrot.lane.b32.xlu0 %v889, 96
      %v1077 = vpop.permute.xlu0 %1076
      %1078 = vrot.lane.b32.xlu0 %v918, 96
      %v1079 = vpop.permute.xlu0 %1078
      %1080 = vrot.lane.b32.xlu0 %v934, 96
      %v1081 = vpop.permute.xlu0 %1080
      %v1090 = vsel %vm172, %v794, %v947
      %v1091 = vsel %vm172, %v796, %v949
      %v1092 = vsel %vm172, %v798, %v951
      %v1093 = vsel %vm172, %v800, %v953
      %v1094 = vsel %vm172, %v802, %v955
      %v1095 = vsel %vm172, %v804, %v957
      %v1096 = vsel %vm172, %v806, %v959
      %v1097 = vsel %vm172, %v808, %v961
      %v1098 = vsel %vm517, %v1090, %v971
      %v1099 = vsel %vm517, %v1091, %v973
      %v1100 = vsel %vm517, %v1092, %v975
      %v1101 = vsel %vm517, %v1093, %v977
      %v1102 = vsel %vm517, %v1094, %v979
      %v1103 = vsel %vm517, %v1095, %v981
      %v1104 = vsel %vm517, %v1096, %v983
      %v1105 = vsel %vm517, %v1097, %v985
      %v1106 = vsel %vm526, %v1098, %v995
      %v1107 = vsel %vm526, %v1099, %v997
      %v1108 = vsel %vm526, %v1100, %v999
      %v1109 = vsel %vm526, %v1101, %v1001
      %v1110 = vsel %vm526, %v1102, %v1003
      %v1111 = vsel %vm526, %v1103, %v1005
      %v1112 = vsel %vm526, %v1104, %v1007
      %v1113 = vsel %vm526, %v1105, %v1009
      %v1114 = vsel %vm172, %v871, %v1019
      %v1115 = vsel %vm172, %v874, %v1021
      %v1116 = vsel %vm172, %v877, %v1023
      %v1117 = vsel %vm172, %v880, %v1025
      %v1118 = vsel %vm172, %v883, %v1027
      %v1119 = vsel %vm172, %v886, %v1029
      %v1120 = vsel %vm172, %v889, %v1031
      %v1121 = vsel %vm172, %v918, %v1033
      %v1122 = vsel %vm517, %v1114, %v1043
      %v1123 = vsel %vm517, %v1115, %v1045
      %v1124 = vsel %vm517, %v1116, %v1047
      %v1125 = vsel %vm517, %v1117, %v1049
      %v1126 = vsel %vm517, %v1118, %v1051
      %v1127 = vsel %vm517, %v1119, %v1053
      %v1128 = vsel %vm517, %v1120, %v1055
      %v1129 = vsel %vm517, %v1121, %v1057
      %v1130 = vsel %vm526, %v1122, %v1067
      %v1131 = vsel %vm526, %v1123, %v1069
      %v1132 = vsel %vm526, %v1124, %v1071
      %v1133 = vsel %vm526, %v1125, %v1073
      %v1134 = vsel %vm526, %v1126, %v1075
      %v1135 = vsel %vm526, %v1127, %v1077
      %v1136 = vsel %vm526, %v1128, %v1079
      %v1137 = vsel %vm526, %v1129, %v1081
      %v1138 = vpack.c.bf16 %v1107, %v1106
      %v1139 = vpack.c.bf16 %v1131, %v1130
      %v1140 = vpack.c.bf16 %v901, %v898
      %v1141 = vpack.c.bf16 %v1109, %v1108
      %v1142 = vpack.c.bf16 %v1133, %v1132
      %v1143 = vpack.c.bf16 %v907, %v904
      %v1144 = vpack.c.bf16 %v1111, %v1110
      %v1145 = vpack.c.bf16 %v1135, %v1134
      %v1146 = vpack.c.bf16 %v913, %v910
      %v1147 = vpack.c.bf16 %v1113, %v1112
      %v1148 = vpack.c.bf16 %v1137, %v1136
      %v1149 = vpack.c.bf16 %v937, %v929
      %v1186 = vunpack.c.l.b16 %v814
      %v1187 = vunpack.c.l.b16 %v815
      %v1188 = vunpack.c.l.b16 %v816
      %v1189 = vunpack.c.l.b16 %v817
      %v1190 = vunpack.c.l.b16 %v818
      %v1191 = vunpack.c.l.b16 %v819
      %v1192 = vunpack.c.l.b16 %v820
      %v1193 = vunpack.c.l.b16 %v821
      %v1194 = vunpack.c.l.b16 %v822
      %v1195 = vunpack.c.l.b16 %v823
      %v1196 = vunpack.c.l.b16 %v824
      %v1197 = vunpack.c.l.b16 %v825
      %v1198 = vunpack.c.l.b16 %v826
      %v1199 = vunpack.c.l.b16 %v827
      %v1200 = vunpack.c.l.b16 %v828
      %v1201 = vunpack.c.l.b16 %v829
      %v1202 = vunpack.c.l.b16 %v830
      %v1203 = vunpack.c.l.b16 %v831
      %v1204 = vunpack.c.l.b16 %v832
      %v1205 = vunpack.c.l.b16 %v833
      %v1206 = vunpack.c.l.b16 %v834
      %v1207 = vunpack.c.l.b16 %v835
      %v1208 = vunpack.c.l.b16 %v836
      %v1209 = vunpack.c.l.b16 %v837
      %v1210 = vunpack.c.l.b16 %v838
      %v1211 = vunpack.c.l.b16 %v839
      %v1212 = vunpack.c.l.b16 %v840
      %v1213 = vunpack.c.l.b16 %v841
      %v1214 = vunpack.c.l.b16 %v842
      %v1215 = vunpack.c.l.b16 %v843
      %v1216 = vunpack.c.l.b16 %v844
      %v1217 = vunpack.c.l.b16 %v845
      %v1218 = vunpack.c.l.b16 %v846
      %v1219 = vunpack.c.l.b16 %v847
      %v1220 = vunpack.c.l.b16 %v848
      %v1221 = vunpack.c.l.b16 %v849
      %v1222 = vpack.c.b16 %v1187, %v1186
      %v1223 = vpack.c.b16 %v1189, %v1188
      %v1224 = vpack.c.b16 %v1191, %v1190
      %v1225 = vpack.c.b16 %v1193, %v1192
      %v1226 = vpack.c.b16 %v1195, %v1194
      %v1227 = vpack.c.b16 %v1197, %v1196
      %v1228 = vpack.c.b16 %v1199, %v1198
      %v1229 = vpack.c.b16 %v1201, %v1200
      %v1230 = vpack.c.b16 %v1203, %v1202
      %v1231 = vpack.c.b16 %v1205, %v1204
      %v1232 = vpack.c.b16 %v1207, %v1206
      %v1233 = vpack.c.b16 %v1209, %v1208
      %v1234 = vpack.c.b16 %v1211, %v1210
      %v1235 = vpack.c.b16 %v1213, %v1212
      %v1236 = vpack.c.b16 %v1215, %v1214
      %v1237 = vpack.c.b16 %v1217, %v1216
      %v1238 = vpack.c.b16 %v1219, %v1218
      %v1239 = vpack.c.b16 %v1221, %v1220
      %v1259 = vsel %vm172, %v1140, 0
      %v1262 = vsel %vm172, %v1143, 0
      %v1265 = vsel %vm172, %v1146, 0
      %v1268 = vsel %vm172, %v1149, 0
      %1270 = vmatpush.bf16.msra.mxu0 %v1229
      %1271 = vmatpush.bf16.msra.mxu0 %v1228
      %1272 = vmatpush.bf16.msra.mxu0 %v1227
      %1273 = vmatpush.bf16.msra.mxu0 %v1226
      %1274 = vmatpush.bf16.msra.mxu0 %v1225
      %1275 = vmatpush.bf16.msra.mxu0 %v1224
      %1276 = vmatpush.bf16.msra.mxu0 %v1223
      %1277 = vmatpush.bf16.msra.mxu0 %v1222
      %1278 = vmatmul.bf16.gmra.mxu0 %v1138
      %v1279 = vpop.f32.mrf.mxu0
      %v1280 = vadd.f32 0.0, %v1279
      %v1281 = vpop.f32.mrf.mxu0
      %v1282 = vadd.f32 0.0, %v1281
      %1283 = vmatmul.bf16.gmra.mxu0 %v1141
      %v1284 = vpop.f32.mrf.mxu0
      %v1285 = vadd.f32 0.0, %v1284
      %v1286 = vpop.f32.mrf.mxu0
      %v1287 = vadd.f32 0.0, %v1286
      %1288 = vmatmul.bf16.gmra.mxu0 %v1144
      %v1289 = vpop.f32.mrf.mxu0
      %v1290 = vadd.f32 0.0, %v1289
      %v1291 = vpop.f32.mrf.mxu0
      %v1292 = vadd.f32 0.0, %v1291
      %1293 = vmatmul.bf16.gmra.mxu0 %v1147
      %v1294 = vpop.f32.mrf.mxu0
      %v1295 = vadd.f32 0.0, %v1294
      %v1296 = vpop.f32.mrf.mxu0
      %v1297 = vadd.f32 0.0, %v1296
      %1298 = vdwg.mxu0
      %1299 = vmatpush.bf16.msra.mxu0 %v1237
      %1300 = vmatpush.bf16.msra.mxu0 %v1236
      %1301 = vmatpush.bf16.msra.mxu0 %v1235
      %1302 = vmatpush.bf16.msra.mxu0 %v1234
      %1303 = vmatpush.bf16.msra.mxu0 %v1233
      %1304 = vmatpush.bf16.msra.mxu0 %v1232
      %1305 = vmatpush.bf16.msra.mxu0 %v1231
      %1306 = vmatpush.bf16.msra.mxu0 %v1230
      %1307 = vmatmul.bf16.gmra.mxu0 %v1139
      %v1308 = vpop.f32.mrf.mxu0
      %v1309 = vadd.f32 %v1280, %v1308
      %v1310 = vpop.f32.mrf.mxu0
      %v1311 = vadd.f32 %v1282, %v1310
      %1312 = vmatmul.bf16.gmra.mxu0 %v1142
      %v1313 = vpop.f32.mrf.mxu0
      %v1314 = vadd.f32 %v1285, %v1313
      %v1315 = vpop.f32.mrf.mxu0
      %v1316 = vadd.f32 %v1287, %v1315
      %1317 = vmatmul.bf16.gmra.mxu0 %v1145
      %v1318 = vpop.f32.mrf.mxu0
      %v1319 = vadd.f32 %v1290, %v1318
      %v1320 = vpop.f32.mrf.mxu0
      %v1321 = vadd.f32 %v1292, %v1320
      %1322 = vmatmul.bf16.gmra.mxu0 %v1148
      %v1323 = vpop.f32.mrf.mxu0
      %v1324 = vadd.f32 %v1295, %v1323
      %v1325 = vpop.f32.mrf.mxu0
      %v1326 = vadd.f32 %v1297, %v1325
      %1327 = vdwg.mxu0
      %1328 = vmatpush.bf16.msra.mxu0 0
      %1329 = vmatpush.bf16.msra.mxu0 0
      %1330 = vmatpush.bf16.msra.mxu0 0
      %1331 = vmatpush.bf16.msra.mxu0 0
      %1332 = vmatpush.bf16.msra.mxu0 0
      %1333 = vmatpush.bf16.msra.mxu0 0
      %1334 = vmatpush.bf16.msra.mxu0 %v1239
      %1335 = vmatpush.bf16.msra.mxu0 %v1238
      %1336 = vmatmul.bf16.gmra.mxu0 %v1259
      %v1337 = vpop.f32.mrf.mxu0
      %v1338 = vadd.f32 %v1309, %v1337
      %v1339 = vpop.f32.mrf.mxu0
      %v1340 = vadd.f32 %v1311, %v1339
      %1341 = vmatmul.bf16.gmra.mxu0 %v1262
      %v1342 = vpop.f32.mrf.mxu0
      %v1343 = vadd.f32 %v1314, %v1342
      %v1344 = vpop.f32.mrf.mxu0
      %v1345 = vadd.f32 %v1316, %v1344
      %1346 = vmatmul.bf16.gmra.mxu0 %v1265
      %v1347 = vpop.f32.mrf.mxu0
      %v1348 = vadd.f32 %v1319, %v1347
      %v1349 = vpop.f32.mrf.mxu0
      %v1350 = vadd.f32 %v1321, %v1349
      %1351 = vmatmul.bf16.gmra.mxu0 %v1268
      %v1352 = vpop.f32.mrf.mxu0
      %v1353 = vadd.f32 %v1324, %v1352
      %v1354 = vpop.f32.mrf.mxu0
      %v1355 = vadd.f32 %v1326, %v1354
      %1356 = vdwg.mxu0
      %1357 = vst.msk [vmem:[%s170] sm:$0xff] %vm172, %v1338
      %1358 = vst.msk [vmem:[%s170 + $0x8] sm:$0xff] %vm172, %v1340
      %1359 = vst.msk [vmem:[%s170 + $0x10] sm:$0xff] %vm172, %v1343
      %1360 = vst.msk [vmem:[%s170 + $0x18] sm:$0xff] %vm172, %v1345
      %1361 = vst.msk [vmem:[%s170 + $0x20] sm:$0xff] %vm172, %v1348
      %1362 = vst.msk [vmem:[%s170 + $0x28] sm:$0xff] %vm172, %v1350
      %1363 = vst.msk [vmem:[%s170 + $0x30] sm:$0xff] %vm172, %v1353
      %1364 = vst.msk [vmem:[%s170 + $0x38] sm:$0xff] %vm172, %v1355
      %p1365 = scmp.lt.s32.totalorder %s14, 1
      %s1366 = scalar_select %p1365, %s14, 1
      %s1367 = smul.addr %s1366, 8
      %s1368 = smul.addr %s1367, 8
      %s1369 = scalar_lea.vmem %s3, %s1368
      // Predicated region
      $region33: #{dab_forward.7} parent=31 // pred_check
        %p1370 = pneg %p100
      $region34: #{dab_forward.7} parent=31 // pred_check_branch
        %1372 = sbr.rel (%p1370) target = $region36
      $region35: #{dab_forward.7} parent=31 // pred_region
        _
      $region36: #{dab_forward.7} parent=31 // pred_fallthru
        _
    $region32: #{dab_forward.7} parent=5 // pred_fallthru
      _
    %p1373 = scmp.le.s32.totalorder 2, %s9
    // Predicated region
    $region37: #{dab_forward.7} parent=5 // pred_check
      %p1374 = pneg %p1373
    $region38: #{dab_forward.7} parent=5 // pred_check_branch
      %1376 = sbr.rel (%p1374) target = $region40
    $region39: #{dab_forward.7} parent=5 // pred_region
      %s1377 = ssub.s32 %s9, 2
      // Predicated region
      $region41: #{dab_forward.7} parent=39 // pred_check
        %p1378 = pneg %p106
      $region42: #{dab_forward.7} parent=39 // pred_check_branch
        %1380 = sbr.rel (%p1378) target = $region44
      $region43: #{dab_forward.7} parent=39 // pred_region
        %p1381 = scmp.lt.s32.totalorder %s15, 1
        %s1382 = scalar_select %p1381, %s15, 1
        %s1383 = smul.addr %s1382, 8
        %s1384 = smul.addr %s1383, 8
        %s1385 = scalar_lea.vmem %s3, %s1384
      $region44: #{dab_forward.7} parent=39 // pred_fallthru
        _
    $region40: #{dab_forward.7} parent=5 // pred_fallthru
      _
  $region6: #{dab_forward.7} parent=0 // loop_footer
    %s13 = sadd.s32 1, %s9
  $region7: #{dab_forward.7} parent=0 // loop_footer_branch
    %8 = sbr.rel target = $region3
  $region8: #{dab_forward.7} parent=0 // loop_exit
    _

// kernel: dab_forward.9
$region0: #{dab_forward.9}
  #allocation0 [shape = 'u32[]', space=smem, size = 0x4, offset = 0x4, fixed_abs, tag = 'smem constant byte address 0x4 - core index']
  #allocation1 [shape = 'u32[72,128]{1,0:T(1,128)}', space=vmem, size = 0x9000, scoped, tag = 'internal scratch']
  #allocation2 [shape = 'f32[10,10,32]{2,1,0:T(8,128)}', space=vmem, size = 0x14000, scoped, tag = 'scratch operand']
  %s0 = inlined_call_operand.vmem [shape: f32[2,8,8,32], index: 0, kind: input, shape index: {}]
  %s1 = inlined_call_operand.vmem [shape: f32[2,8,8,32], index: 1, kind: input, shape index: {}]
  %s2 = inlined_call_operand.vmem [shape: f32[2,8,8,32], index: 2, kind: input, shape index: {}]
  %s3 = inlined_call_operand.vmem [shape: bf16[288,32], index: 3, kind: input, shape index: {}]
  %s4 = inlined_call_operand.vmem [shape: bf16[288,32], index: 4, kind: input, shape index: {}]
  %s5 = inlined_call_operand.hbm [shape: f32[2,8,8,32], index: 5, kind: output, shape index: {}]
  %s6 = sld [smem:[#allocation0]]
  $region53: #{dab_forward.9} parent=0
    _
  %s8 = ssub.s32 1, %s6
  %s9 = scalar_select 0, %s8, %s6
  $region1: #{dab_forward.9} parent=0
    #allocation3 [shape = 'u8[65536]{0}', space=vmem, size = 0x10000, scoped, tag = 'output window, operand 0']
    #allocation4 [shape = 's32[2]{0}', space=sflag, size = 0x8, scoped, tag = 'scoped memory for dab_forward.9']
    %10 = vsyncpa [#allocation4], 0
    %s11 = scalar_lea.sflag [#allocation4], 1
    %12 = vsyncpa %s11, 0
    loop: start=0, step=1, limit=4
    $region2: #{dab_forward.9} parent=1 // loop_pre_header
      _
    $region3: #{dab_forward.9} parent=1 // loop_header
      %s14 = sphi 0, %s18
      %p15 = scmp.ge.s32.totalorder %s14, 4
      %s24 = sphi 0, %s26
      %s27 = sphi 0, %s24
      %s28 = sphi 0, %s27
      %s44 = sphi 0, %s28
      %s50 = sphi 0, %s52
      %s53 = sphi 0, %s50
      %s54 = sphi 0, %s53
      %s70 = sphi 0, %s54
      %s76 = sphi 0, %s78
      %s79 = sphi 0, %s76
      %s80 = sphi 0, %s79
      %s96 = sphi 0, %s80
      %s100 = sphi 0, %s100
      %s102 = sphi 0, %s100
      %s103 = sphi 0, %s102
      %s117 = sphi 0, %s103
      %s121 = sphi 0, %s121
      %s123 = sphi 0, %s121
      %s124 = sphi 0, %s123
      %s138 = sphi 0, %s124
      %s144 = sphi 0, %s146
      %s147 = sphi 0, %s144
      %s148 = sphi 0, %s147
      %s164 = sphi 0, %s148
    $region4: #{dab_forward.9} parent=1 // loop_header_branch
      %17 = sbr.rel (%p15) target = $region8
    $region5: #{dab_forward.9} parent=1 // loop_body
      %s19 = ssub.s32 %s14, 1
      %s20 = ssub.s32 %s14, 2
      %s21 = sadd.s32 %s14, 1
      %s22 = ssub.s32 %s14, %s21
      %p23 = scmp.eq.s32.totalorder %s22, 0
      %s25 = sadd.s32 %s24, 1
      %s26 = scalar_select %p23, %s24, %s25
      %p29 = pneg %p23
      %p30 = scmp.eq.s32.totalorder %s14, 1
      %p31 = por %p29, %p30
      %p32 = scmp.ne.s32.totalorder %s24, %s27
      %p33 = scmp.eq.s32.totalorder %s14, 0
      %p34 = por %p32, %p33
      %p35 = scmp.ne.s32.totalorder %s24, %s27
      %p36 = scmp.eq.s32.totalorder %s19, 1
      %p37 = por %p35, %p36
      %p38 = scmp.ne.s32.totalorder %s27, %s28
      %p39 = scmp.eq.s32.totalorder %s19, 0
      %p40 = por %p38, %p39
      %p41 = scmp.ne.s32.totalorder %s27, %s28
      %p42 = scmp.eq.s32.totalorder %s20, 1
      %p43 = por %p41, %p42
      %p45 = scmp.ne.s32.totalorder %s28, %s44
      %p46 = scmp.eq.s32.totalorder %s20, 0
      %p47 = por %p45, %p46
      %s48 = ssub.s32 %s14, %s21
      %p49 = scmp.eq.s32.totalorder %s48, 0
      %s51 = sadd.s32 %s50, 1
      %s52 = scalar_select %p49, %s50, %s51
      %p55 = pneg %p49
      %p56 = scmp.eq.s32.totalorder %s14, 1
      %p57 = por %p55, %p56
      %p58 = scmp.ne.s32.totalorder %s50, %s53
      %p59 = scmp.eq.s32.totalorder %s14, 0
      %p60 = por %p58, %p59
      %p61 = scmp.ne.s32.totalorder %s50, %s53
      %p62 = scmp.eq.s32.totalorder %s19, 1
      %p63 = por %p61, %p62
      %p64 = scmp.ne.s32.totalorder %s53, %s54
      %p65 = scmp.eq.s32.totalorder %s19, 0
      %p66 = por %p64, %p65
      %p67 = scmp.ne.s32.totalorder %s53, %s54
      %p68 = scmp.eq.s32.totalorder %s20, 1
      %p69 = por %p67, %p68
      %p71 = scmp.ne.s32.totalorder %s54, %s70
      %p72 = scmp.eq.s32.totalorder %s20, 0
      %p73 = por %p71, %p72
      %s74 = ssub.s32 %s14, %s21
      %p75 = scmp.eq.s32.totalorder %s74, 0
      %s77 = sadd.s32 %s76, 1
      %s78 = scalar_select %p75, %s76, %s77
      %p81 = pneg %p75
      %p82 = scmp.eq.s32.totalorder %s14, 1
      %p83 = por %p81, %p82
      %p84 = scmp.ne.s32.totalorder %s76, %s79
      %p85 = scmp.eq.s32.totalorder %s14, 0
      %p86 = por %p84, %p85
      %p87 = scmp.ne.s32.totalorder %s76, %s79
      %p88 = scmp.eq.s32.totalorder %s19, 1
      %p89 = por %p87, %p88
      %p90 = scmp.ne.s32.totalorder %s79, %s80
      %p91 = scmp.eq.s32.totalorder %s19, 0
      %p92 = por %p90, %p91
      %p93 = scmp.ne.s32.totalorder %s79, %s80
      %p94 = scmp.eq.s32.totalorder %s20, 1
      %p95 = por %p93, %p94
      %p97 = scmp.ne.s32.totalorder %s80, %s96
      %p98 = scmp.eq.s32.totalorder %s20, 0
      %p99 = por %p97, %p98
      %s101 = sadd.s32 %s100, 1
      %p104 = scmp.eq.s32.totalorder %s14, 1
      %p105 = scmp.ne.s32.totalorder %s100, %s102
      %p106 = scmp.eq.s32.totalorder %s14, 0
      %p107 = por %p105, %p106
      %p108 = scmp.ne.s32.totalorder %s100, %s102
      %p109 = scmp.eq.s32.totalorder %s19, 1
      %p110 = por %p108, %p109
      %p111 = scmp.ne.s32.totalorder %s102, %s103
      %p112 = scmp.eq.s32.totalorder %s19, 0
      %p113 = por %p111, %p112
      %p114 = scmp.ne.s32.totalorder %s102, %s103
      %p115 = scmp.eq.s32.totalorder %s20, 1
      %p116 = por %p114, %p115
      %p118 = scmp.ne.s32.totalorder %s103, %s117
      %p119 = scmp.eq.s32.totalorder %s20, 0
      %p120 = por %p118, %p119
      %s122 = sadd.s32 %s121, 1
      %p125 = scmp.eq.s32.totalorder %s14, 1
      %p126 = scmp.ne.s32.totalorder %s121, %s123
      %p127 = scmp.eq.s32.totalorder %s14, 0
      %p128 = por %p126, %p127
      %p129 = scmp.ne.s32.totalorder %s121, %s123
      %p130 = scmp.eq.s32.totalorder %s19, 1
      %p131 = por %p129, %p130
      %p132 = scmp.ne.s32.totalorder %s123, %s124
      %p133 = scmp.eq.s32.totalorder %s19, 0
      %p134 = por %p132, %p133
      %p135 = scmp.ne.s32.totalorder %s123, %s124
      %p136 = scmp.eq.s32.totalorder %s20, 1
      %p137 = por %p135, %p136
      %p139 = scmp.ne.s32.totalorder %s124, %s138
      %p140 = scmp.eq.s32.totalorder %s20, 0
      %p141 = por %p139, %p140
      %s142 = ssub.s32 %s14, %s21
      %p143 = scmp.eq.s32.totalorder %s142, 0
      %s145 = sadd.s32 %s144, 1
      %s146 = scalar_select %p143, %s144, %s145
      %p149 = pneg %p143
      %p150 = scmp.eq.s32.totalorder %s14, 1
      %p151 = por %p149, %p150
      %p152 = scmp.ne.s32.totalorder %s144, %s147
      %p153 = scmp.eq.s32.totalorder %s14, 0
      %p154 = por %p152, %p153
      %p155 = scmp.ne.s32.totalorder %s144, %s147
      %p156 = scmp.eq.s32.totalorder %s19, 1
      %p157 = por %p155, %p156
      %p158 = scmp.ne.s32.totalorder %s147, %s148
      %p159 = scmp.eq.s32.totalorder %s19, 0
      %p160 = por %p158, %p159
      %p161 = scmp.ne.s32.totalorder %s147, %s148
      %p162 = scmp.eq.s32.totalorder %s20, 1
      %p163 = por %p161, %p162
      %p165 = scmp.ne.s32.totalorder %s148, %s164
      %p166 = scmp.eq.s32.totalorder %s20, 0
      %p167 = por %p165, %p166
      %p168 = scmp.le.s32.totalorder 1, %s14
      %p169 = scmp.lt.s32.totalorder %s14, 3
      %p170 = pnand %p168, %p169
      %p171 = pneg %p170
      // Predicated region
      $region9: #{dab_forward.9} parent=5 // pred_check
        _
      $region10: #{dab_forward.9} parent=5 // pred_check_branch
        %173 = sbr.rel (%p170) target = $region12
      $region11: #{dab_forward.9} parent=5 // pred_region
        %s174 = ssub.s32 %s14, 1
        // Predicated region
        $region13: #{dab_forward.9} parent=11 // pred_check
          %p175 = pneg %p113
        $region14: #{dab_forward.9} parent=11 // pred_check_branch
          %177 = sbr.rel (%p175) target = $region16
        $region15: #{dab_forward.9} parent=11 // pred_region
          _
        $region16: #{dab_forward.9} parent=11 // pred_fallthru
          _
        // Predicated region
        $region17: #{dab_forward.9} parent=11 // pred_check
          %p178 = pneg %p134
        $region18: #{dab_forward.9} parent=11 // pred_check_branch
          %180 = sbr.rel (%p178) target = $region20
        $region19: #{dab_forward.9} parent=11 // pred_region
          _
        $region20: #{dab_forward.9} parent=11 // pred_fallthru
          _
      $region12: #{dab_forward.9} parent=5 // pred_fallthru
        _
      %p181 = scmp.lt.s32.totalorder %s14, 2
      // Predicated region
      $region21: #{dab_forward.9} parent=5 // pred_check
        %p182 = pneg %p181
      $region22: #{dab_forward.9} parent=5 // pred_check_branch
        %184 = sbr.rel (%p182) target = $region24
      $region23: #{dab_forward.9} parent=5 // pred_region
        // Predicated region
        $region25: #{dab_forward.9} parent=23 // pred_check
          %p185 = pneg %p34
        $region26: #{dab_forward.9} parent=23 // pred_check_branch
          %187 = sbr.rel (%p185) target = $region28
        $region27: #{dab_forward.9} parent=23 // pred_region
          %p188 = scmp.lt.s32.totalorder %s14, 1
          %s189 = scalar_select %p188, %s14, 1
          %s190 = smul.addr %s189, 8
          %s191 = smul.addr %s190, 8
          %s192 = scalar_lea.vmem %s0, %s191
        $region28: #{dab_forward.9} parent=23 // pred_fallthru
          _
        // Predicated region
        $region29: #{dab_forward.9} parent=23 // pred_check
          %p193 = pneg %p60
        $region30: #{dab_forward.9} parent=23 // pred_check_branch
          %195 = sbr.rel (%p193) target = $region32
        $region31: #{dab_forward.9} parent=23 // pred_region
          %p196 = scmp.lt.s32.totalorder %s14, 1
          %s197 = scalar_select %p196, %s14, 1
          %s198 = smul.addr %s197, 8
          %s199 = smul.addr %s198, 8
          %s200 = scalar_lea.vmem %s1, %s199
        $region32: #{dab_forward.9} parent=23 // pred_fallthru
          _
        // Predicated region
        $region33: #{dab_forward.9} parent=23 // pred_check
          %p201 = pneg %p86
        $region34: #{dab_forward.9} parent=23 // pred_check_branch
          %203 = sbr.rel (%p201) target = $region36
        $region35: #{dab_forward.9} parent=23 // pred_region
          %p204 = scmp.lt.s32.totalorder %s14, 1
          %s205 = scalar_select %p204, %s14, 1
          %s206 = smul.addr %s205, 8
          %s207 = smul.addr %s206, 8
          %s208 = scalar_lea.vmem %s2, %s207
        $region36: #{dab_forward.9} parent=23 // pred_fallthru
          _
      $region24: #{dab_forward.9} parent=5 // pred_fallthru
        _
      %p209 = scmp.le.s32.totalorder 1, %s14
      %p210 = scmp.lt.s32.totalorder %s14, 3
      %p211 = pnand %p209, %p210
      %p212 = pneg %p211
      // Predicated region
      $region37: #{dab_forward.9} parent=5 // pred_check
        _
      $region38: #{dab_forward.9} parent=5 // pred_check_branch
        %214 = sbr.rel (%p211) target = $region40
      $region39: #{dab_forward.9} parent=5 // pred_region
        %s215 = ssub.s32 %s14, 1
        %p216 = scmp.lt.s32.totalorder %s19, 1
        %s217 = scalar_select %p216, %s19, 1
        %s218 = smul.addr %s217, 8
        %s219 = smul.addr %s218, 8
        %s220 = scalar_lea.vmem %s0, %s219
        %p221 = pneg %p40
        %p222 = pneg %p37
        %p223 = scmp.lt.s32.totalorder %s19, 1
        %s224 = scalar_select %p223, %s19, 1
        %s225 = smul.addr %s224, 8
        %s226 = smul.addr %s225, 8
        %s227 = scalar_lea.vmem %s1, %s226
        %p228 = pneg %p66
        %p229 = pneg %p63
        %p230 = scmp.lt.s32.totalorder %s19, 1
        %s231 = scalar_select %p230, %s19, 1
        %s232 = smul.addr %s231, 8
        %s233 = smul.addr %s232, 8
        %s234 = scalar_lea.vmem %s2, %s233
        %p235 = pneg %p92
        %p236 = pneg %p89
        %p237 = pneg %p113
        %p238 = pneg %p110
        %p239 = pneg %p134
        %p240 = pneg %p131
        %p241 = pneg %p160
        %p242 = pneg %p157
        %s243 = sand.u32 %s147, 1
        %s244 = scalar_lea.sflag [#allocation4], %s243
        %s245 = sand.u32 %s147, 1
        %s246 = smul.addr %s245, 64
        %s247 = scalar_lea.vmem [#allocation3], %s246
        %p248 = scmp.lt.s32.totalorder %s19, 1
        %s249 = scalar_select %p248, %s19, 1
        %s250 = smul.addr %s249, 8
        %s251 = smul.addr %s250, 8
        %s252 = scalar_lea.vmem %s0, %s251
        %p253 = scmp.lt.s32.totalorder %s19, 1
        %s254 = scalar_select %p253, %s19, 1
        %s255 = smul.addr %s254, 8
        %s256 = smul.addr %s255, 8
        %s257 = scalar_lea.vmem %s1, %s256
        %p258 = scmp.lt.s32.totalorder %s19, 1
        %s259 = scalar_select %p258, %s19, 1
        %s260 = smul.addr %s259, 8
        %s261 = smul.addr %s260, 8
        %s262 = scalar_lea.vmem %s2, %s261
        %vm264 = vcmask 261120
        %265 = vst.msk [vmem:[#allocation2] sm:$0xff] %vm264, 0.0
        %vm266 = vcmask 254976
        %267 = vst.msk [vmem:[#allocation2 + $0x8] sm:$0x3] %vm266, 0.0
        %268 = vst.msk [vmem:[#allocation2 + $0x10] sm:$0xff] %vm264, 0.0
        %269 = vst.msk [vmem:[#allocation2 + $0x18] sm:$0x3] %vm266, 0.0
        %270 = vst.msk [vmem:[#allocation2 + $0x20] sm:$0xff] %vm264, 0.0
        %271 = vst.msk [vmem:[#allocation2 + $0x28] sm:$0x3] %vm266, 0.0
        %272 = vst.msk [vmem:[#allocation2 + $0x30] sm:$0xff] %vm264, 0.0
        %273 = vst.msk [vmem:[#allocation2 + $0x38] sm:$0x3] %vm266, 0.0
        %274 = vst.msk [vmem:[#allocation2 + $0x40] sm:$0xff] %vm264, 0.0
        %275 = vst.msk [vmem:[#allocation2 + $0x48] sm:$0x3] %vm266, 0.0
        %276 = vst.msk [vmem:[#allocation2 + $0x50] sm:$0xff] %vm264, 0.0
        %277 = vst.msk [vmem:[#allocation2 + $0x58] sm:$0x3] %vm266, 0.0
        %278 = vst.msk [vmem:[#allocation2 + $0x60] sm:$0xff] %vm264, 0.0
        %279 = vst.msk [vmem:[#allocation2 + $0x68] sm:$0x3] %vm266, 0.0
        %280 = vst.msk [vmem:[#allocation2 + $0x70] sm:$0xff] %vm264, 0.0
        %281 = vst.msk [vmem:[#allocation2 + $0x78] sm:$0x3] %vm266, 0.0
        %282 = vst.msk [vmem:[#allocation2 + $0x80] sm:$0xff] %vm264, 0.0
        %283 = vst.msk [vmem:[#allocation2 + $0x88] sm:$0x3] %vm266, 0.0
        %284 = vst.msk [vmem:[#allocation2 + $0x90] sm:$0xff] %vm264, 0.0
        %285 = vst.msk [vmem:[#allocation2 + $0x98] sm:$0x3] %vm266, 0.0
        %v286 = vld [vmem:[%s252] sm:$0xff]
        %v287 = vld [vmem:[%s252 + $0x8] sm:$0xff]
        %v288 = vld [vmem:[%s252 + $0x10] sm:$0xff]
        %v289 = vld [vmem:[%s252 + $0x18] sm:$0xff]
        %v290 = vld [vmem:[%s252 + $0x20] sm:$0xff]
        %v291 = vld [vmem:[%s252 + $0x28] sm:$0xff]
        %v292 = vld [vmem:[%s252 + $0x30] sm:$0xff]
        %v293 = vld [vmem:[%s252 + $0x38] sm:$0xff]
        %s294 = scalar_lea.vmem [#allocation2], 16
        %295 = vst.msk [vmem:[%s294 + $0x1] sm:$0xff] %vm264, %v286
        %296 = vst.msk [vmem:[%s294 + $0x11] sm:$0xff] %vm264, %v287
        %297 = vst.msk [vmem:[%s294 + $0x21] sm:$0xff] %vm264, %v288
        %298 = vst.msk [vmem:[%s294 + $0x31] sm:$0xff] %vm264, %v289
        %299 = vst.msk [vmem:[%s294 + $0x41] sm:$0xff] %vm264, %v290
        %300 = vst.msk [vmem:[%s294 + $0x51] sm:$0xff] %vm264, %v291
        %301 = vst.msk [vmem:[%s294 + $0x61] sm:$0xff] %vm264, %v292
        %302 = vst.msk [vmem:[%s294 + $0x71] sm:$0xff] %vm264, %v293
        %v303 = vld [vmem:[#allocation2] sm:$0xff]
        %v304 = vld [vmem:[#allocation2 + $0x8] sm:$0x3]
        %v305 = vld [vmem:[#allocation2 + $0x10] sm:$0xff]
        %v306 = vld [vmem:[#allocation2 + $0x18] sm:$0x3]
        %v307 = vld [vmem:[#allocation2 + $0x20] sm:$0xff]
        %v308 = vld [vmem:[#allocation2 + $0x28] sm:$0x3]
        %v309 = vld [vmem:[#allocation2 + $0x30] sm:$0xff]
        %v310 = vld [vmem:[#allocation2 + $0x38] sm:$0x3]
        %v311 = vld [vmem:[#allocation2 + $0x40] sm:$0xff]
        %v312 = vld [vmem:[#allocation2 + $0x48] sm:$0x3]
        %v313 = vld [vmem:[#allocation2 + $0x50] sm:$0xff]
        %v314 = vld [vmem:[#allocation2 + $0x58] sm:$0x3]
        %v315 = vld [vmem:[#allocation2 + $0x60] sm:$0xff]
        %v316 = vld [vmem:[#allocation2 + $0x68] sm:$0x3]
        %v317 = vld [vmem:[#allocation2 + $0x70] sm:$0xff]
        %v318 = vld [vmem:[#allocation2 + $0x78] sm:$0x3]
        %v319 = vld [vmem:[#allocation2 + $0x80] sm:$0xff]
        %v320 = vld [vmem:[#allocation2 + $0x88] sm:$0x3]
        %v321 = vld [vmem:[#allocation2 + $0x90] sm:$0xff]
        %v322 = vld [vmem:[#allocation2 + $0x98] sm:$0x3]
        %v323 = vld [vmem:[%s3] sm:$0xf]
        %v324 = vld [vmem:[%s3 + $0x4] sm:$0xf]
        %v325 = vld [vmem:[%s3 + $0x8] sm:$0xf]
        %v326 = vld [vmem:[%s3 + $0xc] sm:$0xf]
        %v327 = vld [vmem:[%s3 + $0x10] sm:$0xf]
        %v328 = vld [vmem:[%s3 + $0x14] sm:$0xf]
        %v329 = vld [vmem:[%s3 + $0x18] sm:$0xf]
        %v330 = vld [vmem:[%s3 + $0x1c] sm:$0xf]
        %v331 = vld [vmem:[%s3 + $0x20] sm:$0xf]
        %v332 = vld [vmem:[%s3 + $0x24] sm:$0xf]
        %v333 = vld [vmem:[%s3 + $0x28] sm:$0xf]
        %v334 = vld [vmem:[%s3 + $0x2c] sm:$0xf]
        %v335 = vld [vmem:[%s3 + $0x30] sm:$0xf]
        %v336 = vld [vmem:[%s3 + $0x34] sm:$0xf]
        %v337 = vld [vmem:[%s3 + $0x38] sm:$0xf]
        %v338 = vld [vmem:[%s3 + $0x3c] sm:$0xf]
        %v339 = vld [vmem:[%s3 + $0x40] sm:$0xf]
        %v340 = vld [vmem:[%s3 + $0x44] sm:$0xf]
        %v341 = vld [vmem:[%s3 + $0x48] sm:$0xf]
        %v342 = vld [vmem:[%s3 + $0x4c] sm:$0xf]
        %v343 = vld [vmem:[%s3 + $0x50] sm:$0xf]
        %v344 = vld [vmem:[%s3 + $0x54] sm:$0xf]
        %v345 = vld [vmem:[%s3 + $0x58] sm:$0xf]
        %v346 = vld [vmem:[%s3 + $0x5c] sm:$0xf]
        %v347 = vld [vmem:[%s3 + $0x60] sm:$0xf]
        %v348 = vld [vmem:[%s3 + $0x64] sm:$0xf]
        %v349 = vld [vmem:[%s3 + $0x68] sm:$0xf]
        %v350 = vld [vmem:[%s3 + $0x6c] sm:$0xf]
        %v351 = vld [vmem:[%s3 + $0x70] sm:$0xf]
        %v352 = vld [vmem:[%s3 + $0x74] sm:$0xf]
        %v353 = vld [vmem:[%s3 + $0x78] sm:$0xf]
        %v354 = vld [vmem:[%s3 + $0x7c] sm:$0xf]
        %v355 = vld [vmem:[%s3 + $0x80] sm:$0xf]
        %v356 = vld [vmem:[%s3 + $0x84] sm:$0xf]
        %v357 = vld [vmem:[%s3 + $0x88] sm:$0xf]
        %v358 = vld [vmem:[%s3 + $0x8c] sm:$0xf]
        %vm375 = vcmask 1046528
        %v376 = vrot.slane %v303, 1
        %v377 = vrot.slane %v304, 1
        %v378 = vsel %vm375, %v376, %v377
        %v379 = vrot.slane %v305, 1
        %v380 = vrot.slane %v306, 1
        %v381 = vsel %vm375, %v379, %v380
        %v382 = vrot.slane %v307, 1
        %v383 = vrot.slane %v308, 1
        %v384 = vsel %vm375, %v382, %v383
        %v385 = vrot.slane %v309, 1
        %v386 = vrot.slane %v310, 1
        %v387 = vsel %vm375, %v385, %v386
        %v388 = vrot.slane %v311, 1
        %v389 = vrot.slane %v312, 1
        %v390 = vsel %vm375, %v388, %v389
        %v391 = vrot.slane %v313, 1
        %v392 = vrot.slane %v314, 1
        %v393 = vsel %vm375, %v391, %v392
        %v394 = vrot.slane %v315, 1
        %v395 = vrot.slane %v316, 1
        %v396 = vsel %vm375, %v394, %v395
        %v397 = vrot.slane %v317, 1
        %v398 = vrot.slane %v318, 1
        %v399 = vsel %vm375, %v397, %v398
        %vm400 = vcmask 1045504
        %v401 = vrot.slane %v303, 2
        %v402 = vrot.slane %v304, 2
        %v403 = vsel %vm400, %v401, %v402
        %v404 = vrot.slane %v305, 2
        %v405 = vrot.slane %v306, 2
        %v406 = vsel %vm400, %v404, %v405
        %v407 = vrot.slane %v307, 2
        %v408 = vrot.slane %v308, 2
        %v409 = vsel %vm400, %v407, %v408
        %v410 = vrot.slane %v309, 2
        %v411 = vrot.slane %v310, 2
        %v412 = vsel %vm400, %v410, %v411
        %v413 = vrot.slane %v311, 2
        %v414 = vrot.slane %v312, 2
        %v415 = vsel %vm400, %v413, %v414
        %v416 = vrot.slane %v313, 2
        %v417 = vrot.slane %v314, 2
        %v418 = vsel %vm400, %v416, %v417
        %v419 = vrot.slane %v315, 2
        %v420 = vrot.slane %v316, 2
        %v421 = vsel %vm400, %v419, %v420
        %v422 = vrot.slane %v317, 2
        %v423 = vrot.slane %v318, 2
        %v424 = vsel %vm400, %v422, %v423
        %v427 = vrot.slane %v319, 1
        %v428 = vrot.slane %v320, 1
        %v429 = vsel %vm375, %v427, %v428
        %v438 = vrot.slane %v319, 2
        %v439 = vrot.slane %v320, 2
        %v440 = vsel %vm400, %v438, %v439
        %v443 = vrot.slane %v321, 1
        %v444 = vrot.slane %v322, 1
        %v445 = vsel %vm375, %v443, %v444
        %v446 = vrot.slane %v321, 2
        %v447 = vrot.slane %v322, 2
        %v448 = vsel %vm400, %v446, %v447
        %457 = vrot.lane.b32.xlu0 %v378, 32
        %v458 = vpop.permute.xlu0 %457
        %459 = vrot.lane.b32.xlu0 %v381, 32
        %v460 = vpop.permute.xlu0 %459
        %461 = vrot.lane.b32.xlu0 %v384, 32
        %v462 = vpop.permute.xlu0 %461
        %463 = vrot.lane.b32.xlu0 %v387, 32
        %v464 = vpop.permute.xlu0 %463
        %465 = vrot.lane.b32.xlu0 %v390, 32
        %v466 = vpop.permute.xlu0 %465
        %467 = vrot.lane.b32.xlu0 %v393, 32
        %v468 = vpop.permute.xlu0 %467
        %469 = vrot.lane.b32.xlu0 %v396, 32
        %v470 = vpop.permute.xlu0 %469
        %471 = vrot.lane.b32.xlu0 %v399, 32
        %v472 = vpop.permute.xlu0 %471
        %481 = vrot.lane.b32.xlu0 %v403, 64
        %v482 = vpop.permute.xlu0 %481
        %483 = vrot.lane.b32.xlu0 %v406, 64
        %v484 = vpop.permute.xlu0 %483
        %485 = vrot.lane.b32.xlu0 %v409, 64
        %v486 = vpop.permute.xlu0 %485
        %487 = vrot.lane.b32.xlu0 %v412, 64
        %v488 = vpop.permute.xlu0 %487
        %489 = vrot.lane.b32.xlu0 %v415, 64
        %v490 = vpop.permute.xlu0 %489
        %491 = vrot.lane.b32.xlu0 %v418, 64
        %v492 = vpop.permute.xlu0 %491
        %493 = vrot.lane.b32.xlu0 %v421, 64
        %v494 = vpop.permute.xlu0 %493
        %495 = vrot.lane.b32.xlu0 %v424, 64
        %v496 = vpop.permute.xlu0 %495
        %505 = vrot.lane.b32.xlu0 %v305, 96
        %v506 = vpop.permute.xlu0 %505
        %507 = vrot.lane.b32.xlu0 %v307, 96
        %v508 = vpop.permute.xlu0 %507
        %509 = vrot.lane.b32.xlu0 %v309, 96
        %v510 = vpop.permute.xlu0 %509
        %511 = vrot.lane.b32.xlu0 %v311, 96
        %v512 = vpop.permute.xlu0 %511
        %513 = vrot.lane.b32.xlu0 %v313, 96
        %v514 = vpop.permute.xlu0 %513
        %515 = vrot.lane.b32.xlu0 %v315, 96
        %v516 = vpop.permute.xlu0 %515
        %517 = vrot.lane.b32.xlu0 %v317, 96
        %v518 = vpop.permute.xlu0 %517
        %519 = vrot.lane.b32.xlu0 %v319, 96
        %v520 = vpop.permute.xlu0 %519
        %529 = vrot.lane.b32.xlu0 %v406, 32
        %v530 = vpop.permute.xlu0 %529
        %531 = vrot.lane.b32.xlu0 %v409, 32
        %v532 = vpop.permute.xlu0 %531
        %533 = vrot.lane.b32.xlu0 %v412, 32
        %v534 = vpop.permute.xlu0 %533
        %535 = vrot.lane.b32.xlu0 %v415, 32
        %v536 = vpop.permute.xlu0 %535
        %537 = vrot.lane.b32.xlu0 %v418, 32
        %v538 = vpop.permute.xlu0 %537
        %539 = vrot.lane.b32.xlu0 %v421, 32
        %v540 = vpop.permute.xlu0 %539
        %541 = vrot.lane.b32.xlu0 %v424, 32
        %v542 = vpop.permute.xlu0 %541
        %543 = vrot.lane.b32.xlu0 %v440, 32
        %v544 = vpop.permute.xlu0 %543
        %553 = vrot.lane.b32.xlu0 %v307, 64
        %v554 = vpop.permute.xlu0 %553
        %555 = vrot.lane.b32.xlu0 %v309, 64
        %v556 = vpop.permute.xlu0 %555
        %557 = vrot.lane.b32.xlu0 %v311, 64
        %v558 = vpop.permute.xlu0 %557
        %559 = vrot.lane.b32.xlu0 %v313, 64
        %v560 = vpop.permute.xlu0 %559
        %561 = vrot.lane.b32.xlu0 %v315, 64
        %v562 = vpop.permute.xlu0 %561
        %563 = vrot.lane.b32.xlu0 %v317, 64
        %v564 = vpop.permute.xlu0 %563
        %565 = vrot.lane.b32.xlu0 %v319, 64
        %v566 = vpop.permute.xlu0 %565
        %567 = vrot.lane.b32.xlu0 %v321, 64
        %v568 = vpop.permute.xlu0 %567
        %577 = vrot.lane.b32.xlu0 %v384, 96
        %v578 = vpop.permute.xlu0 %577
        %579 = vrot.lane.b32.xlu0 %v387, 96
        %v580 = vpop.permute.xlu0 %579
        %581 = vrot.lane.b32.xlu0 %v390, 96
        %v582 = vpop.permute.xlu0 %581
        %583 = vrot.lane.b32.xlu0 %v393, 96
        %v584 = vpop.permute.xlu0 %583
        %585 = vrot.lane.b32.xlu0 %v396, 96
        %v586 = vpop.permute.xlu0 %585
        %587 = vrot.lane.b32.xlu0 %v399, 96
        %v588 = vpop.permute.xlu0 %587
        %589 = vrot.lane.b32.xlu0 %v429, 96
        %v590 = vpop.permute.xlu0 %589
        %591 = vrot.lane.b32.xlu0 %v445, 96
        %v592 = vpop.permute.xlu0 %591
        %v601 = vsel %vm264, %v303, %v458
        %v602 = vsel %vm264, %v305, %v460
        %v603 = vsel %vm264, %v307, %v462
        %v604 = vsel %vm264, %v309, %v464
        %v605 = vsel %vm264, %v311, %v466
        %v606 = vsel %vm264, %v313, %v468
        %v607 = vsel %vm264, %v315, %v470
        %v608 = vsel %vm264, %v317, %v472
        %vm609 = vcmask 523264
        %v610 = vsel %vm609, %v601, %v482
        %v611 = vsel %vm609, %v602, %v484
        %v612 = vsel %vm609, %v603, %v486
        %v613 = vsel %vm609, %v604, %v488
        %v614 = vsel %vm609, %v605, %v490
        %v615 = vsel %vm609, %v606, %v492
        %v616 = vsel %vm609, %v607, %v494
        %v617 = vsel %vm609, %v608, %v496
        %vm618 = vcmask 785408
        %v619 = vsel %vm618, %v610, %v506
        %v620 = vsel %vm618, %v611, %v508
        %v621 = vsel %vm618, %v612, %v510
        %v622 = vsel %vm618, %v613, %v512
        %v623 = vsel %vm618, %v614, %v514
        %v624 = vsel %vm618, %v615, %v516
        %v625 = vsel %vm618, %v616, %v518
        %v626 = vsel %vm618, %v617, %v520
        %v627 = vsel %vm264, %v381, %v530
        %v628 = vsel %vm264, %v384, %v532
        %v629 = vsel %vm264, %v387, %v534
        %v630 = vsel %vm264, %v390, %v536
        %v631 = vsel %vm264, %v393, %v538
        %v632 = vsel %vm264, %v396, %v540
        %v633 = vsel %vm264, %v399, %v542
        %v634 = vsel %vm264, %v429, %v544
        %v635 = vsel %vm609, %v627, %v554
        %v636 = vsel %vm609, %v628, %v556
        %v637 = vsel %vm609, %v629, %v558
        %v638 = vsel %vm609, %v630, %v560
        %v639 = vsel %vm609, %v631, %v562
        %v640 = vsel %vm609, %v632, %v564
        %v641 = vsel %vm609, %v633, %v566
        %v642 = vsel %vm609, %v634, %v568
        %v643 = vsel %vm618, %v635, %v578
        %v644 = vsel %vm618, %v636, %v580
        %v645 = vsel %vm618, %v637, %v582
        %v646 = vsel %vm618, %v638, %v584
        %v647 = vsel %vm618, %v639, %v586
        %v648 = vsel %vm618, %v640, %v588
        %v649 = vsel %vm618, %v641, %v590
        %v650 = vsel %vm618, %v642, %v592
        %v651 = vpack.c.bf16 %v620, %v619
        %v652 = vpack.c.bf16 %v644, %v643
        %v653 = vpack.c.bf16 %v412, %v409
        %v654 = vpack.c.bf16 %v622, %v621
        %v655 = vpack.c.bf16 %v646, %v645
        %v656 = vpack.c.bf16 %v418, %v415
        %v657 = vpack.c.bf16 %v624, %v623
        %v658 = vpack.c.bf16 %v648, %v647
        %v659 = vpack.c.bf16 %v424, %v421
        %v660 = vpack.c.bf16 %v626, %v625
        %v661 = vpack.c.bf16 %v650, %v649
        %v662 = vpack.c.bf16 %v448, %v440
        %v663 = vld [vmem:[%s257] sm:$0xff]
        %v664 = vld [vmem:[%s257 + $0x8] sm:$0xff]
        %v665 = vld [vmem:[%s257 + $0x10] sm:$0xff]
        %v666 = vld [vmem:[%s257 + $0x18] sm:$0xff]
        %v667 = vld [vmem:[%s257 + $0x20] sm:$0xff]
        %v668 = vld [vmem:[%s257 + $0x28] sm:$0xff]
        %v669 = vld [vmem:[%s257 + $0x30] sm:$0xff]
        %v670 = vld [vmem:[%s257 + $0x38] sm:$0xff]
        %671 = vst.msk [vmem:[%s294 + $0x1] sm:$0xff] %vm264, %v663
        %672 = vst.msk [vmem:[%s294 + $0x11] sm:$0xff] %vm264, %v664
        %673 = vst.msk [vmem:[%s294 + $0x21] sm:$0xff] %vm264, %v665
        %674 = vst.msk [vmem:[%s294 + $0x31] sm:$0xff] %vm264, %v666
        %675 = vst.msk [vmem:[%s294 + $0x41] sm:$0xff] %vm264, %v667
        %676 = vst.msk [vmem:[%s294 + $0x51] sm:$0xff] %vm264, %v668
        %677 = vst.msk [vmem:[%s294 + $0x61] sm:$0xff] %vm264, %v669
        %678 = vst.msk [vmem:[%s294 + $0x71] sm:$0xff] %vm264, %v670
        %v679 = vld [vmem:[#allocation2] sm:$0xff]
        %v680 = vld [vmem:[#allocation2 + $0x8] sm:$0x3]
        %v681 = vld [vmem:[#allocation2 + $0x10] sm:$0xff]
        %v682 = vld [vmem:[#allocation2 + $0x18] sm:$0x3]
        %v683 = vld [vmem:[#allocation2 + $0x20] sm:$0xff]
        %v684 = vld [vmem:[#allocation2 + $0x28] sm:$0x3]
        %v685 = vld [vmem:[#allocation2 + $0x30] sm:$0xff]
        %v686 = vld [vmem:[#allocation2 + $0x38] sm:$0x3]
        %v687 = vld [vmem:[#allocation2 + $0x40] sm:$0xff]
        %v688 = vld [vmem:[#allocation2 + $0x48] sm:$0x3]
        %v689 = vld [vmem:[#allocation2 + $0x50] sm:$0xff]
        %v690 = vld [vmem:[#allocation2 + $0x58] sm:$0x3]
        %v691 = vld [vmem:[#allocation2 + $0x60] sm:$0xff]
        %v692 = vld [vmem:[#allocation2 + $0x68] sm:$0x3]
        %v693 = vld [vmem:[#allocation2 + $0x70] sm:$0xff]
        %v694 = vld [vmem:[#allocation2 + $0x78] sm:$0x3]
        %v695 = vld [vmem:[#allocation2 + $0x80] sm:$0xff]
        %v696 = vld [vmem:[#allocation2 + $0x88] sm:$0x3]
        %v697 = vld [vmem:[#allocation2 + $0x90] sm:$0xff]
        %v698 = vld [vmem:[#allocation2 + $0x98] sm:$0x3]
        %v699 = vld [vmem:[%s4] sm:$0xf]
        %v700 = vld [vmem:[%s4 + $0x4] sm:$0xf]
        %v701 = vld [vmem:[%s4 + $0x8] sm:$0xf]
        %v702 = vld [vmem:[%s4 + $0xc] sm:$0xf]
        %v703 = vld [vmem:[%s4 + $0x10] sm:$0xf]
        %v704 = vld [vmem:[%s4 + $0x14] sm:$0xf]
        %v705 = vld [vmem:[%s4 + $0x18] sm:$0xf]
        %v706 = vld [vmem:[%s4 + $0x1c] sm:$0xf]
        %v707 = vld [vmem:[%s4 + $0x20] sm:$0xf]
        %v708 = vld [vmem:[%s4 + $0x24] sm:$0xf]
        %v709 = vld [vmem:[%s4 + $0x28] sm:$0xf]
        %v710 = vld [vmem:[%s4 + $0x2c] sm:$0xf]
        %v711 = vld [vmem:[%s4 + $0x30] sm:$0xf]
        %v712 = vld [vmem:[%s4 + $0x34] sm:$0xf]
        %v713 = vld [vmem:[%s4 + $0x38] sm:$0xf]
        %v714 = vld [vmem:[%s4 + $0x3c] sm:$0xf]
        %v715 = vld [vmem:[%s4 + $0x40] sm:$0xf]
        %v716 = vld [vmem:[%s4 + $0x44] sm:$0xf]
        %v717 = vld [vmem:[%s4 + $0x48] sm:$0xf]
        %v718 = vld [vmem:[%s4 + $0x4c] sm:$0xf]
        %v719 = vld [vmem:[%s4 + $0x50] sm:$0xf]
        %v720 = vld [vmem:[%s4 + $0x54] sm:$0xf]
        %v721 = vld [vmem:[%s4 + $0x58] sm:$0xf]
        %v722 = vld [vmem:[%s4 + $0x5c] sm:$0xf]
        %v723 = vld [vmem:[%s4 + $0x60] sm:$0xf]
        %v724 = vld [vmem:[%s4 + $0x64] sm:$0xf]
        %v725 = vld [vmem:[%s4 + $0x68] sm:$0xf]
        %v726 = vld [vmem:[%s4 + $0x6c] sm:$0xf]
        %v727 = vld [vmem:[%s4 + $0x70] sm:$0xf]
        %v728 = vld [vmem:[%s4 + $0x74] sm:$0xf]
        %v729 = vld [vmem:[%s4 + $0x78] sm:$0xf]
        %v730 = vld [vmem:[%s4 + $0x7c] sm:$0xf]
        %v731 = vld [vmem:[%s4 + $0x80] sm:$0xf]
        %v732 = vld [vmem:[%s4 + $0x84] sm:$0xf]
        %v733 = vld [vmem:[%s4 + $0x88] sm:$0xf]
        %v734 = vld [vmem:[%s4 + $0x8c] sm:$0xf]
        %v751 = vrot.slane %v679, 1
        %v752 = vrot.slane %v680, 1
        %v753 = vsel %vm375, %v751, %v752
        %v754 = vrot.slane %v681, 1
        %v755 = vrot.slane %v682, 1
        %v756 = vsel %vm375, %v754, %v755
        %v757 = vrot.slane %v683, 1
        %v758 = vrot.slane %v684, 1
        %v759 = vsel %vm375, %v757, %v758
        %v760 = vrot.slane %v685, 1
        %v761 = vrot.slane %v686, 1
        %v762 = vsel %vm375, %v760, %v761
        %v763 = vrot.slane %v687, 1
        %v764 = vrot.slane %v688, 1
        %v765 = vsel %vm375, %v763, %v764
        %v766 = vrot.slane %v689, 1
        %v767 = vrot.slane %v690, 1
        %v768 = vsel %vm375, %v766, %v767
        %v769 = vrot.slane %v691, 1
        %v770 = vrot.slane %v692, 1
        %v771 = vsel %vm375, %v769, %v770
        %v772 = vrot.slane %v693, 1
        %v773 = vrot.slane %v694, 1
        %v774 = vsel %vm375, %v772, %v773
        %v775 = vrot.slane %v679, 2
        %v776 = vrot.slane %v680, 2
        %v777 = vsel %vm400, %v775, %v776
        %v778 = vrot.slane %v681, 2
        %v779 = vrot.slane %v682, 2
        %v780 = vsel %vm400, %v778, %v779
        %v781 = vrot.slane %v683, 2
        %v782 = vrot.slane %v684, 2
        %v783 = vsel %vm400, %v781, %v782
        %v784 = vrot.slane %v685, 2
        %v785 = vrot.slane %v686, 2
        %v786 = vsel %vm400, %v784, %v785
        %v787 = vrot.slane %v687, 2
        %v788 = vrot.slane %v688, 2
        %v789 = vsel %vm400, %v787, %v788
        %v790 = vrot.slane %v689, 2
        %v791 = vrot.slane %v690, 2
        %v792 = vsel %vm400, %v790, %v791
        %v793 = vrot.slane %v691, 2
        %v794 = vrot.slane %v692, 2
        %v795 = vsel %vm400, %v793, %v794
        %v796 = vrot.slane %v693, 2
        %v797 = vrot.slane %v694, 2
        %v798 = vsel %vm400, %v796, %v797
        %v801 = vrot.slane %v695, 1
        %v802 = vrot.slane %v696, 1
        %v803 = vsel %vm375, %v801, %v802
        %v812 = vrot.slane %v695, 2
        %v813 = vrot.slane %v696, 2
        %v814 = vsel %vm400, %v812, %v813
        %v817 = vrot.slane %v697, 1
        %v818 = vrot.slane %v698, 1
        %v819 = vsel %vm375, %v817, %v818
        %v820 = vrot.slane %v697, 2
        %v821 = vrot.slane %v698, 2
        %v822 = vsel %vm400, %v820, %v821
        %831 = vrot.lane.b32.xlu0 %v753, 32
        %v832 = vpop.permute.xlu0 %831
        %833 = vrot.lane.b32.xlu0 %v756, 32
        %v834 = vpop.permute.xlu0 %833
        %835 = vrot.lane.b32.xlu0 %v759, 32
        %v836 = vpop.permute.xlu0 %835
        %837 = vrot.lane.b32.xlu0 %v762, 32
        %v838 = vpop.permute.xlu0 %837
        %839 = vrot.lane.b32.xlu0 %v765, 32
        %v840 = vpop.permute.xlu0 %839
        %841 = vrot.lane.b32.xlu0 %v768, 32
        %v842 = vpop.permute.xlu0 %841
        %843 = vrot.lane.b32.xlu0 %v771, 32
        %v844 = vpop.permute.xlu0 %843
        %845 = vrot.lane.b32.xlu0 %v774, 32
        %v846 = vpop.permute.xlu0 %845
        %855 = vrot.lane.b32.xlu0 %v777, 64
        %v856 = vpop.permute.xlu0 %855
        %857 = vrot.lane.b32.xlu0 %v780, 64
        %v858 = vpop.permute.xlu0 %857
        %859 = vrot.lane.b32.xlu0 %v783, 64
        %v860 = vpop.permute.xlu0 %859
        %861 = vrot.lane.b32.xlu0 %v786, 64
        %v862 = vpop.permute.xlu0 %861
        %863 = vrot.lane.b32.xlu0 %v789, 64
        %v864 = vpop.permute.xlu0 %863
        %865 = vrot.lane.b32.xlu0 %v792, 64
        %v866 = vpop.permute.xlu0 %865
        %867 = vrot.lane.b32.xlu0 %v795, 64
        %v868 = vpop.permute.xlu0 %867
        %869 = vrot.lane.b32.xlu0 %v798, 64
        %v870 = vpop.permute.xlu0 %869
        %879 = vrot.lane.b32.xlu0 %v681, 96
        %v880 = vpop.permute.xlu0 %879
        %881 = vrot.lane.b32.xlu0 %v683, 96
        %v882 = vpop.permute.xlu0 %881
        %883 = vrot.lane.b32.xlu0 %v685, 96
        %v884 = vpop.permute.xlu0 %883
        %885 = vrot.lane.b32.xlu0 %v687, 96
        %v886 = vpop.permute.xlu0 %885
        %887 = vrot.lane.b32.xlu0 %v689, 96
        %v888 = vpop.permute.xlu0 %887
        %889 = vrot.lane.b32.xlu0 %v691, 96
        %v890 = vpop.permute.xlu0 %889
        %891 = vrot.lane.b32.xlu0 %v693, 96
        %v892 = vpop.permute.xlu0 %891
        %893 = vrot.lane.b32.xlu0 %v695, 96
        %v894 = vpop.permute.xlu0 %893
        %903 = vrot.lane.b32.xlu0 %v780, 32
        %v904 = vpop.permute.xlu0 %903
        %905 = vrot.lane.b32.xlu0 %v783, 32
        %v906 = vpop.permute.xlu0 %905
        %907 = vrot.lane.b32.xlu0 %v786, 32
        %v908 = vpop.permute.xlu0 %907
        %909 = vrot.lane.b32.xlu0 %v789, 32
        %v910 = vpop.permute.xlu0 %909
        %911 = vrot.lane.b32.xlu0 %v792, 32
        %v912 = vpop.permute.xlu0 %911
        %913 = vrot.lane.b32.xlu0 %v795, 32
        %v914 = vpop.permute.xlu0 %913
        %915 = vrot.lane.b32.xlu0 %v798, 32
        %v916 = vpop.permute.xlu0 %915
        %917 = vrot.lane.b32.xlu0 %v814, 32
        %v918 = vpop.permute.xlu0 %917
        %927 = vrot.lane.b32.xlu0 %v683, 64
        %v928 = vpop.permute.xlu0 %927
        %929 = vrot.lane.b32.xlu0 %v685, 64
        %v930 = vpop.permute.xlu0 %929
        %931 = vrot.lane.b32.xlu0 %v687, 64
        %v932 = vpop.permute.xlu0 %931
        %933 = vrot.lane.b32.xlu0 %v689, 64
        %v934 = vpop.permute.xlu0 %933
        %935 = vrot.lane.b32.xlu0 %v691, 64
        %v936 = vpop.permute.xlu0 %935
        %937 = vrot.lane.b32.xlu0 %v693, 64
        %v938 = vpop.permute.xlu0 %937
        %939 = vrot.lane.b32.xlu0 %v695, 64
        %v940 = vpop.permute.xlu0 %939
        %941 = vrot.lane.b32.xlu0 %v697, 64
        %v942 = vpop.permute.xlu0 %941
        %951 = vrot.lane.b32.xlu0 %v759, 96
        %v952 = vpop.permute.xlu0 %951
        %953 = vrot.lane.b32.xlu0 %v762, 96
        %v954 = vpop.permute.xlu0 %953
        %955 = vrot.lane.b32.xlu0 %v765, 96
        %v956 = vpop.permute.xlu0 %955
        %957 = vrot.lane.b32.xlu0 %v768, 96
        %v958 = vpop.permute.xlu0 %957
        %959 = vrot.lane.b32.xlu0 %v771, 96
        %v960 = vpop.permute.xlu0 %959
        %961 = vrot.lane.b32.xlu0 %v774, 96
        %v962 = vpop.permute.xlu0 %961
        %963 = vrot.lane.b32.xlu0 %v803, 96
        %v964 = vpop.permute.xlu0 %963
        %965 = vrot.lane.b32.xlu0 %v819, 96
        %v966 = vpop.permute.xlu0 %965
        %v975 = vsel %vm264, %v679, %v832
        %v976 = vsel %vm264, %v681, %v834
        %v977 = vsel %vm264, %v683, %v836
        %v978 = vsel %vm264, %v685, %v838
        %v979 = vsel %vm264, %v687, %v840
        %v980 = vsel %vm264, %v689, %v842
        %v981 = vsel %vm264, %v691, %v844
        %v982 = vsel %vm264, %v693, %v846
        %v983 = vsel %vm609, %v975, %v856
        %v984 = vsel %vm609, %v976, %v858
        %v985 = vsel %vm609, %v977, %v860
        %v986 = vsel %vm609, %v978, %v862
        %v987 = vsel %vm609, %v979, %v864
        %v988 = vsel %vm609, %v980, %v866
        %v989 = vsel %vm609, %v981, %v868
        %v990 = vsel %vm609, %v982, %v870
        %v991 = vsel %vm618, %v983, %v880
        %v992 = vsel %vm618, %v984, %v882
        %v993 = vsel %vm618, %v985, %v884
        %v994 = vsel %vm618, %v986, %v886
        %v995 = vsel %vm618, %v987, %v888
        %v996 = vsel %vm618, %v988, %v890
        %v997 = vsel %vm618, %v989, %v892
        %v998 = vsel %vm618, %v990, %v894
        %v999 = vsel %vm264, %v756, %v904
        %v1000 = vsel %vm264, %v759, %v906
        %v1001 = vsel %vm264, %v762, %v908
        %v1002 = vsel %vm264, %v765, %v910
        %v1003 = vsel %vm264, %v768, %v912
        %v1004 = vsel %vm264, %v771, %v914
        %v1005 = vsel %vm264, %v774, %v916
        %v1006 = vsel %vm264, %v803, %v918
        %v1007 = vsel %vm609, %v999, %v928
        %v1008 = vsel %vm609, %v1000, %v930
        %v1009 = vsel %vm609, %v1001, %v932
        %v1010 = vsel %vm609, %v1002, %v934
        %v1011 = vsel %vm609, %v1003, %v936
        %v1012 = vsel %vm609, %v1004, %v938
        %v1013 = vsel %vm609, %v1005, %v940
        %v1014 = vsel %vm609, %v1006, %v942
        %v1015 = vsel %vm618, %v1007, %v952
        %v1016 = vsel %vm618, %v1008, %v954
        %v1017 = vsel %vm618, %v1009, %v956
        %v1018 = vsel %vm618, %v1010, %v958
        %v1019 = vsel %vm618, %v1011, %v960
        %v1020 = vsel %vm618, %v1012, %v962
        %v1021 = vsel %vm618, %v1013, %v964
        %v1022 = vsel %vm618, %v1014, %v966
        %v1023 = vpack.c.bf16 %v992, %v991
        %v1024 = vpack.c.bf16 %v1016, %v1015
        %v1025 = vpack.c.bf16 %v786, %v783
        %v1026 = vpack.c.bf16 %v994, %v993
        %v1027 = vpack.c.bf16 %v1018, %v1017
        %v1028 = vpack.c.bf16 %v792, %v789
        %v1029 = vpack.c.bf16 %v996, %v995
        %v1030 = vpack.c.bf16 %v1020, %v1019
        %v1031 = vpack.c.bf16 %v798, %v795
        %v1032 = vpack.c.bf16 %v998, %v997
        %v1033 = vpack.c.bf16 %v1022, %v1021
        %v1034 = vpack.c.bf16 %v822, %v814
        %v1071 = vunpack.c.l.b16 %v699
        %v1072 = vunpack.c.l.b16 %v700
        %v1073 = vunpack.c.l.b16 %v701
        %v1074 = vunpack.c.l.b16 %v702
        %v1075 = vunpack.c.l.b16 %v703
        %v1076 = vunpack.c.l.b16 %v704
        %v1077 = vunpack.c.l.b16 %v705
        %v1078 = vunpack.c.l.b16 %v706
        %v1079 = vunpack.c.l.b16 %v707
        %v1080 = vunpack.c.l.b16 %v708
        %v1081 = vunpack.c.l.b16 %v709
        %v1082 = vunpack.c.l.b16 %v710
        %v1083 = vunpack.c.l.b16 %v711
        %v1084 = vunpack.c.l.b16 %v712
        %v1085 = vunpack.c.l.b16 %v713
        %v1086 = vunpack.c.l.b16 %v714
        %v1087 = vunpack.c.l.b16 %v715
        %v1088 = vunpack.c.l.b16 %v716
        %v1089 = vunpack.c.l.b16 %v717
        %v1090 = vunpack.c.l.b16 %v718
        %v1091 = vunpack.c.l.b16 %v719
        %v1092 = vunpack.c.l.b16 %v720
        %v1093 = vunpack.c.l.b16 %v721
        %v1094 = vunpack.c.l.b16 %v722
        %v1095 = vunpack.c.l.b16 %v723
        %v1096 = vunpack.c.l.b16 %v724
        %v1097 = vunpack.c.l.b16 %v725
        %v1098 = vunpack.c.l.b16 %v726
        %v1099 = vunpack.c.l.b16 %v727
        %v1100 = vunpack.c.l.b16 %v728
        %v1101 = vunpack.c.l.b16 %v729
        %v1102 = vunpack.c.l.b16 %v730
        %v1103 = vunpack.c.l.b16 %v731
        %v1104 = vunpack.c.l.b16 %v732
        %v1105 = vunpack.c.l.b16 %v733
        %v1106 = vunpack.c.l.b16 %v734
        %v1107 = vpack.c.b16 %v1072, %v1071
        %v1108 = vpack.c.b16 %v1074, %v1073
        %v1109 = vpack.c.b16 %v1076, %v1075
        %v1110 = vpack.c.b16 %v1078, %v1077
        %v1111 = vpack.c.b16 %v1080, %v1079
        %v1112 = vpack.c.b16 %v1082, %v1081
        %v1113 = vpack.c.b16 %v1084, %v1083
        %v1114 = vpack.c.b16 %v1086, %v1085
        %v1115 = vpack.c.b16 %v1088, %v1087
        %v1116 = vpack.c.b16 %v1090, %v1089
        %v1117 = vpack.c.b16 %v1092, %v1091
        %v1118 = vpack.c.b16 %v1094, %v1093
        %v1119 = vpack.c.b16 %v1096, %v1095
        %v1120 = vpack.c.b16 %v1098, %v1097
        %v1121 = vpack.c.b16 %v1100, %v1099
        %v1122 = vpack.c.b16 %v1102, %v1101
        %v1123 = vpack.c.b16 %v1104, %v1103
        %v1124 = vpack.c.b16 %v1106, %v1105
        %v1144 = vsel %vm264, %v1025, 0
        %v1147 = vsel %vm264, %v1028, 0
        %v1150 = vsel %vm264, %v1031, 0
        %v1153 = vsel %vm264, %v1034, 0
        %1155 = vmatpush.bf16.msra.mxu0 %v1114
        %1156 = vmatpush.bf16.msra.mxu0 %v1113
        %1157 = vmatpush.bf16.msra.mxu0 %v1112
        %1158 = vmatpush.bf16.msra.mxu0 %v1111
        %1159 = vmatpush.bf16.msra.mxu0 %v1110
        %1160 = vmatpush.bf16.msra.mxu0 %v1109
        %1161 = vmatpush.bf16.msra.mxu0 %v1108
        %1162 = vmatpush.bf16.msra.mxu0 %v1107
        %1163 = vmatmul.bf16.gmra.mxu0 %v1023
        %v1164 = vpop.f32.mrf.mxu0
        %v1165 = vadd.f32 0.0, %v1164
        %v1166 = vpop.f32.mrf.mxu0
        %v1167 = vadd.f32 0.0, %v1166
        %1168 = vmatmul.bf16.gmra.mxu0 %v1026
        %v1169 = vpop.f32.mrf.mxu0
        %v1170 = vadd.f32 0.0, %v1169
        %v1171 = vpop.f32.mrf.mxu0
        %v1172 = vadd.f32 0.0, %v1171
        %1173 = vmatmul.bf16.gmra.mxu0 %v1029
        %v1174 = vpop.f32.mrf.mxu0
        %v1175 = vadd.f32 0.0, %v1174
        %v1176 = vpop.f32.mrf.mxu0
        %v1177 = vadd.f32 0.0, %v1176
        %1178 = vmatmul.bf16.gmra.mxu0 %v1032
        %v1179 = vpop.f32.mrf.mxu0
        %v1180 = vadd.f32 0.0, %v1179
        %v1181 = vpop.f32.mrf.mxu0
        %v1182 = vadd.f32 0.0, %v1181
        %1183 = vdwg.mxu0
        %1184 = vmatpush.bf16.msra.mxu0 %v1122
        %1185 = vmatpush.bf16.msra.mxu0 %v1121
        %1186 = vmatpush.bf16.msra.mxu0 %v1120
        %1187 = vmatpush.bf16.msra.mxu0 %v1119
        %1188 = vmatpush.bf16.msra.mxu0 %v1118
        %1189 = vmatpush.bf16.msra.mxu0 %v1117
        %1190 = vmatpush.bf16.msra.mxu0 %v1116
        %1191 = vmatpush.bf16.msra.mxu0 %v1115
        %1192 = vmatmul.bf16.gmra.mxu0 %v1024
        %v1193 = vpop.f32.mrf.mxu0
        %v1194 = vadd.f32 %v1165, %v1193
        %v1195 = vpop.f32.mrf.mxu0
        %v1196 = vadd.f32 %v1167, %v1195
        %1197 = vmatmul.bf16.gmra.mxu0 %v1027
        %v1198 = vpop.f32.mrf.mxu0
        %v1199 = vadd.f32 %v1170, %v1198
        %v1200 = vpop.f32.mrf.mxu0
        %v1201 = vadd.f32 %v1172, %v1200
        %1202 = vmatmul.bf16.gmra.mxu0 %v1030
        %v1203 = vpop.f32.mrf.mxu0
        %v1204 = vadd.f32 %v1175, %v1203
        %v1205 = vpop.f32.mrf.mxu0
        %v1206 = vadd.f32 %v1177, %v1205
        %1207 = vmatmul.bf16.gmra.mxu0 %v1033
        %v1208 = vpop.f32.mrf.mxu0
        %v1209 = vadd.f32 %v1180, %v1208
        %v1210 = vpop.f32.mrf.mxu0
        %v1211 = vadd.f32 %v1182, %v1210
        %1212 = vdwg.mxu0
        %1213 = vmatpush.bf16.msra.mxu0 0
        %1214 = vmatpush.bf16.msra.mxu0 0
        %1215 = vmatpush.bf16.msra.mxu0 0
        %1216 = vmatpush.bf16.msra.mxu0 0
        %1217 = vmatpush.bf16.msra.mxu0 0
        %1218 = vmatpush.bf16.msra.mxu0 0
        %1219 = vmatpush.bf16.msra.mxu0 %v1124
        %1220 = vmatpush.bf16.msra.mxu0 %v1123
        %1221 = vmatmul.bf16.gmra.mxu0 %v1144
        %v1222 = vpop.f32.mrf.mxu0
        %v1223 = vadd.f32 %v1194, %v1222
        %v1224 = vpop.f32.mrf.mxu0
        %v1225 = vadd.f32 %v1196, %v1224
        %1226 = vmatmul.bf16.gmra.mxu0 %v1147
        %v1227 = vpop.f32.mrf.mxu0
        %v1228 = vadd.f32 %v1199, %v1227
        %v1229 = vpop.f32.mrf.mxu0
        %v1230 = vadd.f32 %v1201, %v1229
        %1231 = vmatmul.bf16.gmra.mxu0 %v1150
        %v1232 = vpop.f32.mrf.mxu0
        %v1233 = vadd.f32 %v1204, %v1232
        %v1234 = vpop.f32.mrf.mxu0
        %v1235 = vadd.f32 %v1206, %v1234
        %1236 = vmatmul.bf16.gmra.mxu0 %v1153
        %v1237 = vpop.f32.mrf.mxu0
        %v1238 = vadd.f32 %v1209, %v1237
        %v1239 = vpop.f32.mrf.mxu0
        %v1240 = vadd.f32 %v1211, %v1239
        %1241 = vdwg.mxu0
        %v1278 = vunpack.c.l.b16 %v323
        %v1279 = vunpack.c.l.b16 %v324
        %v1280 = vunpack.c.l.b16 %v325
        %v1281 = vunpack.c.l.b16 %v326
        %v1282 = vunpack.c.l.b16 %v327
        %v1283 = vunpack.c.l.b16 %v328
        %v1284 = vunpack.c.l.b16 %v329
        %v1285 = vunpack.c.l.b16 %v330
        %v1286 = vunpack.c.l.b16 %v331
        %v1287 = vunpack.c.l.b16 %v332
        %v1288 = vunpack.c.l.b16 %v333
        %v1289 = vunpack.c.l.b16 %v334
        %v1290 = vunpack.c.l.b16 %v335
        %v1291 = vunpack.c.l.b16 %v336
        %v1292 = vunpack.c.l.b16 %v337
        %v1293 = vunpack.c.l.b16 %v338
        %v1294 = vunpack.c.l.b16 %v339
        %v1295 = vunpack.c.l.b16 %v340
        %v1296 = vunpack.c.l.b16 %v341
        %v1297 = vunpack.c.l.b16 %v342
        %v1298 = vunpack.c.l.b16 %v343
        %v1299 = vunpack.c.l.b16 %v344
        %v1300 = vunpack.c.l.b16 %v345
        %v1301 = vunpack.c.l.b16 %v346
        %v1302 = vunpack.c.l.b16 %v347
        %v1303 = vunpack.c.l.b16 %v348
        %v1304 = vunpack.c.l.b16 %v349
        %v1305 = vunpack.c.l.b16 %v350
        %v1306 = vunpack.c.l.b16 %v351
        %v1307 = vunpack.c.l.b16 %v352
        %v1308 = vunpack.c.l.b16 %v353
        %v1309 = vunpack.c.l.b16 %v354
        %v1310 = vunpack.c.l.b16 %v355
        %v1311 = vunpack.c.l.b16 %v356
        %v1312 = vunpack.c.l.b16 %v357
        %v1313 = vunpack.c.l.b16 %v358
        %v1314 = vpack.c.b16 %v1279, %v1278
        %v1315 = vpack.c.b16 %v1281, %v1280
        %v1316 = vpack.c.b16 %v1283, %v1282
        %v1317 = vpack.c.b16 %v1285, %v1284
        %v1318 = vpack.c.b16 %v1287, %v1286
        %v1319 = vpack.c.b16 %v1289, %v1288
        %v1320 = vpack.c.b16 %v1291, %v1290
        %v1321 = vpack.c.b16 %v1293, %v1292
        %v1322 = vpack.c.b16 %v1295, %v1294
        %v1323 = vpack.c.b16 %v1297, %v1296
        %v1324 = vpack.c.b16 %v1299, %v1298
        %v1325 = vpack.c.b16 %v1301, %v1300
        %v1326 = vpack.c.b16 %v1303, %v1302
        %v1327 = vpack.c.b16 %v1305, %v1304
        %v1328 = vpack.c.b16 %v1307, %v1306
        %v1329 = vpack.c.b16 %v1309, %v1308
        %v1330 = vpack.c.b16 %v1311, %v1310
        %v1331 = vpack.c.b16 %v1313, %v1312
        %v1351 = vsel %vm264, %v653, 0
        %v1354 = vsel %vm264, %v656, 0
        %v1357 = vsel %vm264, %v659, 0
        %v1360 = vsel %vm264, %v662, 0
        %1362 = vmatpush.bf16.msra.mxu0 %v1321
        %1363 = vmatpush.bf16.msra.mxu0 %v1320
        %1364 = vmatpush.bf16.msra.mxu0 %v1319
        %1365 = vmatpush.bf16.msra.mxu0 %v1318
        %1366 = vmatpush.bf16.msra.mxu0 %v1317
        %1367 = vmatpush.bf16.msra.mxu0 %v1316
        %1368 = vmatpush.bf16.msra.mxu0 %v1315
        %1369 = vmatpush.bf16.msra.mxu0 %v1314
        %1370 = vmatmul.bf16.gmra.mxu0 %v651
        %v1371 = vpop.f32.mrf.mxu0
        %v1372 = vadd.f32 %v1223, %v1371
        %v1373 = vpop.f32.mrf.mxu0
        %v1374 = vadd.f32 %v1225, %v1373
        %1375 = vmatmul.bf16.gmra.mxu0 %v654
        %v1376 = vpop.f32.mrf.mxu0
        %v1377 = vadd.f32 %v1228, %v1376
        %v1378 = vpop.f32.mrf.mxu0
        %v1379 = vadd.f32 %v1230, %v1378
        %1380 = vmatmul.bf16.gmra.mxu0 %v657
        %v1381 = vpop.f32.mrf.mxu0
        %v1382 = vadd.f32 %v1233, %v1381
        %v1383 = vpop.f32.mrf.mxu0
        %v1384 = vadd.f32 %v1235, %v1383
        %1385 = vmatmul.bf16.gmra.mxu0 %v660
        %v1386 = vpop.f32.mrf.mxu0
        %v1387 = vadd.f32 %v1238, %v1386
        %v1388 = vpop.f32.mrf.mxu0
        %v1389 = vadd.f32 %v1240, %v1388
        %1390 = vdwg.mxu0
        %1391 = vmatpush.bf16.msra.mxu0 %v1329
        %1392 = vmatpush.bf16.msra.mxu0 %v1328
        %1393 = vmatpush.bf16.msra.mxu0 %v1327
        %1394 = vmatpush.bf16.msra.mxu0 %v1326
        %1395 = vmatpush.bf16.msra.mxu0 %v1325
        %1396 = vmatpush.bf16.msra.mxu0 %v1324
        %1397 = vmatpush.bf16.msra.mxu0 %v1323
        %1398 = vmatpush.bf16.msra.mxu0 %v1322
        %1399 = vmatmul.bf16.gmra.mxu0 %v652
        %v1400 = vpop.f32.mrf.mxu0
        %v1401 = vadd.f32 %v1372, %v1400
        %v1402 = vpop.f32.mrf.mxu0
        %v1403 = vadd.f32 %v1374, %v1402
        %1404 = vmatmul.bf16.gmra.mxu0 %v655
        %v1405 = vpop.f32.mrf.mxu0
        %v1406 = vadd.f32 %v1377, %v1405
        %v1407 = vpop.f32.mrf.mxu0
        %v1408 = vadd.f32 %v1379, %v1407
        %1409 = vmatmul.bf16.gmra.mxu0 %v658
        %v1410 = vpop.f32.mrf.mxu0
        %v1411 = vadd.f32 %v1382, %v1410
        %v1412 = vpop.f32.mrf.mxu0
        %v1413 = vadd.f32 %v1384, %v1412
        %1414 = vmatmul.bf16.gmra.mxu0 %v661
        %v1415 = vpop.f32.mrf.mxu0
        %v1416 = vadd.f32 %v1387, %v1415
        %v1417 = vpop.f32.mrf.mxu0
        %v1418 = vadd.f32 %v1389, %v1417
        %1419 = vdwg.mxu0
        %1420 = vmatpush.bf16.msra.mxu0 0
        %1421 = vmatpush.bf16.msra.mxu0 0
        %1422 = vmatpush.bf16.msra.mxu0 0
        %1423 = vmatpush.bf16.msra.mxu0 0
        %1424 = vmatpush.bf16.msra.mxu0 0
        %1425 = vmatpush.bf16.msra.mxu0 0
        %1426 = vmatpush.bf16.msra.mxu0 %v1331
        %1427 = vmatpush.bf16.msra.mxu0 %v1330
        %1428 = vmatmul.bf16.gmra.mxu0 %v1351
        %v1429 = vpop.f32.mrf.mxu0
        %v1430 = vadd.f32 %v1401, %v1429
        %v1431 = vpop.f32.mrf.mxu0
        %v1432 = vadd.f32 %v1403, %v1431
        %1433 = vmatmul.bf16.gmra.mxu0 %v1354
        %v1434 = vpop.f32.mrf.mxu0
        %v1435 = vadd.f32 %v1406, %v1434
        %v1436 = vpop.f32.mrf.mxu0
        %v1437 = vadd.f32 %v1408, %v1436
        %1438 = vmatmul.bf16.gmra.mxu0 %v1357
        %v1439 = vpop.f32.mrf.mxu0
        %v1440 = vadd.f32 %v1411, %v1439
        %v1441 = vpop.f32.mrf.mxu0
        %v1442 = vadd.f32 %v1413, %v1441
        %1443 = vmatmul.bf16.gmra.mxu0 %v1360
        %v1444 = vpop.f32.mrf.mxu0
        %v1445 = vadd.f32 %v1416, %v1444
        %v1446 = vpop.f32.mrf.mxu0
        %v1447 = vadd.f32 %v1418, %v1446
        %1448 = vdwg.mxu0
        %v1449 = vmax.f32 %v1430, 0.0
        %v1450 = vmax.f32 %v1432, 0.0
        %v1451 = vmax.f32 %v1435, 0.0
        %v1452 = vmax.f32 %v1437, 0.0
        %v1453 = vmax.f32 %v1440, 0.0
        %v1454 = vmax.f32 %v1442, 0.0
        %v1455 = vmax.f32 %v1445, 0.0
        %v1456 = vmax.f32 %v1447, 0.0
        %v1457 = vld [vmem:[%s262] sm:$0xff]
        %v1458 = vld [vmem:[%s262 + $0x8] sm:$0xff]
        %v1459 = vld [vmem:[%s262 + $0x10] sm:$0xff]
        %v1460 = vld [vmem:[%s262 + $0x18] sm:$0xff]
        %v1461 = vld [vmem:[%s262 + $0x20] sm:$0xff]
        %v1462 = vld [vmem:[%s262 + $0x28] sm:$0xff]
        %v1463 = vld [vmem:[%s262 + $0x30] sm:$0xff]
        %v1464 = vld [vmem:[%s262 + $0x38] sm:$0xff]
        %v1465 = vadd.f32 %v1449, %v1457
        %v1466 = vadd.f32 %v1450, %v1458
        %v1467 = vadd.f32 %v1451, %v1459
        %v1468 = vadd.f32 %v1452, %v1460
        %v1469 = vadd.f32 %v1453, %v1461
        %v1470 = vadd.f32 %v1454, %v1462
        %v1471 = vadd.f32 %v1455, %v1463
        %v1472 = vadd.f32 %v1456, %v1464
        %1473 = vst.msk [vmem:[%s247] sm:$0xff] %vm264, %v1465
        %1474 = vst.msk [vmem:[%s247 + $0x8] sm:$0xff] %vm264, %v1466
        %1475 = vst.msk [vmem:[%s247 + $0x10] sm:$0xff] %vm264, %v1467
        %1476 = vst.msk [vmem:[%s247 + $0x18] sm:$0xff] %vm264, %v1468
        %1477 = vst.msk [vmem:[%s247 + $0x20] sm:$0xff] %vm264, %v1469
        %1478 = vst.msk [vmem:[%s247 + $0x28] sm:$0xff] %vm264, %v1470
        %1479 = vst.msk [vmem:[%s247 + $0x30] sm:$0xff] %vm264, %v1471
        %1480 = vst.msk [vmem:[%s247 + $0x38] sm:$0xff] %vm264, %v1472
        %s1481 = sand.u32 %s147, 1
        %s1482 = scalar_lea.sflag [#allocation4], %s1481
        %s1483 = sand.u32 %s147, 1
        %s1484 = smul.addr %s1483, 64
        %s1485 = scalar_lea.vmem [#allocation3], %s1484
        // Predicated region
        $region41: #{dab_forward.9} parent=39 // pred_check
          %p1486 = pneg %p157
        $region42: #{dab_forward.9} parent=39 // pred_check_branch
          %1488 = sbr.rel (%p1486) target = $region44
        $region43: #{dab_forward.9} parent=39 // pred_region
          %1490 = vsyncadd %s1482, 0
          %s1491 = smul.addr %s19, 8
          %s1492 = smul.addr %s1491, 8
          %s1493 = scalar_lea.hbm %s5, %s1492
          %s1494 = sshll.u32 %s1485, 4
          %s1495 = int_to_ptr.vmem [resolvable:$true] %s1494
          %s1496 = sshll.u32 %s1493, 4
          %s1497 = int_to_ptr.hbm [resolvable:$true] %s1496
          %1502 = dma.vmem_to_hbm [thread:$0]  %s1495, 1024, %s1497, %s1482, 128, 128, 8
        $region44: #{dab_forward.9} parent=39 // pred_fallthru
          _
      $region40: #{dab_forward.9} parent=5 // pred_fallthru
        _
      %p1503 = scmp.le.s32.totalorder 2, %s14
      // Predicated region
      $region45: #{dab_forward.9} parent=5 // pred_check
        %p1504 = pneg %p1503
      $region46: #{dab_forward.9} parent=5 // pred_check_branch
        %1506 = sbr.rel (%p1504) target = $region48
      $region47: #{dab_forward.9} parent=5 // pred_region
        %s1507 = ssub.s32 %s14, 2
        // Predicated region
        $region49: #{dab_forward.9} parent=47 // pred_check
          %p1508 = pneg %p163
        $region50: #{dab_forward.9} parent=47 // pred_check_branch
          %1510 = sbr.rel (%p1508) target = $region52
        $region51: #{dab_forward.9} parent=47 // pred_region
          %s1511 = sand.u32 %s148, 1
          %s1512 = scalar_lea.sflag [#allocation4], %s1511
          %s1513 = sand.u32 %s148, 1
          %s1514 = smul.addr %s1513, 64
          %s1515 = scalar_lea.vmem [#allocation3], %s1514
          %1517 = dma.done %s1512, 1024
        $region52: #{dab_forward.9} parent=47 // pred_fallthru
          _
      $region48: #{dab_forward.9} parent=5 // pred_fallthru
        _
    $region6: #{dab_forward.9} parent=1 // loop_footer
      %s18 = sadd.s32 1, %s14
    $region7: #{dab_forward.9} parent=1 // loop_footer_branch
      %13 = sbr.rel target = $region3
    $region8: #{dab_forward.9} parent=1 // loop_exit
      _
    %1518 = vsyncpa [#allocation4], 1
    %s1519 = scalar_lea.sflag [#allocation4], 1
    %1520 = vsyncpa %s1519, 1

</llo_original>
